<compile_context>
chip_gen: v6e
topology: v6e:2x2x1
jax: 0.10.0
libtpu: 0.0.40
codegen_flags: <defaults>
</compile_context>

<pallas_src>
import functools
import math

import jax
import jax.numpy as jnp
from jax.experimental import pallas as pl
from jax.experimental.pallas import tpu as pltpu


# -----------------------------------------------------------------------------
# Fused decoder kernel: GRU stack + heads, single invocation, fully VMEM-resident
# -----------------------------------------------------------------------------
def _decoder1_kernel(*refs, n_layers, seq_len, batch):
    # ref layout: [x_flat, h0, (10 refs per GRU layer)*n_layers, w_heads_t, b_heads]
    #             then outputs: [heads_out, h_n_out]
    n_in = 2 + 10 * n_layers + 2
    in_refs = refs[:n_in]
    heads_ref, hn_ref = refs[n_in], refs[n_in + 1]

    x_ref, h0_ref = in_refs[0], in_refs[1]
    pos = 2

    seq = x_ref[...]                                         # (S*B, D_in) f32

    for l in range(n_layers):
        (w_ir_t, w_iz_t, w_in_t,
         w_hr_t, w_hz_t, w_hn_t,
         b_r, b_z, b_in, b_hn) = in_refs[pos:pos + 10]
        pos += 10

        # ---- hoisted input projection: no dependence on h, one matmul per gate
        gi_r = jnp.dot(seq, w_ir_t[...], preferred_element_type=jnp.float32) + b_r[...]
        gi_z = jnp.dot(seq, w_iz_t[...], preferred_element_type=jnp.float32) + b_z[...]
        gi_n = jnp.dot(seq, w_in_t[...], preferred_element_type=jnp.float32) + b_in[...]

        whr = w_hr_t[...]
        whz = w_hz_t[...]
        whn = w_hn_t[...]
        bhn = b_hn[...]

        h = h0_ref[l]                                        # (B, H)

        outs = []
        # S is tiny & static -> fully unrolled recurrence (max LLO visibility).
        for t in range(seq_len):
            lo = t * batch
            hr = jnp.dot(h, whr, preferred_element_type=jnp.float32)
            hz = jnp.dot(h, whz, preferred_element_type=jnp.float32)
            hn = jnp.dot(h, whn, preferred_element_type=jnp.float32) + bhn
            r = jax.nn.sigmoid(gi_r[lo:lo + batch] + hr)
            z = jax.nn.sigmoid(gi_z[lo:lo + batch] + hz)
            n = jnp.tanh(gi_n[lo:lo + batch] + r * hn)
            h = (1.0 - z) * n + z * h
            outs.append(h)

        hn_ref[l] = h                                        # final hidden of layer l
        seq = jnp.concatenate(outs, axis=0)                  # (S*B, H) slab -> next layer

    # ---- fused heads: one (S*B, H) x (H, C+P) matmul, one lane-dense store
    w_heads_t, b_heads = in_refs[pos], in_refs[pos + 1]
    heads_ref[...] = (jnp.dot(seq, w_heads_t[...],
                              preferred_element_type=jnp.float32)
                      + b_heads[...]).astype(heads_ref.dtype)


# -----------------------------------------------------------------------------
# Wrapper factory: closes over pre-prepared params, jits the whole forward
# -----------------------------------------------------------------------------
def make_decoder1_forward(params):
    n_class = params["n_class"]
    n_pose = params["n_pose"]
    n_layers = len(params["layers"])
    layer_keys = ("w_ir_t", "w_iz_t", "w_in_t",
                  "w_hr_t", "w_hz_t", "w_hn_t",
                  "b_r", "b_z", "b_in", "b_hn")

    def fwd(x, h_n, context=None):
        del context  # unused by the PyTorch forward
        S, B, D = x.shape
        H = h_n.shape[-1]

        args = [x.reshape(S * B, D), h_n]
        for lyr in params["layers"]:
            args += [lyr[k] for k in layer_keys]
        args += [params["w_heads_t"], params["b_heads"]]

        kernel = functools.partial(_decoder1_kernel,
                                   n_layers=n_layers, seq_len=S, batch=B)

        heads_flat, h_n_out = pl.pallas_call(
            kernel,
            out_shape=(
                jax.ShapeDtypeStruct((S * B, n_class + n_pose), jnp.float32),
                jax.ShapeDtypeStruct((n_layers, B, H), jnp.float32),
            ),
            in_specs=[pl.BlockSpec(memory_space=pltpu.MemorySpace.VMEM)
                      for _ in args],
            out_specs=(pl.BlockSpec(memory_space=pltpu.MemorySpace.VMEM),
                       pl.BlockSpec(memory_space=pltpu.MemorySpace.VMEM)),
        )(*args)

        class_out = heads_flat[:, :n_class].reshape(S, B, n_class)
        pose_out = heads_flat[:, n_class:].reshape(S, B, n_pose)
        return class_out, pose_out, h_n_out

    return jax.jit(fwd)


# -----------------------------------------------------------------------------
# Parameter init (PyTorch-style uniform) + one-time kernel-friendly preparation
# -----------------------------------------------------------------------------
def init_raw_params(key, gru_input_size, hid_dim, n_class, n_pose, n_layers):
    def uniform(k, shape, fan):
        bound = 1.0 / math.sqrt(fan)
        return jax.random.uniform(k, shape, jnp.float32, -bound, bound)

    keys = jax.random.split(key, 4 * n_layers + 4)
    gru_layers = []
    for l in range(n_layers):
        d_in = gru_input_size if l == 0 else hid_dim
        k0, k1, k2, k3 = keys[4 * l:4 * l + 4]
        gru_layers.append(dict(
            w_ih=uniform(k0, (3 * hid_dim, d_in), hid_dim),
            w_hh=uniform(k1, (3 * hid_dim, hid_dim), hid_dim),
            b_ih=uniform(k2, (3 * hid_dim,), hid_dim),
            b_hh=uniform(k3, (3 * hid_dim,), hid_dim),
        ))
    kh = keys[4 * n_layers:]
    return dict(
        gru_layers=gru_layers,
        w_h2c=uniform(kh[0], (n_class, hid_dim), hid_dim),
        b_h2c=uniform(kh[1], (n_class,), hid_dim),
        w_h2p=uniform(kh[2], (n_pose, hid_dim), hid_dim),
        b_h2p=uniform(kh[3], (n_pose,), hid_dim),
    )


def prepare_params(raw, n_class, n_pose):
    """Pre-split per gate, pre-transpose, pre-combine biases -- done ONCE."""
    layers = []
    for L in raw["gru_layers"]:
        w_ih, w_hh = L["w_ih"], L["w_hh"]          # (3H, D_in), (3H, H)
        b_ih, b_hh = L["b_ih"], L["b_hh"]          # (3H,)
        H = w_hh.shape[1]
        layers.append(dict(
            w_ir_t=jnp.asarray(w_ih[0:H].T),
            w_iz_t=jnp.asarray(w_ih[H:2 * H].T),
            w_in_t=jnp.asarray(w_ih[2 * H:3 * H].T),
            w_hr_t=jnp.asarray(w_hh[0:H].T),
            w_hz_t=jnp.asarray(w_hh[H:2 * H].T),
            w_hn_t=jnp.asarray(w_hh[2 * H:3 * H].T),
            b_r=(b_ih[0:H] + b_hh[0:H]).reshape(1, H),
            b_z=(b_ih[H:2 * H] + b_hh[H:2 * H]).reshape(1, H),
            b_in=b_ih[2 * H:3 * H].reshape(1, H),
            b_hn=b_hh[2 * H:3 * H].reshape(1, H),
        ))
    # fuse the two heads into a single matmul / single store
    w_heads_t = jnp.concatenate([raw["w_h2c"].T, raw["w_h2p"].T], axis=1)   # (H, C+P)
    b_heads = jnp.concatenate([raw["b_h2c"], raw["b_h2p"]]).reshape(1, -1)  # (1, C+P)
    return dict(layers=layers, w_heads_t=w_heads_t, b_heads=b_heads,
                n_class=n_class, n_pose=n_pose)


# -----------------------------------------------------------------------------
# Pure-JAX reference (PyTorch GRU semantics) for correctness checking
# -----------------------------------------------------------------------------
def reference_forward(raw, x, h0):
    h_seq = x
    finals = []
    for l, L in enumerate(raw["gru_layers"]):
        def step(h_prev, x_t, L=L):
            gi = x_t @ L["w_ih"].T + L["b_ih"]
            gh = h_prev @ L["w_hh"].T + L["b_hh"]
            i_r, i_z, i_n = jnp.split(gi, 3, axis=-1)
            h_r, h_z, h_n = jnp.split(gh, 3, axis=-1)
            r = jax.nn.sigmoid(i_r + h_r)
            z = jax.nn.sigmoid(i_z + h_z)
            n = jnp.tanh(i_n + r * h_n)
            h_new = (1.0 - z) * n + z * h_prev
            return h_new, h_new
        hf, h_seq = jax.lax.scan(step, h0[l], h_seq)
        finals.append(hf)
    h_n_out = jnp.stack(finals, axis=0)
    class_out = h_seq @ raw["w_h2c"].T + raw["b_h2c"]
    pose_out = h_seq @ raw["w_h2p"].T + raw["b_h2p"]
    return class_out, pose_out, h_n_out


if __name__ == "__main__":
    # Small shapes consistent with the module
    input_size, hid_dim, n_class, n_layers, n_pose = 16, 32, 8, 2, 12
    seq_len, batch = 8, 4
    gru_in = input_size + n_pose                     # nn.GRU(input_size + n_pose, ...)

    key = jax.random.PRNGKey(0)
    k_p, k_x, k_h, k_c = jax.random.split(key, 4)
    raw = init_raw_params(k_p, gru_in, hid_dim, n_class, n_pose, n_layers)
    params = prepare_params(raw, n_class, n_pose)
    decoder1_forward = make_decoder1_forward(params)

    x = jax.random.normal(k_x, (seq_len, batch, gru_in), jnp.float32)
    h0 = jax.random.normal(k_h, (n_layers, batch, hid_dim), jnp.float32)
    context = jax.random.normal(k_c, (batch, hid_dim), jnp.float32)  # unused (matches PyTorch)

    class_out, pose_out, h_n = decoder1_forward(x, h0, context)
    jax.block_until_ready((class_out, pose_out, h_n))

    # correctness vs pure-JAX reference
    ref_c, ref_p, ref_h = reference_forward(raw, x, h0)
    assert class_out.shape == (seq_len, batch, n_class)
    assert pose_out.shape == (seq_len, batch, n_pose)
    assert h_n.shape == (n_layers, batch, hid_dim)
    assert jnp.allclose(class_out, ref_c, rtol=1e-4, atol=1e-4), \
        float(jnp.max(jnp.abs(class_out - ref_c)))
    assert jnp.allclose(pose_out, ref_p, rtol=1e-4, atol=1e-4), \
        float(jnp.max(jnp.abs(pose_out - ref_p)))
    assert jnp.allclose(h_n, ref_h, rtol=1e-4, atol=1e-4), \
        float(jnp.max(jnp.abs(h_n - ref_h)))

    print("KERNEL_OK")
</pallas_src>

<mosaic_0001>
module attributes {stable_mosaic.version = 11 : i64} {
  func.func @_decoder1_kernel(%arg0: memref<32x28xf32, #tpu.memory_space<vmem>>, %arg1: memref<2x4x32xf32, #tpu.memory_space<vmem>>, %arg2: memref<28x32xf32, #tpu.memory_space<vmem>>, %arg3: memref<28x32xf32, #tpu.memory_space<vmem>>, %arg4: memref<28x32xf32, #tpu.memory_space<vmem>>, %arg5: memref<32x32xf32, #tpu.memory_space<vmem>>, %arg6: memref<32x32xf32, #tpu.memory_space<vmem>>, %arg7: memref<32x32xf32, #tpu.memory_space<vmem>>, %arg8: memref<1x32xf32, #tpu.memory_space<vmem>>, %arg9: memref<1x32xf32, #tpu.memory_space<vmem>>, %arg10: memref<1x32xf32, #tpu.memory_space<vmem>>, %arg11: memref<1x32xf32, #tpu.memory_space<vmem>>, %arg12: memref<32x32xf32, #tpu.memory_space<vmem>>, %arg13: memref<32x32xf32, #tpu.memory_space<vmem>>, %arg14: memref<32x32xf32, #tpu.memory_space<vmem>>, %arg15: memref<32x32xf32, #tpu.memory_space<vmem>>, %arg16: memref<32x32xf32, #tpu.memory_space<vmem>>, %arg17: memref<32x32xf32, #tpu.memory_space<vmem>>, %arg18: memref<1x32xf32, #tpu.memory_space<vmem>>, %arg19: memref<1x32xf32, #tpu.memory_space<vmem>>, %arg20: memref<1x32xf32, #tpu.memory_space<vmem>>, %arg21: memref<1x32xf32, #tpu.memory_space<vmem>>, %arg22: memref<32x20xf32, #tpu.memory_space<vmem>>, %arg23: memref<1x20xf32, #tpu.memory_space<vmem>>, %arg24: memref<32x20xf32, #tpu.memory_space<vmem>>, %arg25: memref<2x4x32xf32, #tpu.memory_space<vmem>>) attributes {dimension_semantics = [], scalar_prefetch = 0 : i64, scratch_operands = 0 : i64, tpu.core_type = #tpu.core_type<tc>} {
    %c0 = arith.constant 0 : index
    %c0_0 = arith.constant 0 : index
    %0 = vector.load %arg0[%c0, %c0_0] : memref<32x28xf32, #tpu.memory_space<vmem>>, vector<32x28xf32>
    %c0_1 = arith.constant 0 : index
    %c0_2 = arith.constant 0 : index
    %1 = vector.load %arg2[%c0_1, %c0_2] : memref<28x32xf32, #tpu.memory_space<vmem>>, vector<28x32xf32>
    %cst = arith.constant dense<0.000000e+00> : vector<32x32xf32>
    %2 = tpu.matmul %0, %1, %cst {dimension_numbers = #tpu.dot_dimension_numbers<[1], [0], [0], [1], [0, 0, 1, 1], [], []>} : vector<32x28xf32>, vector<28x32xf32>, vector<32x32xf32> -> vector<32x32xf32>
    %c0_3 = arith.constant 0 : index
    %c0_4 = arith.constant 0 : index
    %3 = vector.load %arg8[%c0_3, %c0_4] : memref<1x32xf32, #tpu.memory_space<vmem>>, vector<1x32xf32>
    %4 = vector.broadcast %3 : vector<1x32xf32> to vector<32x32xf32>
    %5 = arith.addf %2, %4 : vector<32x32xf32>
    %c0_5 = arith.constant 0 : index
    %c0_6 = arith.constant 0 : index
    %6 = vector.load %arg3[%c0_5, %c0_6] : memref<28x32xf32, #tpu.memory_space<vmem>>, vector<28x32xf32>
    %cst_7 = arith.constant dense<0.000000e+00> : vector<32x32xf32>
    %7 = tpu.matmul %0, %6, %cst_7 {dimension_numbers = #tpu.dot_dimension_numbers<[1], [0], [0], [1], [0, 0, 1, 1], [], []>} : vector<32x28xf32>, vector<28x32xf32>, vector<32x32xf32> -> vector<32x32xf32>
    %c0_8 = arith.constant 0 : index
    %c0_9 = arith.constant 0 : index
    %8 = vector.load %arg9[%c0_8, %c0_9] : memref<1x32xf32, #tpu.memory_space<vmem>>, vector<1x32xf32>
    %9 = vector.broadcast %8 : vector<1x32xf32> to vector<32x32xf32>
    %10 = arith.addf %7, %9 : vector<32x32xf32>
    %c0_10 = arith.constant 0 : index
    %c0_11 = arith.constant 0 : index
    %11 = vector.load %arg4[%c0_10, %c0_11] : memref<28x32xf32, #tpu.memory_space<vmem>>, vector<28x32xf32>
    %cst_12 = arith.constant dense<0.000000e+00> : vector<32x32xf32>
    %12 = tpu.matmul %0, %11, %cst_12 {dimension_numbers = #tpu.dot_dimension_numbers<[1], [0], [0], [1], [0, 0, 1, 1], [], []>} : vector<32x28xf32>, vector<28x32xf32>, vector<32x32xf32> -> vector<32x32xf32>
    %c0_13 = arith.constant 0 : index
    %c0_14 = arith.constant 0 : index
    %13 = vector.load %arg10[%c0_13, %c0_14] : memref<1x32xf32, #tpu.memory_space<vmem>>, vector<1x32xf32>
    %14 = vector.broadcast %13 : vector<1x32xf32> to vector<32x32xf32>
    %15 = arith.addf %12, %14 : vector<32x32xf32>
    %c0_15 = arith.constant 0 : index
    %c0_16 = arith.constant 0 : index
    %16 = vector.load %arg5[%c0_15, %c0_16] : memref<32x32xf32, #tpu.memory_space<vmem>>, vector<32x32xf32>
    %c0_17 = arith.constant 0 : index
    %c0_18 = arith.constant 0 : index
    %17 = vector.load %arg6[%c0_17, %c0_18] : memref<32x32xf32, #tpu.memory_space<vmem>>, vector<32x32xf32>
    %c0_19 = arith.constant 0 : index
    %c0_20 = arith.constant 0 : index
    %18 = vector.load %arg7[%c0_19, %c0_20] : memref<32x32xf32, #tpu.memory_space<vmem>>, vector<32x32xf32>
    %c0_21 = arith.constant 0 : index
    %c0_22 = arith.constant 0 : index
    %19 = vector.load %arg11[%c0_21, %c0_22] : memref<1x32xf32, #tpu.memory_space<vmem>>, vector<1x32xf32>
    %c0_23 = arith.constant 0 : index
    %c0_24 = arith.constant 0 : index
    %c0_25 = arith.constant 0 : index
    %20 = vector.load %arg1[%c0_23, %c0_24, %c0_25] : memref<2x4x32xf32, #tpu.memory_space<vmem>>, vector<1x4x32xf32>
    %21 = vector.shape_cast %20 : vector<1x4x32xf32> to vector<4x32xf32>
    %cst_26 = arith.constant dense<0.000000e+00> : vector<4x32xf32>
    %22 = tpu.matmul %21, %16, %cst_26 {dimension_numbers = #tpu.dot_dimension_numbers<[1], [0], [0], [1], [0, 0, 1, 1], [], []>} : vector<4x32xf32>, vector<32x32xf32>, vector<4x32xf32> -> vector<4x32xf32>
    %cst_27 = arith.constant dense<0.000000e+00> : vector<4x32xf32>
    %23 = tpu.matmul %21, %17, %cst_27 {dimension_numbers = #tpu.dot_dimension_numbers<[1], [0], [0], [1], [0, 0, 1, 1], [], []>} : vector<4x32xf32>, vector<32x32xf32>, vector<4x32xf32> -> vector<4x32xf32>
    %cst_28 = arith.constant dense<0.000000e+00> : vector<4x32xf32>
    %24 = tpu.matmul %21, %18, %cst_28 {dimension_numbers = #tpu.dot_dimension_numbers<[1], [0], [0], [1], [0, 0, 1, 1], [], []>} : vector<4x32xf32>, vector<32x32xf32>, vector<4x32xf32> -> vector<4x32xf32>
    %25 = vector.broadcast %19 : vector<1x32xf32> to vector<4x32xf32>
    %26 = arith.addf %24, %25 : vector<4x32xf32>
    %27 = vector.extract_strided_slice %5 {offsets = [0, 0], sizes = [4, 32], strides = [1, 1]} : vector<32x32xf32> to vector<4x32xf32>
    %28 = arith.addf %27, %22 : vector<4x32xf32>
    %29 = arith.negf %28 : vector<4x32xf32>
    %30 = math.exp %29 : vector<4x32xf32>
    %cst_29 = arith.constant 1.000000e+00 : f32
    %31 = vector.broadcast %cst_29 : f32 to vector<4x32xf32>
    %32 = arith.addf %31, %30 : vector<4x32xf32>
    %33 = arith.divf %31, %32 : vector<4x32xf32>
    %34 = vector.extract_strided_slice %10 {offsets = [0, 0], sizes = [4, 32], strides = [1, 1]} : vector<32x32xf32> to vector<4x32xf32>
    %35 = arith.addf %34, %23 : vector<4x32xf32>
    %36 = arith.negf %35 : vector<4x32xf32>
    %37 = math.exp %36 : vector<4x32xf32>
    %cst_30 = arith.constant 1.000000e+00 : f32
    %38 = vector.broadcast %cst_30 : f32 to vector<4x32xf32>
    %39 = arith.addf %38, %37 : vector<4x32xf32>
    %40 = arith.divf %38, %39 : vector<4x32xf32>
    %41 = vector.extract_strided_slice %15 {offsets = [0, 0], sizes = [4, 32], strides = [1, 1]} : vector<32x32xf32> to vector<4x32xf32>
    %42 = arith.mulf %33, %26 : vector<4x32xf32>
    %43 = arith.addf %41, %42 : vector<4x32xf32>
    %44 = math.tanh %43 : vector<4x32xf32>
    %cst_31 = arith.constant 1.000000e+00 : f32
    %45 = vector.broadcast %cst_31 : f32 to vector<4x32xf32>
    %46 = arith.subf %45, %40 : vector<4x32xf32>
    %47 = arith.mulf %46, %44 : vector<4x32xf32>
    %48 = arith.mulf %40, %21 : vector<4x32xf32>
    %49 = arith.addf %47, %48 : vector<4x32xf32>
    %cst_32 = arith.constant dense<0.000000e+00> : vector<4x32xf32>
    %50 = tpu.matmul %49, %16, %cst_32 {dimension_numbers = #tpu.dot_dimension_numbers<[1], [0], [0], [1], [0, 0, 1, 1], [], []>} : vector<4x32xf32>, vector<32x32xf32>, vector<4x32xf32> -> vector<4x32xf32>
    %cst_33 = arith.constant dense<0.000000e+00> : vector<4x32xf32>
    %51 = tpu.matmul %49, %17, %cst_33 {dimension_numbers = #tpu.dot_dimension_numbers<[1], [0], [0], [1], [0, 0, 1, 1], [], []>} : vector<4x32xf32>, vector<32x32xf32>, vector<4x32xf32> -> vector<4x32xf32>
    %cst_34 = arith.constant dense<0.000000e+00> : vector<4x32xf32>
    %52 = tpu.matmul %49, %18, %cst_34 {dimension_numbers = #tpu.dot_dimension_numbers<[1], [0], [0], [1], [0, 0, 1, 1], [], []>} : vector<4x32xf32>, vector<32x32xf32>, vector<4x32xf32> -> vector<4x32xf32>
    %53 = vector.broadcast %19 : vector<1x32xf32> to vector<4x32xf32>
    %54 = arith.addf %52, %53 : vector<4x32xf32>
    %55 = vector.extract_strided_slice %5 {offsets = [4, 0], sizes = [4, 32], strides = [1, 1]} : vector<32x32xf32> to vector<4x32xf32>
    %56 = arith.addf %55, %50 : vector<4x32xf32>
    %57 = arith.negf %56 : vector<4x32xf32>
    %58 = math.exp %57 : vector<4x32xf32>
    %cst_35 = arith.constant 1.000000e+00 : f32
    %59 = vector.broadcast %cst_35 : f32 to vector<4x32xf32>
    %60 = arith.addf %59, %58 : vector<4x32xf32>
    %61 = arith.divf %59, %60 : vector<4x32xf32>
    %62 = vector.extract_strided_slice %10 {offsets = [4, 0], sizes = [4, 32], strides = [1, 1]} : vector<32x32xf32> to vector<4x32xf32>
    %63 = arith.addf %62, %51 : vector<4x32xf32>
    %64 = arith.negf %63 : vector<4x32xf32>
    %65 = math.exp %64 : vector<4x32xf32>
    %cst_36 = arith.constant 1.000000e+00 : f32
    %66 = vector.broadcast %cst_36 : f32 to vector<4x32xf32>
    %67 = arith.addf %66, %65 : vector<4x32xf32>
    %68 = arith.divf %66, %67 : vector<4x32xf32>
    %69 = vector.extract_strided_slice %15 {offsets = [4, 0], sizes = [4, 32], strides = [1, 1]} : vector<32x32xf32> to vector<4x32xf32>
    %70 = arith.mulf %61, %54 : vector<4x32xf32>
    %71 = arith.addf %69, %70 : vector<4x32xf32>
    %72 = math.tanh %71 : vector<4x32xf32>
    %cst_37 = arith.constant 1.000000e+00 : f32
    %73 = vector.broadcast %cst_37 : f32 to vector<4x32xf32>
    %74 = arith.subf %73, %68 : vector<4x32xf32>
    %75 = arith.mulf %74, %72 : vector<4x32xf32>
    %76 = arith.mulf %68, %49 : vector<4x32xf32>
    %77 = arith.addf %75, %76 : vector<4x32xf32>
    %cst_38 = arith.constant dense<0.000000e+00> : vector<4x32xf32>
    %78 = tpu.matmul %77, %16, %cst_38 {dimension_numbers = #tpu.dot_dimension_numbers<[1], [0], [0], [1], [0, 0, 1, 1], [], []>} : vector<4x32xf32>, vector<32x32xf32>, vector<4x32xf32> -> vector<4x32xf32>
    %cst_39 = arith.constant dense<0.000000e+00> : vector<4x32xf32>
    %79 = tpu.matmul %77, %17, %cst_39 {dimension_numbers = #tpu.dot_dimension_numbers<[1], [0], [0], [1], [0, 0, 1, 1], [], []>} : vector<4x32xf32>, vector<32x32xf32>, vector<4x32xf32> -> vector<4x32xf32>
    %cst_40 = arith.constant dense<0.000000e+00> : vector<4x32xf32>
    %80 = tpu.matmul %77, %18, %cst_40 {dimension_numbers = #tpu.dot_dimension_numbers<[1], [0], [0], [1], [0, 0, 1, 1], [], []>} : vector<4x32xf32>, vector<32x32xf32>, vector<4x32xf32> -> vector<4x32xf32>
    %81 = vector.broadcast %19 : vector<1x32xf32> to vector<4x32xf32>
    %82 = arith.addf %80, %81 : vector<4x32xf32>
    %83 = vector.extract_strided_slice %5 {offsets = [8, 0], sizes = [4, 32], strides = [1, 1]} : vector<32x32xf32> to vector<4x32xf32>
    %84 = arith.addf %83, %78 : vector<4x32xf32>
    %85 = arith.negf %84 : vector<4x32xf32>
    %86 = math.exp %85 : vector<4x32xf32>
    %cst_41 = arith.constant 1.000000e+00 : f32
    %87 = vector.broadcast %cst_41 : f32 to vector<4x32xf32>
    %88 = arith.addf %87, %86 : vector<4x32xf32>
    %89 = arith.divf %87, %88 : vector<4x32xf32>
    %90 = vector.extract_strided_slice %10 {offsets = [8, 0], sizes = [4, 32], strides = [1, 1]} : vector<32x32xf32> to vector<4x32xf32>
    %91 = arith.addf %90, %79 : vector<4x32xf32>
    %92 = arith.negf %91 : vector<4x32xf32>
    %93 = math.exp %92 : vector<4x32xf32>
    %cst_42 = arith.constant 1.000000e+00 : f32
    %94 = vector.broadcast %cst_42 : f32 to vector<4x32xf32>
    %95 = arith.addf %94, %93 : vector<4x32xf32>
    %96 = arith.divf %94, %95 : vector<4x32xf32>
    %97 = vector.extract_strided_slice %15 {offsets = [8, 0], sizes = [4, 32], strides = [1, 1]} : vector<32x32xf32> to vector<4x32xf32>
    %98 = arith.mulf %89, %82 : vector<4x32xf32>
    %99 = arith.addf %97, %98 : vector<4x32xf32>
    %100 = math.tanh %99 : vector<4x32xf32>
    %cst_43 = arith.constant 1.000000e+00 : f32
    %101 = vector.broadcast %cst_43 : f32 to vector<4x32xf32>
    %102 = arith.subf %101, %96 : vector<4x32xf32>
    %103 = arith.mulf %102, %100 : vector<4x32xf32>
    %104 = arith.mulf %96, %77 : vector<4x32xf32>
    %105 = arith.addf %103, %104 : vector<4x32xf32>
    %cst_44 = arith.constant dense<0.000000e+00> : vector<4x32xf32>
    %106 = tpu.matmul %105, %16, %cst_44 {dimension_numbers = #tpu.dot_dimension_numbers<[1], [0], [0], [1], [0, 0, 1, 1], [], []>} : vector<4x32xf32>, vector<32x32xf32>, vector<4x32xf32> -> vector<4x32xf32>
    %cst_45 = arith.constant dense<0.000000e+00> : vector<4x32xf32>
    %107 = tpu.matmul %105, %17, %cst_45 {dimension_numbers = #tpu.dot_dimension_numbers<[1], [0], [0], [1], [0, 0, 1, 1], [], []>} : vector<4x32xf32>, vector<32x32xf32>, vector<4x32xf32> -> vector<4x32xf32>
    %cst_46 = arith.constant dense<0.000000e+00> : vector<4x32xf32>
    %108 = tpu.matmul %105, %18, %cst_46 {dimension_numbers = #tpu.dot_dimension_numbers<[1], [0], [0], [1], [0, 0, 1, 1], [], []>} : vector<4x32xf32>, vector<32x32xf32>, vector<4x32xf32> -> vector<4x32xf32>
    %109 = vector.broadcast %19 : vector<1x32xf32> to vector<4x32xf32>
    %110 = arith.addf %108, %109 : vector<4x32xf32>
    %111 = vector.extract_strided_slice %5 {offsets = [12, 0], sizes = [4, 32], strides = [1, 1]} : vector<32x32xf32> to vector<4x32xf32>
    %112 = arith.addf %111, %106 : vector<4x32xf32>
    %113 = arith.negf %112 : vector<4x32xf32>
    %114 = math.exp %113 : vector<4x32xf32>
    %cst_47 = arith.constant 1.000000e+00 : f32
    %115 = vector.broadcast %cst_47 : f32 to vector<4x32xf32>
    %116 = arith.addf %115, %114 : vector<4x32xf32>
    %117 = arith.divf %115, %116 : vector<4x32xf32>
    %118 = vector.extract_strided_slice %10 {offsets = [12, 0], sizes = [4, 32], strides = [1, 1]} : vector<32x32xf32> to vector<4x32xf32>
    %119 = arith.addf %118, %107 : vector<4x32xf32>
    %120 = arith.negf %119 : vector<4x32xf32>
    %121 = math.exp %120 : vector<4x32xf32>
    %cst_48 = arith.constant 1.000000e+00 : f32
    %122 = vector.broadcast %cst_48 : f32 to vector<4x32xf32>
    %123 = arith.addf %122, %121 : vector<4x32xf32>
    %124 = arith.divf %122, %123 : vector<4x32xf32>
    %125 = vector.extract_strided_slice %15 {offsets = [12, 0], sizes = [4, 32], strides = [1, 1]} : vector<32x32xf32> to vector<4x32xf32>
    %126 = arith.mulf %117, %110 : vector<4x32xf32>
    %127 = arith.addf %125, %126 : vector<4x32xf32>
    %128 = math.tanh %127 : vector<4x32xf32>
    %cst_49 = arith.constant 1.000000e+00 : f32
    %129 = vector.broadcast %cst_49 : f32 to vector<4x32xf32>
    %130 = arith.subf %129, %124 : vector<4x32xf32>
    %131 = arith.mulf %130, %128 : vector<4x32xf32>
    %132 = arith.mulf %124, %105 : vector<4x32xf32>
    %133 = arith.addf %131, %132 : vector<4x32xf32>
    %cst_50 = arith.constant dense<0.000000e+00> : vector<4x32xf32>
    %134 = tpu.matmul %133, %16, %cst_50 {dimension_numbers = #tpu.dot_dimension_numbers<[1], [0], [0], [1], [0, 0, 1, 1], [], []>} : vector<4x32xf32>, vector<32x32xf32>, vector<4x32xf32> -> vector<4x32xf32>
    %cst_51 = arith.constant dense<0.000000e+00> : vector<4x32xf32>
    %135 = tpu.matmul %133, %17, %cst_51 {dimension_numbers = #tpu.dot_dimension_numbers<[1], [0], [0], [1], [0, 0, 1, 1], [], []>} : vector<4x32xf32>, vector<32x32xf32>, vector<4x32xf32> -> vector<4x32xf32>
    %cst_52 = arith.constant dense<0.000000e+00> : vector<4x32xf32>
    %136 = tpu.matmul %133, %18, %cst_52 {dimension_numbers = #tpu.dot_dimension_numbers<[1], [0], [0], [1], [0, 0, 1, 1], [], []>} : vector<4x32xf32>, vector<32x32xf32>, vector<4x32xf32> -> vector<4x32xf32>
    %137 = vector.broadcast %19 : vector<1x32xf32> to vector<4x32xf32>
    %138 = arith.addf %136, %137 : vector<4x32xf32>
    %139 = vector.extract_strided_slice %5 {offsets = [16, 0], sizes = [4, 32], strides = [1, 1]} : vector<32x32xf32> to vector<4x32xf32>
    %140 = arith.addf %139, %134 : vector<4x32xf32>
    %141 = arith.negf %140 : vector<4x32xf32>
    %142 = math.exp %141 : vector<4x32xf32>
    %cst_53 = arith.constant 1.000000e+00 : f32
    %143 = vector.broadcast %cst_53 : f32 to vector<4x32xf32>
    %144 = arith.addf %143, %142 : vector<4x32xf32>
    %145 = arith.divf %143, %144 : vector<4x32xf32>
    %146 = vector.extract_strided_slice %10 {offsets = [16, 0], sizes = [4, 32], strides = [1, 1]} : vector<32x32xf32> to vector<4x32xf32>
    %147 = arith.addf %146, %135 : vector<4x32xf32>
    %148 = arith.negf %147 : vector<4x32xf32>
    %149 = math.exp %148 : vector<4x32xf32>
    %cst_54 = arith.constant 1.000000e+00 : f32
    %150 = vector.broadcast %cst_54 : f32 to vector<4x32xf32>
    %151 = arith.addf %150, %149 : vector<4x32xf32>
    %152 = arith.divf %150, %151 : vector<4x32xf32>
    %153 = vector.extract_strided_slice %15 {offsets = [16, 0], sizes = [4, 32], strides = [1, 1]} : vector<32x32xf32> to vector<4x32xf32>
    %154 = arith.mulf %145, %138 : vector<4x32xf32>
    %155 = arith.addf %153, %154 : vector<4x32xf32>
    %156 = math.tanh %155 : vector<4x32xf32>
    %cst_55 = arith.constant 1.000000e+00 : f32
    %157 = vector.broadcast %cst_55 : f32 to vector<4x32xf32>
    %158 = arith.subf %157, %152 : vector<4x32xf32>
    %159 = arith.mulf %158, %156 : vector<4x32xf32>
    %160 = arith.mulf %152, %133 : vector<4x32xf32>
    %161 = arith.addf %159, %160 : vector<4x32xf32>
    %cst_56 = arith.constant dense<0.000000e+00> : vector<4x32xf32>
    %162 = tpu.matmul %161, %16, %cst_56 {dimension_numbers = #tpu.dot_dimension_numbers<[1], [0], [0], [1], [0, 0, 1, 1], [], []>} : vector<4x32xf32>, vector<32x32xf32>, vector<4x32xf32> -> vector<4x32xf32>
    %cst_57 = arith.constant dense<0.000000e+00> : vector<4x32xf32>
    %163 = tpu.matmul %161, %17, %cst_57 {dimension_numbers = #tpu.dot_dimension_numbers<[1], [0], [0], [1], [0, 0, 1, 1], [], []>} : vector<4x32xf32>, vector<32x32xf32>, vector<4x32xf32> -> vector<4x32xf32>
    %cst_58 = arith.constant dense<0.000000e+00> : vector<4x32xf32>
    %164 = tpu.matmul %161, %18, %cst_58 {dimension_numbers = #tpu.dot_dimension_numbers<[1], [0], [0], [1], [0, 0, 1, 1], [], []>} : vector<4x32xf32>, vector<32x32xf32>, vector<4x32xf32> -> vector<4x32xf32>
    %165 = vector.broadcast %19 : vector<1x32xf32> to vector<4x32xf32>
    %166 = arith.addf %164, %165 : vector<4x32xf32>
    %167 = vector.extract_strided_slice %5 {offsets = [20, 0], sizes = [4, 32], strides = [1, 1]} : vector<32x32xf32> to vector<4x32xf32>
    %168 = arith.addf %167, %162 : vector<4x32xf32>
    %169 = arith.negf %168 : vector<4x32xf32>
    %170 = math.exp %169 : vector<4x32xf32>
    %cst_59 = arith.constant 1.000000e+00 : f32
    %171 = vector.broadcast %cst_59 : f32 to vector<4x32xf32>
    %172 = arith.addf %171, %170 : vector<4x32xf32>
    %173 = arith.divf %171, %172 : vector<4x32xf32>
    %174 = vector.extract_strided_slice %10 {offsets = [20, 0], sizes = [4, 32], strides = [1, 1]} : vector<32x32xf32> to vector<4x32xf32>
    %175 = arith.addf %174, %163 : vector<4x32xf32>
    %176 = arith.negf %175 : vector<4x32xf32>
    %177 = math.exp %176 : vector<4x32xf32>
    %cst_60 = arith.constant 1.000000e+00 : f32
    %178 = vector.broadcast %cst_60 : f32 to vector<4x32xf32>
    %179 = arith.addf %178, %177 : vector<4x32xf32>
    %180 = arith.divf %178, %179 : vector<4x32xf32>
    %181 = vector.extract_strided_slice %15 {offsets = [20, 0], sizes = [4, 32], strides = [1, 1]} : vector<32x32xf32> to vector<4x32xf32>
    %182 = arith.mulf %173, %166 : vector<4x32xf32>
    %183 = arith.addf %181, %182 : vector<4x32xf32>
    %184 = math.tanh %183 : vector<4x32xf32>
    %cst_61 = arith.constant 1.000000e+00 : f32
    %185 = vector.broadcast %cst_61 : f32 to vector<4x32xf32>
    %186 = arith.subf %185, %180 : vector<4x32xf32>
    %187 = arith.mulf %186, %184 : vector<4x32xf32>
    %188 = arith.mulf %180, %161 : vector<4x32xf32>
    %189 = arith.addf %187, %188 : vector<4x32xf32>
    %cst_62 = arith.constant dense<0.000000e+00> : vector<4x32xf32>
    %190 = tpu.matmul %189, %16, %cst_62 {dimension_numbers = #tpu.dot_dimension_numbers<[1], [0], [0], [1], [0, 0, 1, 1], [], []>} : vector<4x32xf32>, vector<32x32xf32>, vector<4x32xf32> -> vector<4x32xf32>
    %cst_63 = arith.constant dense<0.000000e+00> : vector<4x32xf32>
    %191 = tpu.matmul %189, %17, %cst_63 {dimension_numbers = #tpu.dot_dimension_numbers<[1], [0], [0], [1], [0, 0, 1, 1], [], []>} : vector<4x32xf32>, vector<32x32xf32>, vector<4x32xf32> -> vector<4x32xf32>
    %cst_64 = arith.constant dense<0.000000e+00> : vector<4x32xf32>
    %192 = tpu.matmul %189, %18, %cst_64 {dimension_numbers = #tpu.dot_dimension_numbers<[1], [0], [0], [1], [0, 0, 1, 1], [], []>} : vector<4x32xf32>, vector<32x32xf32>, vector<4x32xf32> -> vector<4x32xf32>
    %193 = vector.broadcast %19 : vector<1x32xf32> to vector<4x32xf32>
    %194 = arith.addf %192, %193 : vector<4x32xf32>
    %195 = vector.extract_strided_slice %5 {offsets = [24, 0], sizes = [4, 32], strides = [1, 1]} : vector<32x32xf32> to vector<4x32xf32>
    %196 = arith.addf %195, %190 : vector<4x32xf32>
    %197 = arith.negf %196 : vector<4x32xf32>
    %198 = math.exp %197 : vector<4x32xf32>
    %cst_65 = arith.constant 1.000000e+00 : f32
    %199 = vector.broadcast %cst_65 : f32 to vector<4x32xf32>
    %200 = arith.addf %199, %198 : vector<4x32xf32>
    %201 = arith.divf %199, %200 : vector<4x32xf32>
    %202 = vector.extract_strided_slice %10 {offsets = [24, 0], sizes = [4, 32], strides = [1, 1]} : vector<32x32xf32> to vector<4x32xf32>
    %203 = arith.addf %202, %191 : vector<4x32xf32>
    %204 = arith.negf %203 : vector<4x32xf32>
    %205 = math.exp %204 : vector<4x32xf32>
    %cst_66 = arith.constant 1.000000e+00 : f32
    %206 = vector.broadcast %cst_66 : f32 to vector<4x32xf32>
    %207 = arith.addf %206, %205 : vector<4x32xf32>
    %208 = arith.divf %206, %207 : vector<4x32xf32>
    %209 = vector.extract_strided_slice %15 {offsets = [24, 0], sizes = [4, 32], strides = [1, 1]} : vector<32x32xf32> to vector<4x32xf32>
    %210 = arith.mulf %201, %194 : vector<4x32xf32>
    %211 = arith.addf %209, %210 : vector<4x32xf32>
    %212 = math.tanh %211 : vector<4x32xf32>
    %cst_67 = arith.constant 1.000000e+00 : f32
    %213 = vector.broadcast %cst_67 : f32 to vector<4x32xf32>
    %214 = arith.subf %213, %208 : vector<4x32xf32>
    %215 = arith.mulf %214, %212 : vector<4x32xf32>
    %216 = arith.mulf %208, %189 : vector<4x32xf32>
    %217 = arith.addf %215, %216 : vector<4x32xf32>
    %cst_68 = arith.constant dense<0.000000e+00> : vector<4x32xf32>
    %218 = tpu.matmul %217, %16, %cst_68 {dimension_numbers = #tpu.dot_dimension_numbers<[1], [0], [0], [1], [0, 0, 1, 1], [], []>} : vector<4x32xf32>, vector<32x32xf32>, vector<4x32xf32> -> vector<4x32xf32>
    %cst_69 = arith.constant dense<0.000000e+00> : vector<4x32xf32>
    %219 = tpu.matmul %217, %17, %cst_69 {dimension_numbers = #tpu.dot_dimension_numbers<[1], [0], [0], [1], [0, 0, 1, 1], [], []>} : vector<4x32xf32>, vector<32x32xf32>, vector<4x32xf32> -> vector<4x32xf32>
    %cst_70 = arith.constant dense<0.000000e+00> : vector<4x32xf32>
    %220 = tpu.matmul %217, %18, %cst_70 {dimension_numbers = #tpu.dot_dimension_numbers<[1], [0], [0], [1], [0, 0, 1, 1], [], []>} : vector<4x32xf32>, vector<32x32xf32>, vector<4x32xf32> -> vector<4x32xf32>
    %221 = vector.broadcast %19 : vector<1x32xf32> to vector<4x32xf32>
    %222 = arith.addf %220, %221 : vector<4x32xf32>
    %223 = vector.extract_strided_slice %5 {offsets = [28, 0], sizes = [4, 32], strides = [1, 1]} : vector<32x32xf32> to vector<4x32xf32>
    %224 = arith.addf %223, %218 : vector<4x32xf32>
    %225 = arith.negf %224 : vector<4x32xf32>
    %226 = math.exp %225 : vector<4x32xf32>
    %cst_71 = arith.constant 1.000000e+00 : f32
    %227 = vector.broadcast %cst_71 : f32 to vector<4x32xf32>
    %228 = arith.addf %227, %226 : vector<4x32xf32>
    %229 = arith.divf %227, %228 : vector<4x32xf32>
    %230 = vector.extract_strided_slice %10 {offsets = [28, 0], sizes = [4, 32], strides = [1, 1]} : vector<32x32xf32> to vector<4x32xf32>
    %231 = arith.addf %230, %219 : vector<4x32xf32>
    %232 = arith.negf %231 : vector<4x32xf32>
    %233 = math.exp %232 : vector<4x32xf32>
    %cst_72 = arith.constant 1.000000e+00 : f32
    %234 = vector.broadcast %cst_72 : f32 to vector<4x32xf32>
    %235 = arith.addf %234, %233 : vector<4x32xf32>
    %236 = arith.divf %234, %235 : vector<4x32xf32>
    %237 = vector.extract_strided_slice %15 {offsets = [28, 0], sizes = [4, 32], strides = [1, 1]} : vector<32x32xf32> to vector<4x32xf32>
    %238 = arith.mulf %229, %222 : vector<4x32xf32>
    %239 = arith.addf %237, %238 : vector<4x32xf32>
    %240 = math.tanh %239 : vector<4x32xf32>
    %cst_73 = arith.constant 1.000000e+00 : f32
    %241 = vector.broadcast %cst_73 : f32 to vector<4x32xf32>
    %242 = arith.subf %241, %236 : vector<4x32xf32>
    %243 = arith.mulf %242, %240 : vector<4x32xf32>
    %244 = arith.mulf %236, %217 : vector<4x32xf32>
    %245 = arith.addf %243, %244 : vector<4x32xf32>
    %c0_74 = arith.constant 0 : index
    %c0_75 = arith.constant 0 : index
    %c0_76 = arith.constant 0 : index
    %246 = vector.load %arg25[%c0_74, %c0_75, %c0_76] : memref<2x4x32xf32, #tpu.memory_space<vmem>>, vector<1x4x32xf32>
    %247 = vector.shape_cast %246 : vector<1x4x32xf32> to vector<4x32xf32>
    %248 = vector.shape_cast %245 : vector<4x32xf32> to vector<1x4x32xf32>
    tpu.vector_store %arg25[%c0_74, %c0_75, %c0_76], %248 {strides = array<i32>} : memref<2x4x32xf32, #tpu.memory_space<vmem>>, vector<1x4x32xf32>,
    %249 = tpu.concatenate %49, %77, %105, %133, %161, %189, %217, %245 in 0 : vector<4x32xf32>, vector<4x32xf32>, vector<4x32xf32>, vector<4x32xf32>, vector<4x32xf32>, vector<4x32xf32>, vector<4x32xf32>, vector<4x32xf32> -> vector<32x32xf32>
    %c0_77 = arith.constant 0 : index
    %c0_78 = arith.constant 0 : index
    %250 = vector.load %arg12[%c0_77, %c0_78] : memref<32x32xf32, #tpu.memory_space<vmem>>, vector<32x32xf32>
    %cst_79 = arith.constant dense<0.000000e+00> : vector<32x32xf32>
    %251 = tpu.matmul %249, %250, %cst_79 {dimension_numbers = #tpu.dot_dimension_numbers<[1], [0], [0], [1], [0, 0, 1, 1], [], []>} : vector<32x32xf32>, vector<32x32xf32>, vector<32x32xf32> -> vector<32x32xf32>
    %c0_80 = arith.constant 0 : index
    %c0_81 = arith.constant 0 : index
    %252 = vector.load %arg18[%c0_80, %c0_81] : memref<1x32xf32, #tpu.memory_space<vmem>>, vector<1x32xf32>
    %253 = vector.broadcast %252 : vector<1x32xf32> to vector<32x32xf32>
    %254 = arith.addf %251, %253 : vector<32x32xf32>
    %c0_82 = arith.constant 0 : index
    %c0_83 = arith.constant 0 : index
    %255 = vector.load %arg13[%c0_82, %c0_83] : memref<32x32xf32, #tpu.memory_space<vmem>>, vector<32x32xf32>
    %cst_84 = arith.constant dense<0.000000e+00> : vector<32x32xf32>
    %256 = tpu.matmul %249, %255, %cst_84 {dimension_numbers = #tpu.dot_dimension_numbers<[1], [0], [0], [1], [0, 0, 1, 1], [], []>} : vector<32x32xf32>, vector<32x32xf32>, vector<32x32xf32> -> vector<32x32xf32>
    %c0_85 = arith.constant 0 : index
    %c0_86 = arith.constant 0 : index
    %257 = vector.load %arg19[%c0_85, %c0_86] : memref<1x32xf32, #tpu.memory_space<vmem>>, vector<1x32xf32>
    %258 = vector.broadcast %257 : vector<1x32xf32> to vector<32x32xf32>
    %259 = arith.addf %256, %258 : vector<32x32xf32>
    %c0_87 = arith.constant 0 : index
    %c0_88 = arith.constant 0 : index
    %260 = vector.load %arg14[%c0_87, %c0_88] : memref<32x32xf32, #tpu.memory_space<vmem>>, vector<32x32xf32>
    %cst_89 = arith.constant dense<0.000000e+00> : vector<32x32xf32>
    %261 = tpu.matmul %249, %260, %cst_89 {dimension_numbers = #tpu.dot_dimension_numbers<[1], [0], [0], [1], [0, 0, 1, 1], [], []>} : vector<32x32xf32>, vector<32x32xf32>, vector<32x32xf32> -> vector<32x32xf32>
    %c0_90 = arith.constant 0 : index
    %c0_91 = arith.constant 0 : index
    %262 = vector.load %arg20[%c0_90, %c0_91] : memref<1x32xf32, #tpu.memory_space<vmem>>, vector<1x32xf32>
    %263 = vector.broadcast %262 : vector<1x32xf32> to vector<32x32xf32>
    %264 = arith.addf %261, %263 : vector<32x32xf32>
    %c0_92 = arith.constant 0 : index
    %c0_93 = arith.constant 0 : index
    %265 = vector.load %arg15[%c0_92, %c0_93] : memref<32x32xf32, #tpu.memory_space<vmem>>, vector<32x32xf32>
    %c0_94 = arith.constant 0 : index
    %c0_95 = arith.constant 0 : index
    %266 = vector.load %arg16[%c0_94, %c0_95] : memref<32x32xf32, #tpu.memory_space<vmem>>, vector<32x32xf32>
    %c0_96 = arith.constant 0 : index
    %c0_97 = arith.constant 0 : index
    %267 = vector.load %arg17[%c0_96, %c0_97] : memref<32x32xf32, #tpu.memory_space<vmem>>, vector<32x32xf32>
    %c0_98 = arith.constant 0 : index
    %c0_99 = arith.constant 0 : index
    %268 = vector.load %arg21[%c0_98, %c0_99] : memref<1x32xf32, #tpu.memory_space<vmem>>, vector<1x32xf32>
    %c1 = arith.constant 1 : index
    %c0_100 = arith.constant 0 : index
    %c0_101 = arith.constant 0 : index
    %269 = vector.load %arg1[%c1, %c0_100, %c0_101] : memref<2x4x32xf32, #tpu.memory_space<vmem>>, vector<1x4x32xf32>
    %270 = vector.shape_cast %269 : vector<1x4x32xf32> to vector<4x32xf32>
    %cst_102 = arith.constant dense<0.000000e+00> : vector<4x32xf32>
    %271 = tpu.matmul %270, %265, %cst_102 {dimension_numbers = #tpu.dot_dimension_numbers<[1], [0], [0], [1], [0, 0, 1, 1], [], []>} : vector<4x32xf32>, vector<32x32xf32>, vector<4x32xf32> -> vector<4x32xf32>
    %cst_103 = arith.constant dense<0.000000e+00> : vector<4x32xf32>
    %272 = tpu.matmul %270, %266, %cst_103 {dimension_numbers = #tpu.dot_dimension_numbers<[1], [0], [0], [1], [0, 0, 1, 1], [], []>} : vector<4x32xf32>, vector<32x32xf32>, vector<4x32xf32> -> vector<4x32xf32>
    %cst_104 = arith.constant dense<0.000000e+00> : vector<4x32xf32>
    %273 = tpu.matmul %270, %267, %cst_104 {dimension_numbers = #tpu.dot_dimension_numbers<[1], [0], [0], [1], [0, 0, 1, 1], [], []>} : vector<4x32xf32>, vector<32x32xf32>, vector<4x32xf32> -> vector<4x32xf32>
    %274 = vector.broadcast %268 : vector<1x32xf32> to vector<4x32xf32>
    %275 = arith.addf %273, %274 : vector<4x32xf32>
    %276 = vector.extract_strided_slice %254 {offsets = [0, 0], sizes = [4, 32], strides = [1, 1]} : vector<32x32xf32> to vector<4x32xf32>
    %277 = arith.addf %276, %271 : vector<4x32xf32>
    %278 = arith.negf %277 : vector<4x32xf32>
    %279 = math.exp %278 : vector<4x32xf32>
    %cst_105 = arith.constant 1.000000e+00 : f32
    %280 = vector.broadcast %cst_105 : f32 to vector<4x32xf32>
    %281 = arith.addf %280, %279 : vector<4x32xf32>
    %282 = arith.divf %280, %281 : vector<4x32xf32>
    %283 = vector.extract_strided_slice %259 {offsets = [0, 0], sizes = [4, 32], strides = [1, 1]} : vector<32x32xf32> to vector<4x32xf32>
    %284 = arith.addf %283, %272 : vector<4x32xf32>
    %285 = arith.negf %284 : vector<4x32xf32>
    %286 = math.exp %285 : vector<4x32xf32>
    %cst_106 = arith.constant 1.000000e+00 : f32
    %287 = vector.broadcast %cst_106 : f32 to vector<4x32xf32>
    %288 = arith.addf %287, %286 : vector<4x32xf32>
    %289 = arith.divf %287, %288 : vector<4x32xf32>
    %290 = vector.extract_strided_slice %264 {offsets = [0, 0], sizes = [4, 32], strides = [1, 1]} : vector<32x32xf32> to vector<4x32xf32>
    %291 = arith.mulf %282, %275 : vector<4x32xf32>
    %292 = arith.addf %290, %291 : vector<4x32xf32>
    %293 = math.tanh %292 : vector<4x32xf32>
    %cst_107 = arith.constant 1.000000e+00 : f32
    %294 = vector.broadcast %cst_107 : f32 to vector<4x32xf32>
    %295 = arith.subf %294, %289 : vector<4x32xf32>
    %296 = arith.mulf %295, %293 : vector<4x32xf32>
    %297 = arith.mulf %289, %270 : vector<4x32xf32>
    %298 = arith.addf %296, %297 : vector<4x32xf32>
    %cst_108 = arith.constant dense<0.000000e+00> : vector<4x32xf32>
    %299 = tpu.matmul %298, %265, %cst_108 {dimension_numbers = #tpu.dot_dimension_numbers<[1], [0], [0], [1], [0, 0, 1, 1], [], []>} : vector<4x32xf32>, vector<32x32xf32>, vector<4x32xf32> -> vector<4x32xf32>
    %cst_109 = arith.constant dense<0.000000e+00> : vector<4x32xf32>
    %300 = tpu.matmul %298, %266, %cst_109 {dimension_numbers = #tpu.dot_dimension_numbers<[1], [0], [0], [1], [0, 0, 1, 1], [], []>} : vector<4x32xf32>, vector<32x32xf32>, vector<4x32xf32> -> vector<4x32xf32>
    %cst_110 = arith.constant dense<0.000000e+00> : vector<4x32xf32>
    %301 = tpu.matmul %298, %267, %cst_110 {dimension_numbers = #tpu.dot_dimension_numbers<[1], [0], [0], [1], [0, 0, 1, 1], [], []>} : vector<4x32xf32>, vector<32x32xf32>, vector<4x32xf32> -> vector<4x32xf32>
    %302 = vector.broadcast %268 : vector<1x32xf32> to vector<4x32xf32>
    %303 = arith.addf %301, %302 : vector<4x32xf32>
    %304 = vector.extract_strided_slice %254 {offsets = [4, 0], sizes = [4, 32], strides = [1, 1]} : vector<32x32xf32> to vector<4x32xf32>
    %305 = arith.addf %304, %299 : vector<4x32xf32>
    %306 = arith.negf %305 : vector<4x32xf32>
    %307 = math.exp %306 : vector<4x32xf32>
    %cst_111 = arith.constant 1.000000e+00 : f32
    %308 = vector.broadcast %cst_111 : f32 to vector<4x32xf32>
    %309 = arith.addf %308, %307 : vector<4x32xf32>
    %310 = arith.divf %308, %309 : vector<4x32xf32>
    %311 = vector.extract_strided_slice %259 {offsets = [4, 0], sizes = [4, 32], strides = [1, 1]} : vector<32x32xf32> to vector<4x32xf32>
    %312 = arith.addf %311, %300 : vector<4x32xf32>
    %313 = arith.negf %312 : vector<4x32xf32>
    %314 = math.exp %313 : vector<4x32xf32>
    %cst_112 = arith.constant 1.000000e+00 : f32
    %315 = vector.broadcast %cst_112 : f32 to vector<4x32xf32>
    %316 = arith.addf %315, %314 : vector<4x32xf32>
    %317 = arith.divf %315, %316 : vector<4x32xf32>
    %318 = vector.extract_strided_slice %264 {offsets = [4, 0], sizes = [4, 32], strides = [1, 1]} : vector<32x32xf32> to vector<4x32xf32>
    %319 = arith.mulf %310, %303 : vector<4x32xf32>
    %320 = arith.addf %318, %319 : vector<4x32xf32>
    %321 = math.tanh %320 : vector<4x32xf32>
    %cst_113 = arith.constant 1.000000e+00 : f32
    %322 = vector.broadcast %cst_113 : f32 to vector<4x32xf32>
    %323 = arith.subf %322, %317 : vector<4x32xf32>
    %324 = arith.mulf %323, %321 : vector<4x32xf32>
    %325 = arith.mulf %317, %298 : vector<4x32xf32>
    %326 = arith.addf %324, %325 : vector<4x32xf32>
    %cst_114 = arith.constant dense<0.000000e+00> : vector<4x32xf32>
    %327 = tpu.matmul %326, %265, %cst_114 {dimension_numbers = #tpu.dot_dimension_numbers<[1], [0], [0], [1], [0, 0, 1, 1], [], []>} : vector<4x32xf32>, vector<32x32xf32>, vector<4x32xf32> -> vector<4x32xf32>
    %cst_115 = arith.constant dense<0.000000e+00> : vector<4x32xf32>
    %328 = tpu.matmul %326, %266, %cst_115 {dimension_numbers = #tpu.dot_dimension_numbers<[1], [0], [0], [1], [0, 0, 1, 1], [], []>} : vector<4x32xf32>, vector<32x32xf32>, vector<4x32xf32> -> vector<4x32xf32>
    %cst_116 = arith.constant dense<0.000000e+00> : vector<4x32xf32>
    %329 = tpu.matmul %326, %267, %cst_116 {dimension_numbers = #tpu.dot_dimension_numbers<[1], [0], [0], [1], [0, 0, 1, 1], [], []>} : vector<4x32xf32>, vector<32x32xf32>, vector<4x32xf32> -> vector<4x32xf32>
    %330 = vector.broadcast %268 : vector<1x32xf32> to vector<4x32xf32>
    %331 = arith.addf %329, %330 : vector<4x32xf32>
    %332 = vector.extract_strided_slice %254 {offsets = [8, 0], sizes = [4, 32], strides = [1, 1]} : vector<32x32xf32> to vector<4x32xf32>
    %333 = arith.addf %332, %327 : vector<4x32xf32>
    %334 = arith.negf %333 : vector<4x32xf32>
    %335 = math.exp %334 : vector<4x32xf32>
    %cst_117 = arith.constant 1.000000e+00 : f32
    %336 = vector.broadcast %cst_117 : f32 to vector<4x32xf32>
    %337 = arith.addf %336, %335 : vector<4x32xf32>
    %338 = arith.divf %336, %337 : vector<4x32xf32>
    %339 = vector.extract_strided_slice %259 {offsets = [8, 0], sizes = [4, 32], strides = [1, 1]} : vector<32x32xf32> to vector<4x32xf32>
    %340 = arith.addf %339, %328 : vector<4x32xf32>
    %341 = arith.negf %340 : vector<4x32xf32>
    %342 = math.exp %341 : vector<4x32xf32>
    %cst_118 = arith.constant 1.000000e+00 : f32
    %343 = vector.broadcast %cst_118 : f32 to vector<4x32xf32>
    %344 = arith.addf %343, %342 : vector<4x32xf32>
    %345 = arith.divf %343, %344 : vector<4x32xf32>
    %346 = vector.extract_strided_slice %264 {offsets = [8, 0], sizes = [4, 32], strides = [1, 1]} : vector<32x32xf32> to vector<4x32xf32>
    %347 = arith.mulf %338, %331 : vector<4x32xf32>
    %348 = arith.addf %346, %347 : vector<4x32xf32>
    %349 = math.tanh %348 : vector<4x32xf32>
    %cst_119 = arith.constant 1.000000e+00 : f32
    %350 = vector.broadcast %cst_119 : f32 to vector<4x32xf32>
    %351 = arith.subf %350, %345 : vector<4x32xf32>
    %352 = arith.mulf %351, %349 : vector<4x32xf32>
    %353 = arith.mulf %345, %326 : vector<4x32xf32>
    %354 = arith.addf %352, %353 : vector<4x32xf32>
    %cst_120 = arith.constant dense<0.000000e+00> : vector<4x32xf32>
    %355 = tpu.matmul %354, %265, %cst_120 {dimension_numbers = #tpu.dot_dimension_numbers<[1], [0], [0], [1], [0, 0, 1, 1], [], []>} : vector<4x32xf32>, vector<32x32xf32>, vector<4x32xf32> -> vector<4x32xf32>
    %cst_121 = arith.constant dense<0.000000e+00> : vector<4x32xf32>
    %356 = tpu.matmul %354, %266, %cst_121 {dimension_numbers = #tpu.dot_dimension_numbers<[1], [0], [0], [1], [0, 0, 1, 1], [], []>} : vector<4x32xf32>, vector<32x32xf32>, vector<4x32xf32> -> vector<4x32xf32>
    %cst_122 = arith.constant dense<0.000000e+00> : vector<4x32xf32>
    %357 = tpu.matmul %354, %267, %cst_122 {dimension_numbers = #tpu.dot_dimension_numbers<[1], [0], [0], [1], [0, 0, 1, 1], [], []>} : vector<4x32xf32>, vector<32x32xf32>, vector<4x32xf32> -> vector<4x32xf32>
    %358 = vector.broadcast %268 : vector<1x32xf32> to vector<4x32xf32>
    %359 = arith.addf %357, %358 : vector<4x32xf32>
    %360 = vector.extract_strided_slice %254 {offsets = [12, 0], sizes = [4, 32], strides = [1, 1]} : vector<32x32xf32> to vector<4x32xf32>
    %361 = arith.addf %360, %355 : vector<4x32xf32>
    %362 = arith.negf %361 : vector<4x32xf32>
    %363 = math.exp %362 : vector<4x32xf32>
    %cst_123 = arith.constant 1.000000e+00 : f32
    %364 = vector.broadcast %cst_123 : f32 to vector<4x32xf32>
    %365 = arith.addf %364, %363 : vector<4x32xf32>
    %366 = arith.divf %364, %365 : vector<4x32xf32>
    %367 = vector.extract_strided_slice %259 {offsets = [12, 0], sizes = [4, 32], strides = [1, 1]} : vector<32x32xf32> to vector<4x32xf32>
    %368 = arith.addf %367, %356 : vector<4x32xf32>
    %369 = arith.negf %368 : vector<4x32xf32>
    %370 = math.exp %369 : vector<4x32xf32>
    %cst_124 = arith.constant 1.000000e+00 : f32
    %371 = vector.broadcast %cst_124 : f32 to vector<4x32xf32>
    %372 = arith.addf %371, %370 : vector<4x32xf32>
    %373 = arith.divf %371, %372 : vector<4x32xf32>
    %374 = vector.extract_strided_slice %264 {offsets = [12, 0], sizes = [4, 32], strides = [1, 1]} : vector<32x32xf32> to vector<4x32xf32>
    %375 = arith.mulf %366, %359 : vector<4x32xf32>
    %376 = arith.addf %374, %375 : vector<4x32xf32>
    %377 = math.tanh %376 : vector<4x32xf32>
    %cst_125 = arith.constant 1.000000e+00 : f32
    %378 = vector.broadcast %cst_125 : f32 to vector<4x32xf32>
    %379 = arith.subf %378, %373 : vector<4x32xf32>
    %380 = arith.mulf %379, %377 : vector<4x32xf32>
    %381 = arith.mulf %373, %354 : vector<4x32xf32>
    %382 = arith.addf %380, %381 : vector<4x32xf32>
    %cst_126 = arith.constant dense<0.000000e+00> : vector<4x32xf32>
    %383 = tpu.matmul %382, %265, %cst_126 {dimension_numbers = #tpu.dot_dimension_numbers<[1], [0], [0], [1], [0, 0, 1, 1], [], []>} : vector<4x32xf32>, vector<32x32xf32>, vector<4x32xf32> -> vector<4x32xf32>
    %cst_127 = arith.constant dense<0.000000e+00> : vector<4x32xf32>
    %384 = tpu.matmul %382, %266, %cst_127 {dimension_numbers = #tpu.dot_dimension_numbers<[1], [0], [0], [1], [0, 0, 1, 1], [], []>} : vector<4x32xf32>, vector<32x32xf32>, vector<4x32xf32> -> vector<4x32xf32>
    %cst_128 = arith.constant dense<0.000000e+00> : vector<4x32xf32>
    %385 = tpu.matmul %382, %267, %cst_128 {dimension_numbers = #tpu.dot_dimension_numbers<[1], [0], [0], [1], [0, 0, 1, 1], [], []>} : vector<4x32xf32>, vector<32x32xf32>, vector<4x32xf32> -> vector<4x32xf32>
    %386 = vector.broadcast %268 : vector<1x32xf32> to vector<4x32xf32>
    %387 = arith.addf %385, %386 : vector<4x32xf32>
    %388 = vector.extract_strided_slice %254 {offsets = [16, 0], sizes = [4, 32], strides = [1, 1]} : vector<32x32xf32> to vector<4x32xf32>
    %389 = arith.addf %388, %383 : vector<4x32xf32>
    %390 = arith.negf %389 : vector<4x32xf32>
    %391 = math.exp %390 : vector<4x32xf32>
    %cst_129 = arith.constant 1.000000e+00 : f32
    %392 = vector.broadcast %cst_129 : f32 to vector<4x32xf32>
    %393 = arith.addf %392, %391 : vector<4x32xf32>
    %394 = arith.divf %392, %393 : vector<4x32xf32>
    %395 = vector.extract_strided_slice %259 {offsets = [16, 0], sizes = [4, 32], strides = [1, 1]} : vector<32x32xf32> to vector<4x32xf32>
    %396 = arith.addf %395, %384 : vector<4x32xf32>
    %397 = arith.negf %396 : vector<4x32xf32>
    %398 = math.exp %397 : vector<4x32xf32>
    %cst_130 = arith.constant 1.000000e+00 : f32
    %399 = vector.broadcast %cst_130 : f32 to vector<4x32xf32>
    %400 = arith.addf %399, %398 : vector<4x32xf32>
    %401 = arith.divf %399, %400 : vector<4x32xf32>
    %402 = vector.extract_strided_slice %264 {offsets = [16, 0], sizes = [4, 32], strides = [1, 1]} : vector<32x32xf32> to vector<4x32xf32>
    %403 = arith.mulf %394, %387 : vector<4x32xf32>
    %404 = arith.addf %402, %403 : vector<4x32xf32>
    %405 = math.tanh %404 : vector<4x32xf32>
    %cst_131 = arith.constant 1.000000e+00 : f32
    %406 = vector.broadcast %cst_131 : f32 to vector<4x32xf32>
    %407 = arith.subf %406, %401 : vector<4x32xf32>
    %408 = arith.mulf %407, %405 : vector<4x32xf32>
    %409 = arith.mulf %401, %382 : vector<4x32xf32>
    %410 = arith.addf %408, %409 : vector<4x32xf32>
    %cst_132 = arith.constant dense<0.000000e+00> : vector<4x32xf32>
    %411 = tpu.matmul %410, %265, %cst_132 {dimension_numbers = #tpu.dot_dimension_numbers<[1], [0], [0], [1], [0, 0, 1, 1], [], []>} : vector<4x32xf32>, vector<32x32xf32>, vector<4x32xf32> -> vector<4x32xf32>
    %cst_133 = arith.constant dense<0.000000e+00> : vector<4x32xf32>
    %412 = tpu.matmul %410, %266, %cst_133 {dimension_numbers = #tpu.dot_dimension_numbers<[1], [0], [0], [1], [0, 0, 1, 1], [], []>} : vector<4x32xf32>, vector<32x32xf32>, vector<4x32xf32> -> vector<4x32xf32>
    %cst_134 = arith.constant dense<0.000000e+00> : vector<4x32xf32>
    %413 = tpu.matmul %410, %267, %cst_134 {dimension_numbers = #tpu.dot_dimension_numbers<[1], [0], [0], [1], [0, 0, 1, 1], [], []>} : vector<4x32xf32>, vector<32x32xf32>, vector<4x32xf32> -> vector<4x32xf32>
    %414 = vector.broadcast %268 : vector<1x32xf32> to vector<4x32xf32>
    %415 = arith.addf %413, %414 : vector<4x32xf32>
    %416 = vector.extract_strided_slice %254 {offsets = [20, 0], sizes = [4, 32], strides = [1, 1]} : vector<32x32xf32> to vector<4x32xf32>
    %417 = arith.addf %416, %411 : vector<4x32xf32>
    %418 = arith.negf %417 : vector<4x32xf32>
    %419 = math.exp %418 : vector<4x32xf32>
    %cst_135 = arith.constant 1.000000e+00 : f32
    %420 = vector.broadcast %cst_135 : f32 to vector<4x32xf32>
    %421 = arith.addf %420, %419 : vector<4x32xf32>
    %422 = arith.divf %420, %421 : vector<4x32xf32>
    %423 = vector.extract_strided_slice %259 {offsets = [20, 0], sizes = [4, 32], strides = [1, 1]} : vector<32x32xf32> to vector<4x32xf32>
    %424 = arith.addf %423, %412 : vector<4x32xf32>
    %425 = arith.negf %424 : vector<4x32xf32>
    %426 = math.exp %425 : vector<4x32xf32>
    %cst_136 = arith.constant 1.000000e+00 : f32
    %427 = vector.broadcast %cst_136 : f32 to vector<4x32xf32>
    %428 = arith.addf %427, %426 : vector<4x32xf32>
    %429 = arith.divf %427, %428 : vector<4x32xf32>
    %430 = vector.extract_strided_slice %264 {offsets = [20, 0], sizes = [4, 32], strides = [1, 1]} : vector<32x32xf32> to vector<4x32xf32>
    %431 = arith.mulf %422, %415 : vector<4x32xf32>
    %432 = arith.addf %430, %431 : vector<4x32xf32>
    %433 = math.tanh %432 : vector<4x32xf32>
    %cst_137 = arith.constant 1.000000e+00 : f32
    %434 = vector.broadcast %cst_137 : f32 to vector<4x32xf32>
    %435 = arith.subf %434, %429 : vector<4x32xf32>
    %436 = arith.mulf %435, %433 : vector<4x32xf32>
    %437 = arith.mulf %429, %410 : vector<4x32xf32>
    %438 = arith.addf %436, %437 : vector<4x32xf32>
    %cst_138 = arith.constant dense<0.000000e+00> : vector<4x32xf32>
    %439 = tpu.matmul %438, %265, %cst_138 {dimension_numbers = #tpu.dot_dimension_numbers<[1], [0], [0], [1], [0, 0, 1, 1], [], []>} : vector<4x32xf32>, vector<32x32xf32>, vector<4x32xf32> -> vector<4x32xf32>
    %cst_139 = arith.constant dense<0.000000e+00> : vector<4x32xf32>
    %440 = tpu.matmul %438, %266, %cst_139 {dimension_numbers = #tpu.dot_dimension_numbers<[1], [0], [0], [1], [0, 0, 1, 1], [], []>} : vector<4x32xf32>, vector<32x32xf32>, vector<4x32xf32> -> vector<4x32xf32>
    %cst_140 = arith.constant dense<0.000000e+00> : vector<4x32xf32>
    %441 = tpu.matmul %438, %267, %cst_140 {dimension_numbers = #tpu.dot_dimension_numbers<[1], [0], [0], [1], [0, 0, 1, 1], [], []>} : vector<4x32xf32>, vector<32x32xf32>, vector<4x32xf32> -> vector<4x32xf32>
    %442 = vector.broadcast %268 : vector<1x32xf32> to vector<4x32xf32>
    %443 = arith.addf %441, %442 : vector<4x32xf32>
    %444 = vector.extract_strided_slice %254 {offsets = [24, 0], sizes = [4, 32], strides = [1, 1]} : vector<32x32xf32> to vector<4x32xf32>
    %445 = arith.addf %444, %439 : vector<4x32xf32>
    %446 = arith.negf %445 : vector<4x32xf32>
    %447 = math.exp %446 : vector<4x32xf32>
    %cst_141 = arith.constant 1.000000e+00 : f32
    %448 = vector.broadcast %cst_141 : f32 to vector<4x32xf32>
    %449 = arith.addf %448, %447 : vector<4x32xf32>
    %450 = arith.divf %448, %449 : vector<4x32xf32>
    %451 = vector.extract_strided_slice %259 {offsets = [24, 0], sizes = [4, 32], strides = [1, 1]} : vector<32x32xf32> to vector<4x32xf32>
    %452 = arith.addf %451, %440 : vector<4x32xf32>
    %453 = arith.negf %452 : vector<4x32xf32>
    %454 = math.exp %453 : vector<4x32xf32>
    %cst_142 = arith.constant 1.000000e+00 : f32
    %455 = vector.broadcast %cst_142 : f32 to vector<4x32xf32>
    %456 = arith.addf %455, %454 : vector<4x32xf32>
    %457 = arith.divf %455, %456 : vector<4x32xf32>
    %458 = vector.extract_strided_slice %264 {offsets = [24, 0], sizes = [4, 32], strides = [1, 1]} : vector<32x32xf32> to vector<4x32xf32>
    %459 = arith.mulf %450, %443 : vector<4x32xf32>
    %460 = arith.addf %458, %459 : vector<4x32xf32>
    %461 = math.tanh %460 : vector<4x32xf32>
    %cst_143 = arith.constant 1.000000e+00 : f32
    %462 = vector.broadcast %cst_143 : f32 to vector<4x32xf32>
    %463 = arith.subf %462, %457 : vector<4x32xf32>
    %464 = arith.mulf %463, %461 : vector<4x32xf32>
    %465 = arith.mulf %457, %438 : vector<4x32xf32>
    %466 = arith.addf %464, %465 : vector<4x32xf32>
    %cst_144 = arith.constant dense<0.000000e+00> : vector<4x32xf32>
    %467 = tpu.matmul %466, %265, %cst_144 {dimension_numbers = #tpu.dot_dimension_numbers<[1], [0], [0], [1], [0, 0, 1, 1], [], []>} : vector<4x32xf32>, vector<32x32xf32>, vector<4x32xf32> -> vector<4x32xf32>
    %cst_145 = arith.constant dense<0.000000e+00> : vector<4x32xf32>
    %468 = tpu.matmul %466, %266, %cst_145 {dimension_numbers = #tpu.dot_dimension_numbers<[1], [0], [0], [1], [0, 0, 1, 1], [], []>} : vector<4x32xf32>, vector<32x32xf32>, vector<4x32xf32> -> vector<4x32xf32>
    %cst_146 = arith.constant dense<0.000000e+00> : vector<4x32xf32>
    %469 = tpu.matmul %466, %267, %cst_146 {dimension_numbers = #tpu.dot_dimension_numbers<[1], [0], [0], [1], [0, 0, 1, 1], [], []>} : vector<4x32xf32>, vector<32x32xf32>, vector<4x32xf32> -> vector<4x32xf32>
    %470 = vector.broadcast %268 : vector<1x32xf32> to vector<4x32xf32>
    %471 = arith.addf %469, %470 : vector<4x32xf32>
    %472 = vector.extract_strided_slice %254 {offsets = [28, 0], sizes = [4, 32], strides = [1, 1]} : vector<32x32xf32> to vector<4x32xf32>
    %473 = arith.addf %472, %467 : vector<4x32xf32>
    %474 = arith.negf %473 : vector<4x32xf32>
    %475 = math.exp %474 : vector<4x32xf32>
    %cst_147 = arith.constant 1.000000e+00 : f32
    %476 = vector.broadcast %cst_147 : f32 to vector<4x32xf32>
    %477 = arith.addf %476, %475 : vector<4x32xf32>
    %478 = arith.divf %476, %477 : vector<4x32xf32>
    %479 = vector.extract_strided_slice %259 {offsets = [28, 0], sizes = [4, 32], strides = [1, 1]} : vector<32x32xf32> to vector<4x32xf32>
    %480 = arith.addf %479, %468 : vector<4x32xf32>
    %481 = arith.negf %480 : vector<4x32xf32>
    %482 = math.exp %481 : vector<4x32xf32>
    %cst_148 = arith.constant 1.000000e+00 : f32
    %483 = vector.broadcast %cst_148 : f32 to vector<4x32xf32>
    %484 = arith.addf %483, %482 : vector<4x32xf32>
    %485 = arith.divf %483, %484 : vector<4x32xf32>
    %486 = vector.extract_strided_slice %264 {offsets = [28, 0], sizes = [4, 32], strides = [1, 1]} : vector<32x32xf32> to vector<4x32xf32>
    %487 = arith.mulf %478, %471 : vector<4x32xf32>
    %488 = arith.addf %486, %487 : vector<4x32xf32>
    %489 = math.tanh %488 : vector<4x32xf32>
    %cst_149 = arith.constant 1.000000e+00 : f32
    %490 = vector.broadcast %cst_149 : f32 to vector<4x32xf32>
    %491 = arith.subf %490, %485 : vector<4x32xf32>
    %492 = arith.mulf %491, %489 : vector<4x32xf32>
    %493 = arith.mulf %485, %466 : vector<4x32xf32>
    %494 = arith.addf %492, %493 : vector<4x32xf32>
    %c1_150 = arith.constant 1 : index
    %c0_151 = arith.constant 0 : index
    %c0_152 = arith.constant 0 : index
    %495 = vector.load %arg25[%c1_150, %c0_151, %c0_152] : memref<2x4x32xf32, #tpu.memory_space<vmem>>, vector<1x4x32xf32>
    %496 = vector.shape_cast %495 : vector<1x4x32xf32> to vector<4x32xf32>
    %497 = vector.shape_cast %494 : vector<4x32xf32> to vector<1x4x32xf32>
    tpu.vector_store %arg25[%c1_150, %c0_151, %c0_152], %497 {strides = array<i32>} : memref<2x4x32xf32, #tpu.memory_space<vmem>>, vector<1x4x32xf32>,
    %498 = tpu.concatenate %298, %326, %354, %382, %410, %438, %466, %494 in 0 : vector<4x32xf32>, vector<4x32xf32>, vector<4x32xf32>, vector<4x32xf32>, vector<4x32xf32>, vector<4x32xf32>, vector<4x32xf32>, vector<4x32xf32> -> vector<32x32xf32>
    %c0_153 = arith.constant 0 : index
    %c0_154 = arith.constant 0 : index
    %499 = vector.load %arg22[%c0_153, %c0_154] : memref<32x20xf32, #tpu.memory_space<vmem>>, vector<32x20xf32>
    %cst_155 = arith.constant dense<0.000000e+00> : vector<32x20xf32>
    %500 = tpu.matmul %498, %499, %cst_155 {dimension_numbers = #tpu.dot_dimension_numbers<[1], [0], [0], [1], [0, 0, 1, 1], [], []>} : vector<32x32xf32>, vector<32x20xf32>, vector<32x20xf32> -> vector<32x20xf32>
    %c0_156 = arith.constant 0 : index
    %c0_157 = arith.constant 0 : index
    %501 = vector.load %arg23[%c0_156, %c0_157] : memref<1x20xf32, #tpu.memory_space<vmem>>, vector<1x20xf32>
    %502 = vector.broadcast %501 : vector<1x20xf32> to vector<32x20xf32>
    %503 = arith.addf %500, %502 : vector<32x20xf32>
    %c0_158 = arith.constant 0 : index
    %c0_159 = arith.constant 0 : index
    %504 = vector.load %arg24[%c0_158, %c0_159] : memref<32x20xf32, #tpu.memory_space<vmem>>, vector<32x20xf32>
    tpu.vector_store %arg24[%c0_158, %c0_159], %503 {strides = array<i32>} : memref<32x20xf32, #tpu.memory_space<vmem>>, vector<32x20xf32>,
    return
  }
}

</mosaic_0001>

<llo_original>
// kernel: fwd.1
$region0: #{fwd.1}
  #allocation0 [shape = 'u32[]', space=smem, size = 0x4, offset = 0x4, fixed_abs, tag = 'smem constant byte address 0x4 - core index']
  #allocation1 [shape = 'u32[144,128]{1,0:T(1,128)}', space=vmem, size = 0x12000, scoped, tag = 'internal scratch']
  %s0 = inlined_call_operand.hbm [shape: f32[32,28], index: 0, kind: input, shape index: {}]
  %s1 = inlined_call_operand.hbm [shape: f32[2,4,32], index: 1, kind: input, shape index: {}]
  %s2 = inlined_call_operand.hbm [shape: f32[28,32], index: 2, kind: input, shape index: {}]
  %s3 = inlined_call_operand.hbm [shape: f32[28,32], index: 3, kind: input, shape index: {}]
  %s4 = inlined_call_operand.hbm [shape: f32[28,32], index: 4, kind: input, shape index: {}]
  %s5 = inlined_call_operand.hbm [shape: f32[32,32], index: 5, kind: input, shape index: {}]
  %s6 = inlined_call_operand.hbm [shape: f32[32,32], index: 6, kind: input, shape index: {}]
  %s7 = inlined_call_operand.hbm [shape: f32[32,32], index: 7, kind: input, shape index: {}]
  %s8 = inlined_call_operand.vmem [shape: f32[1,32], index: 8, kind: input, shape index: {}]
  %s9 = inlined_call_operand.vmem [shape: f32[1,32], index: 9, kind: input, shape index: {}]
  %s10 = inlined_call_operand.vmem [shape: f32[1,32], index: 10, kind: input, shape index: {}]
  %s11 = inlined_call_operand.vmem [shape: f32[1,32], index: 11, kind: input, shape index: {}]
  %s12 = inlined_call_operand.hbm [shape: f32[32,32], index: 12, kind: input, shape index: {}]
  %s13 = inlined_call_operand.hbm [shape: f32[32,32], index: 13, kind: input, shape index: {}]
  %s14 = inlined_call_operand.hbm [shape: f32[32,32], index: 14, kind: input, shape index: {}]
  %s15 = inlined_call_operand.hbm [shape: f32[32,32], index: 15, kind: input, shape index: {}]
  %s16 = inlined_call_operand.hbm [shape: f32[32,32], index: 16, kind: input, shape index: {}]
  %s17 = inlined_call_operand.hbm [shape: f32[32,32], index: 17, kind: input, shape index: {}]
  %s18 = inlined_call_operand.vmem [shape: f32[1,32], index: 18, kind: input, shape index: {}]
  %s19 = inlined_call_operand.vmem [shape: f32[1,32], index: 19, kind: input, shape index: {}]
  %s20 = inlined_call_operand.vmem [shape: f32[1,32], index: 20, kind: input, shape index: {}]
  %s21 = inlined_call_operand.vmem [shape: f32[1,32], index: 21, kind: input, shape index: {}]
  %s22 = inlined_call_operand.vmem [shape: f32[32,20], index: 22, kind: input, shape index: {}]
  %s23 = inlined_call_operand.vmem [shape: f32[1,20], index: 23, kind: input, shape index: {}]
  %s24 = inlined_call_operand.vmem [shape: f32[32,20], index: 24, kind: output, shape index: {0}]
  %s25 = inlined_call_operand.hbm [shape: f32[2,4,32], index: 25, kind: output, shape index: {1}]
  %26 = xla_tuple %s24, %s25
  %s27 = sld [smem:[#allocation0]]
  $region170: #{fwd.1} parent=0
    _
  %s29 = ssub.s32 1, %s27
  %s30 = scalar_select 0, %s29, %s27
  $region1: #{fwd.1} parent=0
    #allocation2 [shape = 'u8[16384]{0}', space=vmem, size = 0x4000, scoped, tag = 'input window, operand 0, single buffered']
    #allocation3 [shape = 's32[1]{0}', space=sflag, size = 0x4, scoped, tag = 'scoped memory for fwd.1']
    #allocation4 [shape = 's32[1]{0}', space=sflag, size = 0x4, scoped, tag = 'scoped memory for fwd.1']
    #allocation5 [shape = 'u8[4096]{0}', space=vmem, size = 0x1000, scoped, tag = 'input window, operand 1, single buffered']
    #allocation6 [shape = 's32[1]{0}', space=sflag, size = 0x4, scoped, tag = 'scoped memory for fwd.1']
    #allocation7 [shape = 'u8[16384]{0}', space=vmem, size = 0x4000, scoped, tag = 'input window, operand 2, single buffered']
    #allocation8 [shape = 'u8[16384]{0}', space=vmem, size = 0x4000, scoped, tag = 'input window, operand 3, single buffered']
    #allocation9 [shape = 's32[1]{0}', space=sflag, size = 0x4, scoped, tag = 'scoped memory for fwd.1']
    #allocation10 [shape = 'u8[16384]{0}', space=vmem, size = 0x4000, scoped, tag = 'input window, operand 4, single buffered']
    #allocation11 [shape = 'u8[16384]{0}', space=vmem, size = 0x4000, scoped, tag = 'input window, operand 5, single buffered']
    #allocation12 [shape = 's32[1]{0}', space=sflag, size = 0x4, scoped, tag = 'scoped memory for fwd.1']
    #allocation13 [shape = 'u8[16384]{0}', space=vmem, size = 0x4000, scoped, tag = 'input window, operand 6, single buffered']
    #allocation14 [shape = 'u8[16384]{0}', space=vmem, size = 0x4000, scoped, tag = 'input window, operand 7, single buffered']
    #allocation15 [shape = 's32[1]{0}', space=sflag, size = 0x4, scoped, tag = 'scoped memory for fwd.1']
    #allocation16 [shape = 'u8[16384]{0}', space=vmem, size = 0x4000, scoped, tag = 'input window, operand 12, single buffered']
    #allocation17 [shape = 'u8[16384]{0}', space=vmem, size = 0x4000, scoped, tag = 'input window, operand 13, single buffered']
    #allocation18 [shape = 's32[1]{0}', space=sflag, size = 0x4, scoped, tag = 'scoped memory for fwd.1']
    #allocation19 [shape = 'u8[16384]{0}', space=vmem, size = 0x4000, scoped, tag = 'input window, operand 14, single buffered']
    #allocation20 [shape = 'u8[16384]{0}', space=vmem, size = 0x4000, scoped, tag = 'input window, operand 15, single buffered']
    #allocation21 [shape = 's32[1]{0}', space=sflag, size = 0x4, scoped, tag = 'scoped memory for fwd.1']
    #allocation22 [shape = 'u8[16384]{0}', space=vmem, size = 0x4000, scoped, tag = 'input window, operand 16, single buffered']
    #allocation23 [shape = 'u8[16384]{0}', space=vmem, size = 0x4000, scoped, tag = 'input window, operand 17, single buffered']
    #allocation24 [shape = 's32[1]{0}', space=sflag, size = 0x4, scoped, tag = 'scoped memory for fwd.1']
    #allocation25 [shape = 'u8[4096]{0}', space=vmem, size = 0x1000, scoped, tag = 'output window, operand 1, single buffered']
    %31 = vsyncpa [#allocation3], 0
    %32 = vsyncpa [#allocation6], 0
    %33 = vsyncpa [#allocation9], 0
    %34 = vsyncpa [#allocation12], 0
    %35 = vsyncpa [#allocation15], 0
    %36 = vsyncpa [#allocation18], 0
    %37 = vsyncpa [#allocation21], 0
    %38 = vsyncpa [#allocation24], 0
    %39 = vsyncpa [#allocation4], 0
    // Predicated region
    $region2: #{fwd.1} parent=1 // pred_check
      _
    $region3: #{fwd.1} parent=1 // pred_check_branch
      %41 = sbr.rel (0) target = $region5
    $region4: #{fwd.1} parent=1 // pred_region
      %s43 = ssub.s32 512, 512
      %44 = vsyncadd [#allocation3], %s43
      %s45 = sshll.u32 [#allocation2], 4
      %s46 = int_to_ptr.vmem [resolvable:$true] %s45
      %51 = dma.hbm_to_vmem [thread:$0]  %s0, 512, %s46, [#allocation3], 128, 128, 8
    $region5: #{fwd.1} parent=1 // pred_fallthru
      _
    // Predicated region
    $region6: #{fwd.1} parent=1 // pred_check
      _
    $region7: #{fwd.1} parent=1 // pred_check_branch
      %53 = sbr.rel (0) target = $region9
    $region8: #{fwd.1} parent=1 // pred_region
      %s55 = ssub.s32 128, 128
      %56 = vsyncadd [#allocation6], %s55
      %s57 = sshll.u32 [#allocation5], 4
      %s58 = int_to_ptr.vmem [resolvable:$true] %s57
      %63 = dma.hbm_to_vmem [thread:$0]  %s1, 128, %s58, [#allocation6], 64, 64, 4
    $region9: #{fwd.1} parent=1 // pred_fallthru
      _
    // Predicated region
    $region10: #{fwd.1} parent=1 // pred_check
      _
    $region11: #{fwd.1} parent=1 // pred_check_branch
      %65 = sbr.rel (0) target = $region13
    $region12: #{fwd.1} parent=1 // pred_region
      %s67 = ssub.s32 512, 512
      %68 = vsyncadd [#allocation6], %s67
      %s69 = sshll.u32 [#allocation7], 4
      %s70 = int_to_ptr.vmem [resolvable:$true] %s69
      %75 = dma.hbm_to_vmem [thread:$0]  %s2, 512, %s70, [#allocation6], 128, 128, 8
    $region13: #{fwd.1} parent=1 // pred_fallthru
      _
    // Predicated region
    $region14: #{fwd.1} parent=1 // pred_check
      _
    $region15: #{fwd.1} parent=1 // pred_check_branch
      %77 = sbr.rel (0) target = $region17
    $region16: #{fwd.1} parent=1 // pred_region
      %s79 = ssub.s32 512, 512
      %80 = vsyncadd [#allocation9], %s79
      %s81 = sshll.u32 [#allocation8], 4
      %s82 = int_to_ptr.vmem [resolvable:$true] %s81
      %87 = dma.hbm_to_vmem [thread:$0]  %s3, 512, %s82, [#allocation9], 128, 128, 8
    $region17: #{fwd.1} parent=1 // pred_fallthru
      _
    // Predicated region
    $region18: #{fwd.1} parent=1 // pred_check
      _
    $region19: #{fwd.1} parent=1 // pred_check_branch
      %89 = sbr.rel (0) target = $region21
    $region20: #{fwd.1} parent=1 // pred_region
      %s91 = ssub.s32 512, 512
      %92 = vsyncadd [#allocation9], %s91
      %s93 = sshll.u32 [#allocation10], 4
      %s94 = int_to_ptr.vmem [resolvable:$true] %s93
      %99 = dma.hbm_to_vmem [thread:$0]  %s4, 512, %s94, [#allocation9], 128, 128, 8
    $region21: #{fwd.1} parent=1 // pred_fallthru
      _
    // Predicated region
    $region22: #{fwd.1} parent=1 // pred_check
      _
    $region23: #{fwd.1} parent=1 // pred_check_branch
      %101 = sbr.rel (0) target = $region25
    $region24: #{fwd.1} parent=1 // pred_region
      %s103 = ssub.s32 512, 512
      %104 = vsyncadd [#allocation12], %s103
      %s105 = sshll.u32 [#allocation11], 4
      %s106 = int_to_ptr.vmem [resolvable:$true] %s105
      %111 = dma.hbm_to_vmem [thread:$0]  %s5, 512, %s106, [#allocation12], 128, 128, 8
    $region25: #{fwd.1} parent=1 // pred_fallthru
      _
    // Predicated region
    $region26: #{fwd.1} parent=1 // pred_check
      _
    $region27: #{fwd.1} parent=1 // pred_check_branch
      %113 = sbr.rel (0) target = $region29
    $region28: #{fwd.1} parent=1 // pred_region
      %s115 = ssub.s32 512, 512
      %116 = vsyncadd [#allocation12], %s115
      %s117 = sshll.u32 [#allocation13], 4
      %s118 = int_to_ptr.vmem [resolvable:$true] %s117
      %123 = dma.hbm_to_vmem [thread:$0]  %s6, 512, %s118, [#allocation12], 128, 128, 8
    $region29: #{fwd.1} parent=1 // pred_fallthru
      _
    // Predicated region
    $region30: #{fwd.1} parent=1 // pred_check
      _
    $region31: #{fwd.1} parent=1 // pred_check_branch
      %125 = sbr.rel (0) target = $region33
    $region32: #{fwd.1} parent=1 // pred_region
      %s127 = ssub.s32 512, 512
      %128 = vsyncadd [#allocation15], %s127
      %s129 = sshll.u32 [#allocation14], 4
      %s130 = int_to_ptr.vmem [resolvable:$true] %s129
      %135 = dma.hbm_to_vmem [thread:$0]  %s7, 512, %s130, [#allocation15], 128, 128, 8
    $region33: #{fwd.1} parent=1 // pred_fallthru
      _
    // Predicated region
    $region34: #{fwd.1} parent=1 // pred_check
      _
    $region35: #{fwd.1} parent=1 // pred_check_branch
      %137 = sbr.rel (0) target = $region37
    $region36: #{fwd.1} parent=1 // pred_region
      _
    $region37: #{fwd.1} parent=1 // pred_fallthru
      _
    // Predicated region
    $region38: #{fwd.1} parent=1 // pred_check
      _
    $region39: #{fwd.1} parent=1 // pred_check_branch
      %139 = sbr.rel (0) target = $region41
    $region40: #{fwd.1} parent=1 // pred_region
      _
    $region41: #{fwd.1} parent=1 // pred_fallthru
      _
    // Predicated region
    $region42: #{fwd.1} parent=1 // pred_check
      _
    $region43: #{fwd.1} parent=1 // pred_check_branch
      %141 = sbr.rel (0) target = $region45
    $region44: #{fwd.1} parent=1 // pred_region
      _
    $region45: #{fwd.1} parent=1 // pred_fallthru
      _
    // Predicated region
    $region46: #{fwd.1} parent=1 // pred_check
      _
    $region47: #{fwd.1} parent=1 // pred_check_branch
      %143 = sbr.rel (0) target = $region49
    $region48: #{fwd.1} parent=1 // pred_region
      _
    $region49: #{fwd.1} parent=1 // pred_fallthru
      _
    // Predicated region
    $region50: #{fwd.1} parent=1 // pred_check
      _
    $region51: #{fwd.1} parent=1 // pred_check_branch
      %145 = sbr.rel (0) target = $region53
    $region52: #{fwd.1} parent=1 // pred_region
      %s147 = ssub.s32 512, 512
      %148 = vsyncadd [#allocation15], %s147
      %s149 = sshll.u32 [#allocation16], 4
      %s150 = int_to_ptr.vmem [resolvable:$true] %s149
      %155 = dma.hbm_to_vmem [thread:$0]  %s12, 512, %s150, [#allocation15], 128, 128, 8
    $region53: #{fwd.1} parent=1 // pred_fallthru
      _
    // Predicated region
    $region54: #{fwd.1} parent=1 // pred_check
      _
    $region55: #{fwd.1} parent=1 // pred_check_branch
      %157 = sbr.rel (0) target = $region57
    $region56: #{fwd.1} parent=1 // pred_region
      %s159 = ssub.s32 512, 512
      %160 = vsyncadd [#allocation18], %s159
      %s161 = sshll.u32 [#allocation17], 4
      %s162 = int_to_ptr.vmem [resolvable:$true] %s161
      %167 = dma.hbm_to_vmem [thread:$0]  %s13, 512, %s162, [#allocation18], 128, 128, 8
    $region57: #{fwd.1} parent=1 // pred_fallthru
      _
    // Predicated region
    $region58: #{fwd.1} parent=1 // pred_check
      _
    $region59: #{fwd.1} parent=1 // pred_check_branch
      %169 = sbr.rel (0) target = $region61
    $region60: #{fwd.1} parent=1 // pred_region
      %s171 = ssub.s32 512, 512
      %172 = vsyncadd [#allocation18], %s171
      %s173 = sshll.u32 [#allocation19], 4
      %s174 = int_to_ptr.vmem [resolvable:$true] %s173
      %179 = dma.hbm_to_vmem [thread:$0]  %s14, 512, %s174, [#allocation18], 128, 128, 8
    $region61: #{fwd.1} parent=1 // pred_fallthru
      _
    // Predicated region
    $region62: #{fwd.1} parent=1 // pred_check
      _
    $region63: #{fwd.1} parent=1 // pred_check_branch
      %181 = sbr.rel (0) target = $region65
    $region64: #{fwd.1} parent=1 // pred_region
      %s183 = ssub.s32 512, 512
      %184 = vsyncadd [#allocation21], %s183
      %s185 = sshll.u32 [#allocation20], 4
      %s186 = int_to_ptr.vmem [resolvable:$true] %s185
      %191 = dma.hbm_to_vmem [thread:$0]  %s15, 512, %s186, [#allocation21], 128, 128, 8
    $region65: #{fwd.1} parent=1 // pred_fallthru
      _
    // Predicated region
    $region66: #{fwd.1} parent=1 // pred_check
      _
    $region67: #{fwd.1} parent=1 // pred_check_branch
      %193 = sbr.rel (0) target = $region69
    $region68: #{fwd.1} parent=1 // pred_region
      %s195 = ssub.s32 512, 512
      %196 = vsyncadd [#allocation21], %s195
      %s197 = sshll.u32 [#allocation22], 4
      %s198 = int_to_ptr.vmem [resolvable:$true] %s197
      %203 = dma.hbm_to_vmem [thread:$0]  %s16, 512, %s198, [#allocation21], 128, 128, 8
    $region69: #{fwd.1} parent=1 // pred_fallthru
      _
    // Predicated region
    $region70: #{fwd.1} parent=1 // pred_check
      _
    $region71: #{fwd.1} parent=1 // pred_check_branch
      %205 = sbr.rel (0) target = $region73
    $region72: #{fwd.1} parent=1 // pred_region
      %s207 = ssub.s32 512, 512
      %208 = vsyncadd [#allocation24], %s207
      %s209 = sshll.u32 [#allocation23], 4
      %s210 = int_to_ptr.vmem [resolvable:$true] %s209
      %215 = dma.hbm_to_vmem [thread:$0]  %s17, 512, %s210, [#allocation24], 128, 128, 8
    $region73: #{fwd.1} parent=1 // pred_fallthru
      _
    // Predicated region
    $region74: #{fwd.1} parent=1 // pred_check
      _
    $region75: #{fwd.1} parent=1 // pred_check_branch
      %217 = sbr.rel (0) target = $region77
    $region76: #{fwd.1} parent=1 // pred_region
      _
    $region77: #{fwd.1} parent=1 // pred_fallthru
      _
    // Predicated region
    $region78: #{fwd.1} parent=1 // pred_check
      _
    $region79: #{fwd.1} parent=1 // pred_check_branch
      %219 = sbr.rel (0) target = $region81
    $region80: #{fwd.1} parent=1 // pred_region
      _
    $region81: #{fwd.1} parent=1 // pred_fallthru
      _
    // Predicated region
    $region82: #{fwd.1} parent=1 // pred_check
      _
    $region83: #{fwd.1} parent=1 // pred_check_branch
      %221 = sbr.rel (0) target = $region85
    $region84: #{fwd.1} parent=1 // pred_region
      _
    $region85: #{fwd.1} parent=1 // pred_fallthru
      _
    // Predicated region
    $region86: #{fwd.1} parent=1 // pred_check
      _
    $region87: #{fwd.1} parent=1 // pred_check_branch
      %223 = sbr.rel (0) target = $region89
    $region88: #{fwd.1} parent=1 // pred_region
      _
    $region89: #{fwd.1} parent=1 // pred_fallthru
      _
    // Predicated region
    $region90: #{fwd.1} parent=1 // pred_check
      _
    $region91: #{fwd.1} parent=1 // pred_check_branch
      %225 = sbr.rel (0) target = $region93
    $region92: #{fwd.1} parent=1 // pred_region
      _
    $region93: #{fwd.1} parent=1 // pred_fallthru
      _
    // Predicated region
    $region94: #{fwd.1} parent=1 // pred_check
      _
    $region95: #{fwd.1} parent=1 // pred_check_branch
      %227 = sbr.rel (0) target = $region97
    $region96: #{fwd.1} parent=1 // pred_region
      _
    $region97: #{fwd.1} parent=1 // pred_fallthru
      _
    // Predicated region
    $region98: #{fwd.1} parent=1 // pred_check
      _
    $region99: #{fwd.1} parent=1 // pred_check_branch
      %229 = sbr.rel (0) target = $region101
    $region100: #{fwd.1} parent=1 // pred_region
      %230 = dma.done [#allocation3], 512
    $region101: #{fwd.1} parent=1 // pred_fallthru
      _
    // Predicated region
    $region102: #{fwd.1} parent=1 // pred_check
      _
    $region103: #{fwd.1} parent=1 // pred_check_branch
      %232 = sbr.rel (0) target = $region105
    $region104: #{fwd.1} parent=1 // pred_region
      %233 = dma.done [#allocation6], 128
    $region105: #{fwd.1} parent=1 // pred_fallthru
      _
    // Predicated region
    $region106: #{fwd.1} parent=1 // pred_check
      _
    $region107: #{fwd.1} parent=1 // pred_check_branch
      %235 = sbr.rel (0) target = $region109
    $region108: #{fwd.1} parent=1 // pred_region
      %236 = dma.done [#allocation6], 512
    $region109: #{fwd.1} parent=1 // pred_fallthru
      _
    // Predicated region
    $region110: #{fwd.1} parent=1 // pred_check
      _
    $region111: #{fwd.1} parent=1 // pred_check_branch
      %238 = sbr.rel (0) target = $region113
    $region112: #{fwd.1} parent=1 // pred_region
      %239 = dma.done [#allocation9], 512
    $region113: #{fwd.1} parent=1 // pred_fallthru
      _
    // Predicated region
    $region114: #{fwd.1} parent=1 // pred_check
      _
    $region115: #{fwd.1} parent=1 // pred_check_branch
      %241 = sbr.rel (0) target = $region117
    $region116: #{fwd.1} parent=1 // pred_region
      %242 = dma.done [#allocation9], 512
    $region117: #{fwd.1} parent=1 // pred_fallthru
      _
    // Predicated region
    $region118: #{fwd.1} parent=1 // pred_check
      _
    $region119: #{fwd.1} parent=1 // pred_check_branch
      %244 = sbr.rel (0) target = $region121
    $region120: #{fwd.1} parent=1 // pred_region
      %245 = dma.done [#allocation12], 512
    $region121: #{fwd.1} parent=1 // pred_fallthru
      _
    // Predicated region
    $region122: #{fwd.1} parent=1 // pred_check
      _
    $region123: #{fwd.1} parent=1 // pred_check_branch
      %247 = sbr.rel (0) target = $region125
    $region124: #{fwd.1} parent=1 // pred_region
      %248 = dma.done [#allocation12], 512
    $region125: #{fwd.1} parent=1 // pred_fallthru
      _
    // Predicated region
    $region126: #{fwd.1} parent=1 // pred_check
      _
    $region127: #{fwd.1} parent=1 // pred_check_branch
      %250 = sbr.rel (0) target = $region129
    $region128: #{fwd.1} parent=1 // pred_region
      %251 = dma.done [#allocation15], 512
    $region129: #{fwd.1} parent=1 // pred_fallthru
      _
    // Predicated region
    $region130: #{fwd.1} parent=1 // pred_check
      _
    $region131: #{fwd.1} parent=1 // pred_check_branch
      %253 = sbr.rel (0) target = $region133
    $region132: #{fwd.1} parent=1 // pred_region
      %254 = dma.done [#allocation15], 512
    $region133: #{fwd.1} parent=1 // pred_fallthru
      _
    // Predicated region
    $region134: #{fwd.1} parent=1 // pred_check
      _
    $region135: #{fwd.1} parent=1 // pred_check_branch
      %256 = sbr.rel (0) target = $region137
    $region136: #{fwd.1} parent=1 // pred_region
      %257 = dma.done [#allocation18], 512
    $region137: #{fwd.1} parent=1 // pred_fallthru
      _
    // Predicated region
    $region138: #{fwd.1} parent=1 // pred_check
      _
    $region139: #{fwd.1} parent=1 // pred_check_branch
      %259 = sbr.rel (0) target = $region141
    $region140: #{fwd.1} parent=1 // pred_region
      %260 = dma.done [#allocation18], 512
    $region141: #{fwd.1} parent=1 // pred_fallthru
      _
    // Predicated region
    $region142: #{fwd.1} parent=1 // pred_check
      _
    $region143: #{fwd.1} parent=1 // pred_check_branch
      %262 = sbr.rel (0) target = $region145
    $region144: #{fwd.1} parent=1 // pred_region
      %263 = dma.done [#allocation21], 512
    $region145: #{fwd.1} parent=1 // pred_fallthru
      _
    // Predicated region
    $region146: #{fwd.1} parent=1 // pred_check
      _
    $region147: #{fwd.1} parent=1 // pred_check_branch
      %265 = sbr.rel (0) target = $region149
    $region148: #{fwd.1} parent=1 // pred_region
      %266 = dma.done [#allocation21], 512
    $region149: #{fwd.1} parent=1 // pred_fallthru
      _
    // Predicated region
    $region150: #{fwd.1} parent=1 // pred_check
      _
    $region151: #{fwd.1} parent=1 // pred_check_branch
      %268 = sbr.rel (0) target = $region153
    $region152: #{fwd.1} parent=1 // pred_region
      %269 = dma.done [#allocation24], 512
    $region153: #{fwd.1} parent=1 // pred_fallthru
      _
    %v270 = vld [vmem:[#allocation2] sm:$0xff]
    %v271 = vld [vmem:[#allocation2 + $0x8] sm:$0xff]
    %v272 = vld [vmem:[#allocation2 + $0x10] sm:$0xff]
    %v273 = vld [vmem:[#allocation2 + $0x18] sm:$0xff]
    %v274 = vld [vmem:[#allocation7] sm:$0xff]
    %v275 = vld [vmem:[#allocation7 + $0x8] sm:$0xff]
    %v276 = vld [vmem:[#allocation7 + $0x10] sm:$0xff]
    %v277 = vld [vmem:[#allocation7 + $0x18] sm:$0xf]
    %v278 = vld [vmem:[%s8] sm:$0x1]
    %v280 = vlaneseq
    %v281 = vshrl.u32 %v280, 7
    %v282 = vsub.s32 0, %v281
    %v283 = vrot.slane %v278, %v282
    %vm285 = vcmask 228352
    %v287 = vsel %vm285, %v270, 0
    %v290 = vsel %vm285, %v271, 0
    %v293 = vsel %vm285, %v272, 0
    %v296 = vsel %vm285, %v273, 0
    %vm298 = vcmask 1043456
    %v300 = vsel %vm298, %v277, 0
    %302 = vmatprep.subr.mxu0 0.0
    %303 = vmatpush1.msra.mxu0 0.0
    %304 = vmatprep.subr.mxu0 0.0
    %305 = vmatpush1.msra.mxu0 0.0
    %306 = vmatprep.subr.mxu0 0.0
    %307 = vmatpush1.msra.mxu0 0.0
    %308 = vmatprep.subr.mxu0 0.0
    %309 = vmatpush1.msra.mxu0 0.0
    %310 = vmatprep.subr.mxu0 0.0
    %311 = vmatpush1.msra.mxu0 0.0
    %312 = vmatprep.subr.mxu0 0.0
    %313 = vmatpush1.msra.mxu0 0.0
    %314 = vmatprep.subr.mxu0 0.0
    %315 = vmatpush1.msra.mxu0 0.0
    %316 = vmatprep.subr.mxu0 0.0
    %317 = vmatpush1.msra.mxu0 0.0
    %318 = vmatprep.subr.mxu0 0.0
    %319 = vmatpush1.msra.mxu0 0.0
    %320 = vmatprep.subr.mxu0 0.0
    %321 = vmatpush1.msra.mxu0 0.0
    %322 = vmatprep.subr.mxu0 0.0
    %323 = vmatpush1.msra.mxu0 0.0
    %324 = vmatprep.subr.mxu0 0.0
    %325 = vmatpush1.msra.mxu0 0.0
    %326 = vmatprep.subr.mxu0 0.0
    %327 = vmatpush1.msra.mxu0 %v300
    %328 = vmatprep.subr.mxu0 0.0
    %329 = vmatpush1.msra.mxu0 %v276
    %330 = vmatprep.subr.mxu0 0.0
    %331 = vmatpush1.msra.mxu0 %v275
    %332 = vmatprep.subr.mxu0 0.0
    %333 = vmatpush1.msra.mxu0 %v274
    %334 = vmatprep.subr.mxu0 0.0
    %335 = vmatpush2.msra.mxu0 0.0
    %336 = vmatprep.subr.mxu0 0.0
    %337 = vmatpush2.msra.mxu0 0.0
    %338 = vmatprep.subr.mxu0 0.0
    %339 = vmatpush2.msra.mxu0 0.0
    %340 = vmatprep.subr.mxu0 0.0
    %341 = vmatpush2.msra.mxu0 0.0
    %342 = vmatprep.subr.mxu0 0.0
    %343 = vmatpush2.msra.mxu0 0.0
    %344 = vmatprep.subr.mxu0 0.0
    %345 = vmatpush2.msra.mxu0 0.0
    %346 = vmatprep.subr.mxu0 0.0
    %347 = vmatpush2.msra.mxu0 0.0
    %348 = vmatprep.subr.mxu0 0.0
    %349 = vmatpush2.msra.mxu0 0.0
    %350 = vmatprep.subr.mxu0 0.0
    %351 = vmatpush2.msra.mxu0 0.0
    %352 = vmatprep.subr.mxu0 0.0
    %353 = vmatpush2.msra.mxu0 0.0
    %354 = vmatprep.subr.mxu0 0.0
    %355 = vmatpush2.msra.mxu0 0.0
    %356 = vmatprep.subr.mxu0 0.0
    %357 = vmatpush2.msra.mxu0 0.0
    %358 = vmatprep.subr.mxu0 0.0
    %359 = vmatpush2.msra.mxu0 0.0
    %360 = vmatprep.subr.mxu0 0.0
    %361 = vmatpush2.msra.mxu0 0.0
    %362 = vmatprep.subr.mxu0 0.0
    %363 = vmatpush2.msra.mxu0 0.0
    %364 = vmatprep.subr.mxu0 0.0
    %365 = vmatpush2.msra.mxu0 0.0
    %366 = vmatprep.mubr.f32.mxu0 0.0
    %367 = vmatmul.mubr.f32.gmra.mxu0 %v287
    %v368 = vpop.f32.mrf.mxu0
    %v369 = vadd.f32 %v283, %v368
    %v370 = vpop.f32.mrf.mxu0
    %371 = vmatprep.mubr.f32.mxu0 0.0
    %372 = vmatmul.mubr.f32.gmra.mxu0 %v290
    %v373 = vpop.f32.mrf.mxu0
    %v374 = vadd.f32 %v283, %v373
    %v375 = vpop.f32.mrf.mxu0
    %376 = vmatprep.mubr.f32.mxu0 0.0
    %377 = vmatmul.mubr.f32.gmra.mxu0 %v293
    %v378 = vpop.f32.mrf.mxu0
    %v379 = vadd.f32 %v283, %v378
    %v380 = vpop.f32.mrf.mxu0
    %381 = vmatprep.mubr.f32.mxu0 0.0
    %382 = vmatmul.mubr.f32.gmra.mxu0 %v296
    %v383 = vpop.f32.mrf.mxu0
    %v384 = vadd.f32 %v283, %v383
    %v385 = vpop.f32.mrf.mxu0
    %386 = vdwg.mxu0
    %v387 = vld [vmem:[#allocation8] sm:$0xff]
    %v388 = vld [vmem:[#allocation8 + $0x8] sm:$0xff]
    %v389 = vld [vmem:[#allocation8 + $0x10] sm:$0xff]
    %v390 = vld [vmem:[#allocation8 + $0x18] sm:$0xf]
    %v391 = vld [vmem:[%s9] sm:$0x1]
    %v393 = vlaneseq
    %v394 = vshrl.u32 %v393, 7
    %v395 = vsub.s32 0, %v394
    %v396 = vrot.slane %v391, %v395
    %v399 = vsel %vm298, %v390, 0
    %401 = vmatprep.subr.mxu0 0.0
    %402 = vmatpush1.msra.mxu0 0.0
    %403 = vmatprep.subr.mxu0 0.0
    %404 = vmatpush1.msra.mxu0 0.0
    %405 = vmatprep.subr.mxu0 0.0
    %406 = vmatpush1.msra.mxu0 0.0
    %407 = vmatprep.subr.mxu0 0.0
    %408 = vmatpush1.msra.mxu0 0.0
    %409 = vmatprep.subr.mxu0 0.0
    %410 = vmatpush1.msra.mxu0 0.0
    %411 = vmatprep.subr.mxu0 0.0
    %412 = vmatpush1.msra.mxu0 0.0
    %413 = vmatprep.subr.mxu0 0.0
    %414 = vmatpush1.msra.mxu0 0.0
    %415 = vmatprep.subr.mxu0 0.0
    %416 = vmatpush1.msra.mxu0 0.0
    %417 = vmatprep.subr.mxu0 0.0
    %418 = vmatpush1.msra.mxu0 0.0
    %419 = vmatprep.subr.mxu0 0.0
    %420 = vmatpush1.msra.mxu0 0.0
    %421 = vmatprep.subr.mxu0 0.0
    %422 = vmatpush1.msra.mxu0 0.0
    %423 = vmatprep.subr.mxu0 0.0
    %424 = vmatpush1.msra.mxu0 0.0
    %425 = vmatprep.subr.mxu0 0.0
    %426 = vmatpush1.msra.mxu0 %v399
    %427 = vmatprep.subr.mxu0 0.0
    %428 = vmatpush1.msra.mxu0 %v389
    %429 = vmatprep.subr.mxu0 0.0
    %430 = vmatpush1.msra.mxu0 %v388
    %431 = vmatprep.subr.mxu0 0.0
    %432 = vmatpush1.msra.mxu0 %v387
    %433 = vmatprep.subr.mxu0 0.0
    %434 = vmatpush2.msra.mxu0 0.0
    %435 = vmatprep.subr.mxu0 0.0
    %436 = vmatpush2.msra.mxu0 0.0
    %437 = vmatprep.subr.mxu0 0.0
    %438 = vmatpush2.msra.mxu0 0.0
    %439 = vmatprep.subr.mxu0 0.0
    %440 = vmatpush2.msra.mxu0 0.0
    %441 = vmatprep.subr.mxu0 0.0
    %442 = vmatpush2.msra.mxu0 0.0
    %443 = vmatprep.subr.mxu0 0.0
    %444 = vmatpush2.msra.mxu0 0.0
    %445 = vmatprep.subr.mxu0 0.0
    %446 = vmatpush2.msra.mxu0 0.0
    %447 = vmatprep.subr.mxu0 0.0
    %448 = vmatpush2.msra.mxu0 0.0
    %449 = vmatprep.subr.mxu0 0.0
    %450 = vmatpush2.msra.mxu0 0.0
    %451 = vmatprep.subr.mxu0 0.0
    %452 = vmatpush2.msra.mxu0 0.0
    %453 = vmatprep.subr.mxu0 0.0
    %454 = vmatpush2.msra.mxu0 0.0
    %455 = vmatprep.subr.mxu0 0.0
    %456 = vmatpush2.msra.mxu0 0.0
    %457 = vmatprep.subr.mxu0 0.0
    %458 = vmatpush2.msra.mxu0 0.0
    %459 = vmatprep.subr.mxu0 0.0
    %460 = vmatpush2.msra.mxu0 0.0
    %461 = vmatprep.subr.mxu0 0.0
    %462 = vmatpush2.msra.mxu0 0.0
    %463 = vmatprep.subr.mxu0 0.0
    %464 = vmatpush2.msra.mxu0 0.0
    %465 = vmatprep.mubr.f32.mxu0 0.0
    %466 = vmatmul.mubr.f32.gmra.mxu0 %v287
    %v467 = vpop.f32.mrf.mxu0
    %v468 = vadd.f32 %v396, %v467
    %v469 = vpop.f32.mrf.mxu0
    %470 = vmatprep.mubr.f32.mxu0 0.0
    %471 = vmatmul.mubr.f32.gmra.mxu0 %v290
    %v472 = vpop.f32.mrf.mxu0
    %v473 = vadd.f32 %v396, %v472
    %v474 = vpop.f32.mrf.mxu0
    %475 = vmatprep.mubr.f32.mxu0 0.0
    %476 = vmatmul.mubr.f32.gmra.mxu0 %v293
    %v477 = vpop.f32.mrf.mxu0
    %v478 = vadd.f32 %v396, %v477
    %v479 = vpop.f32.mrf.mxu0
    %480 = vmatprep.mubr.f32.mxu0 0.0
    %481 = vmatmul.mubr.f32.gmra.mxu0 %v296
    %v482 = vpop.f32.mrf.mxu0
    %v483 = vadd.f32 %v396, %v482
    %v484 = vpop.f32.mrf.mxu0
    %485 = vdwg.mxu0
    %v486 = vld [vmem:[#allocation10] sm:$0xff]
    %v487 = vld [vmem:[#allocation10 + $0x8] sm:$0xff]
    %v488 = vld [vmem:[#allocation10 + $0x10] sm:$0xff]
    %v489 = vld [vmem:[#allocation10 + $0x18] sm:$0xf]
    %v490 = vld [vmem:[%s10] sm:$0x1]
    %v492 = vlaneseq
    %v493 = vshrl.u32 %v492, 7
    %v494 = vsub.s32 0, %v493
    %v495 = vrot.slane %v490, %v494
    %v498 = vsel %vm298, %v489, 0
    %500 = vmatprep.subr.mxu0 0.0
    %501 = vmatpush1.msra.mxu0 0.0
    %502 = vmatprep.subr.mxu0 0.0
    %503 = vmatpush1.msra.mxu0 0.0
    %504 = vmatprep.subr.mxu0 0.0
    %505 = vmatpush1.msra.mxu0 0.0
    %506 = vmatprep.subr.mxu0 0.0
    %507 = vmatpush1.msra.mxu0 0.0
    %508 = vmatprep.subr.mxu0 0.0
    %509 = vmatpush1.msra.mxu0 0.0
    %510 = vmatprep.subr.mxu0 0.0
    %511 = vmatpush1.msra.mxu0 0.0
    %512 = vmatprep.subr.mxu0 0.0
    %513 = vmatpush1.msra.mxu0 0.0
    %514 = vmatprep.subr.mxu0 0.0
    %515 = vmatpush1.msra.mxu0 0.0
    %516 = vmatprep.subr.mxu0 0.0
    %517 = vmatpush1.msra.mxu0 0.0
    %518 = vmatprep.subr.mxu0 0.0
    %519 = vmatpush1.msra.mxu0 0.0
    %520 = vmatprep.subr.mxu0 0.0
    %521 = vmatpush1.msra.mxu0 0.0
    %522 = vmatprep.subr.mxu0 0.0
    %523 = vmatpush1.msra.mxu0 0.0
    %524 = vmatprep.subr.mxu0 0.0
    %525 = vmatpush1.msra.mxu0 %v498
    %526 = vmatprep.subr.mxu0 0.0
    %527 = vmatpush1.msra.mxu0 %v488
    %528 = vmatprep.subr.mxu0 0.0
    %529 = vmatpush1.msra.mxu0 %v487
    %530 = vmatprep.subr.mxu0 0.0
    %531 = vmatpush1.msra.mxu0 %v486
    %532 = vmatprep.subr.mxu0 0.0
    %533 = vmatpush2.msra.mxu0 0.0
    %534 = vmatprep.subr.mxu0 0.0
    %535 = vmatpush2.msra.mxu0 0.0
    %536 = vmatprep.subr.mxu0 0.0
    %537 = vmatpush2.msra.mxu0 0.0
    %538 = vmatprep.subr.mxu0 0.0
    %539 = vmatpush2.msra.mxu0 0.0
    %540 = vmatprep.subr.mxu0 0.0
    %541 = vmatpush2.msra.mxu0 0.0
    %542 = vmatprep.subr.mxu0 0.0
    %543 = vmatpush2.msra.mxu0 0.0
    %544 = vmatprep.subr.mxu0 0.0
    %545 = vmatpush2.msra.mxu0 0.0
    %546 = vmatprep.subr.mxu0 0.0
    %547 = vmatpush2.msra.mxu0 0.0
    %548 = vmatprep.subr.mxu0 0.0
    %549 = vmatpush2.msra.mxu0 0.0
    %550 = vmatprep.subr.mxu0 0.0
    %551 = vmatpush2.msra.mxu0 0.0
    %552 = vmatprep.subr.mxu0 0.0
    %553 = vmatpush2.msra.mxu0 0.0
    %554 = vmatprep.subr.mxu0 0.0
    %555 = vmatpush2.msra.mxu0 0.0
    %556 = vmatprep.subr.mxu0 0.0
    %557 = vmatpush2.msra.mxu0 0.0
    %558 = vmatprep.subr.mxu0 0.0
    %559 = vmatpush2.msra.mxu0 0.0
    %560 = vmatprep.subr.mxu0 0.0
    %561 = vmatpush2.msra.mxu0 0.0
    %562 = vmatprep.subr.mxu0 0.0
    %563 = vmatpush2.msra.mxu0 0.0
    %564 = vmatprep.mubr.f32.mxu0 0.0
    %565 = vmatmul.mubr.f32.gmra.mxu0 %v287
    %v566 = vpop.f32.mrf.mxu0
    %v567 = vadd.f32 %v495, %v566
    %v568 = vpop.f32.mrf.mxu0
    %569 = vmatprep.mubr.f32.mxu0 0.0
    %570 = vmatmul.mubr.f32.gmra.mxu0 %v290
    %v571 = vpop.f32.mrf.mxu0
    %v572 = vadd.f32 %v495, %v571
    %v573 = vpop.f32.mrf.mxu0
    %574 = vmatprep.mubr.f32.mxu0 0.0
    %575 = vmatmul.mubr.f32.gmra.mxu0 %v293
    %v576 = vpop.f32.mrf.mxu0
    %v577 = vadd.f32 %v495, %v576
    %v578 = vpop.f32.mrf.mxu0
    %579 = vmatprep.mubr.f32.mxu0 0.0
    %580 = vmatmul.mubr.f32.gmra.mxu0 %v296
    %v581 = vpop.f32.mrf.mxu0
    %v582 = vadd.f32 %v495, %v581
    %v583 = vpop.f32.mrf.mxu0
    %584 = vdwg.mxu0
    %v585 = vld [vmem:[#allocation11] sm:$0xff]
    %v586 = vld [vmem:[#allocation11 + $0x8] sm:$0xff]
    %v587 = vld [vmem:[#allocation11 + $0x10] sm:$0xff]
    %v588 = vld [vmem:[#allocation11 + $0x18] sm:$0xff]
    %v589 = vld [vmem:[#allocation13] sm:$0xff]
    %v590 = vld [vmem:[#allocation13 + $0x8] sm:$0xff]
    %v591 = vld [vmem:[#allocation13 + $0x10] sm:$0xff]
    %v592 = vld [vmem:[#allocation13 + $0x18] sm:$0xff]
    %v593 = vld [vmem:[#allocation14] sm:$0xff]
    %v594 = vld [vmem:[#allocation14 + $0x8] sm:$0xff]
    %v595 = vld [vmem:[#allocation14 + $0x10] sm:$0xff]
    %v596 = vld [vmem:[#allocation14 + $0x18] sm:$0xff]
    %v597 = vld [vmem:[%s11] sm:$0x1]
    %v598 = vld [vmem:[#allocation5] sm:$0xf]
    %vm599 = vcmask 261120
    %v601 = vsel %vm599, %v598, 0
    %603 = vmatprep.subr.mxu0 0.0
    %604 = vmatpush1.msra.mxu0 0.0
    %605 = vmatprep.subr.mxu0 0.0
    %606 = vmatpush1.msra.mxu0 0.0
    %607 = vmatprep.subr.mxu0 0.0
    %608 = vmatpush1.msra.mxu0 0.0
    %609 = vmatprep.subr.mxu0 0.0
    %610 = vmatpush1.msra.mxu0 0.0
    %611 = vmatprep.subr.mxu0 0.0
    %612 = vmatpush1.msra.mxu0 0.0
    %613 = vmatprep.subr.mxu0 0.0
    %614 = vmatpush1.msra.mxu0 0.0
    %615 = vmatprep.subr.mxu0 0.0
    %616 = vmatpush1.msra.mxu0 0.0
    %617 = vmatprep.subr.mxu0 0.0
    %618 = vmatpush1.msra.mxu0 0.0
    %619 = vmatprep.subr.mxu0 0.0
    %620 = vmatpush1.msra.mxu0 0.0
    %621 = vmatprep.subr.mxu0 0.0
    %622 = vmatpush1.msra.mxu0 0.0
    %623 = vmatprep.subr.mxu0 0.0
    %624 = vmatpush1.msra.mxu0 0.0
    %625 = vmatprep.subr.mxu0 0.0
    %626 = vmatpush1.msra.mxu0 0.0
    %627 = vmatprep.subr.mxu0 0.0
    %628 = vmatpush1.msra.mxu0 %v588
    %629 = vmatprep.subr.mxu0 0.0
    %630 = vmatpush1.msra.mxu0 %v587
    %631 = vmatprep.subr.mxu0 0.0
    %632 = vmatpush1.msra.mxu0 %v586
    %633 = vmatprep.subr.mxu0 0.0
    %634 = vmatpush1.msra.mxu0 %v585
    %635 = vmatprep.subr.mxu0 0.0
    %636 = vmatpush2.msra.mxu0 0.0
    %637 = vmatprep.subr.mxu0 0.0
    %638 = vmatpush2.msra.mxu0 0.0
    %639 = vmatprep.subr.mxu0 0.0
    %640 = vmatpush2.msra.mxu0 0.0
    %641 = vmatprep.subr.mxu0 0.0
    %642 = vmatpush2.msra.mxu0 0.0
    %643 = vmatprep.subr.mxu0 0.0
    %644 = vmatpush2.msra.mxu0 0.0
    %645 = vmatprep.subr.mxu0 0.0
    %646 = vmatpush2.msra.mxu0 0.0
    %647 = vmatprep.subr.mxu0 0.0
    %648 = vmatpush2.msra.mxu0 0.0
    %649 = vmatprep.subr.mxu0 0.0
    %650 = vmatpush2.msra.mxu0 0.0
    %651 = vmatprep.subr.mxu0 0.0
    %652 = vmatpush2.msra.mxu0 0.0
    %653 = vmatprep.subr.mxu0 0.0
    %654 = vmatpush2.msra.mxu0 0.0
    %655 = vmatprep.subr.mxu0 0.0
    %656 = vmatpush2.msra.mxu0 0.0
    %657 = vmatprep.subr.mxu0 0.0
    %658 = vmatpush2.msra.mxu0 0.0
    %659 = vmatprep.subr.mxu0 0.0
    %660 = vmatpush2.msra.mxu0 0.0
    %661 = vmatprep.subr.mxu0 0.0
    %662 = vmatpush2.msra.mxu0 0.0
    %663 = vmatprep.subr.mxu0 0.0
    %664 = vmatpush2.msra.mxu0 0.0
    %665 = vmatprep.subr.mxu0 0.0
    %666 = vmatpush2.msra.mxu0 0.0
    %667 = vmatprep.mubr.f32.mxu0 0.0
    %668 = vmatmul.mubr.f32.gmra.mxu0 %v601
    %v669 = vpop.f32.mrf.mxu0
    %v670 = vadd.f32 0.0, %v669
    %v671 = vpop.f32.mrf.mxu0
    %672 = vdwg.mxu0
    %673 = vmatprep.subr.mxu0 0.0
    %674 = vmatpush1.msra.mxu0 0.0
    %675 = vmatprep.subr.mxu0 0.0
    %676 = vmatpush1.msra.mxu0 0.0
    %677 = vmatprep.subr.mxu0 0.0
    %678 = vmatpush1.msra.mxu0 0.0
    %679 = vmatprep.subr.mxu0 0.0
    %680 = vmatpush1.msra.mxu0 0.0
    %681 = vmatprep.subr.mxu0 0.0
    %682 = vmatpush1.msra.mxu0 0.0
    %683 = vmatprep.subr.mxu0 0.0
    %684 = vmatpush1.msra.mxu0 0.0
    %685 = vmatprep.subr.mxu0 0.0
    %686 = vmatpush1.msra.mxu0 0.0
    %687 = vmatprep.subr.mxu0 0.0
    %688 = vmatpush1.msra.mxu0 0.0
    %689 = vmatprep.subr.mxu0 0.0
    %690 = vmatpush1.msra.mxu0 0.0
    %691 = vmatprep.subr.mxu0 0.0
    %692 = vmatpush1.msra.mxu0 0.0
    %693 = vmatprep.subr.mxu0 0.0
    %694 = vmatpush1.msra.mxu0 0.0
    %695 = vmatprep.subr.mxu0 0.0
    %696 = vmatpush1.msra.mxu0 0.0
    %697 = vmatprep.subr.mxu0 0.0
    %698 = vmatpush1.msra.mxu0 %v592
    %699 = vmatprep.subr.mxu0 0.0
    %700 = vmatpush1.msra.mxu0 %v591
    %701 = vmatprep.subr.mxu0 0.0
    %702 = vmatpush1.msra.mxu0 %v590
    %703 = vmatprep.subr.mxu0 0.0
    %704 = vmatpush1.msra.mxu0 %v589
    %705 = vmatprep.subr.mxu0 0.0
    %706 = vmatpush2.msra.mxu0 0.0
    %707 = vmatprep.subr.mxu0 0.0
    %708 = vmatpush2.msra.mxu0 0.0
    %709 = vmatprep.subr.mxu0 0.0
    %710 = vmatpush2.msra.mxu0 0.0
    %711 = vmatprep.subr.mxu0 0.0
    %712 = vmatpush2.msra.mxu0 0.0
    %713 = vmatprep.subr.mxu0 0.0
    %714 = vmatpush2.msra.mxu0 0.0
    %715 = vmatprep.subr.mxu0 0.0
    %716 = vmatpush2.msra.mxu0 0.0
    %717 = vmatprep.subr.mxu0 0.0
    %718 = vmatpush2.msra.mxu0 0.0
    %719 = vmatprep.subr.mxu0 0.0
    %720 = vmatpush2.msra.mxu0 0.0
    %721 = vmatprep.subr.mxu0 0.0
    %722 = vmatpush2.msra.mxu0 0.0
    %723 = vmatprep.subr.mxu0 0.0
    %724 = vmatpush2.msra.mxu0 0.0
    %725 = vmatprep.subr.mxu0 0.0
    %726 = vmatpush2.msra.mxu0 0.0
    %727 = vmatprep.subr.mxu0 0.0
    %728 = vmatpush2.msra.mxu0 0.0
    %729 = vmatprep.subr.mxu0 0.0
    %730 = vmatpush2.msra.mxu0 0.0
    %731 = vmatprep.subr.mxu0 0.0
    %732 = vmatpush2.msra.mxu0 0.0
    %733 = vmatprep.subr.mxu0 0.0
    %734 = vmatpush2.msra.mxu0 0.0
    %735 = vmatprep.subr.mxu0 0.0
    %736 = vmatpush2.msra.mxu0 0.0
    %737 = vmatprep.mubr.f32.mxu0 0.0
    %738 = vmatmul.mubr.f32.gmra.mxu0 %v601
    %v739 = vpop.f32.mrf.mxu0
    %v740 = vadd.f32 0.0, %v739
    %v741 = vpop.f32.mrf.mxu0
    %742 = vdwg.mxu0
    %v744 = vlaneseq
    %v745 = vshrl.u32 %v744, 7
    %v746 = vsub.s32 0, %v745
    %v747 = vrot.slane %v597, %v746
    %749 = vmatprep.subr.mxu0 0.0
    %750 = vmatpush1.msra.mxu0 0.0
    %751 = vmatprep.subr.mxu0 0.0
    %752 = vmatpush1.msra.mxu0 0.0
    %753 = vmatprep.subr.mxu0 0.0
    %754 = vmatpush1.msra.mxu0 0.0
    %755 = vmatprep.subr.mxu0 0.0
    %756 = vmatpush1.msra.mxu0 0.0
    %757 = vmatprep.subr.mxu0 0.0
    %758 = vmatpush1.msra.mxu0 0.0
    %759 = vmatprep.subr.mxu0 0.0
    %760 = vmatpush1.msra.mxu0 0.0
    %761 = vmatprep.subr.mxu0 0.0
    %762 = vmatpush1.msra.mxu0 0.0
    %763 = vmatprep.subr.mxu0 0.0
    %764 = vmatpush1.msra.mxu0 0.0
    %765 = vmatprep.subr.mxu0 0.0
    %766 = vmatpush1.msra.mxu0 0.0
    %767 = vmatprep.subr.mxu0 0.0
    %768 = vmatpush1.msra.mxu0 0.0
    %769 = vmatprep.subr.mxu0 0.0
    %770 = vmatpush1.msra.mxu0 0.0
    %771 = vmatprep.subr.mxu0 0.0
    %772 = vmatpush1.msra.mxu0 0.0
    %773 = vmatprep.subr.mxu0 0.0
    %774 = vmatpush1.msra.mxu0 %v596
    %775 = vmatprep.subr.mxu0 0.0
    %776 = vmatpush1.msra.mxu0 %v595
    %777 = vmatprep.subr.mxu0 0.0
    %778 = vmatpush1.msra.mxu0 %v594
    %779 = vmatprep.subr.mxu0 0.0
    %780 = vmatpush1.msra.mxu0 %v593
    %781 = vmatprep.subr.mxu0 0.0
    %782 = vmatpush2.msra.mxu0 0.0
    %783 = vmatprep.subr.mxu0 0.0
    %784 = vmatpush2.msra.mxu0 0.0
    %785 = vmatprep.subr.mxu0 0.0
    %786 = vmatpush2.msra.mxu0 0.0
    %787 = vmatprep.subr.mxu0 0.0
    %788 = vmatpush2.msra.mxu0 0.0
    %789 = vmatprep.subr.mxu0 0.0
    %790 = vmatpush2.msra.mxu0 0.0
    %791 = vmatprep.subr.mxu0 0.0
    %792 = vmatpush2.msra.mxu0 0.0
    %793 = vmatprep.subr.mxu0 0.0
    %794 = vmatpush2.msra.mxu0 0.0
    %795 = vmatprep.subr.mxu0 0.0
    %796 = vmatpush2.msra.mxu0 0.0
    %797 = vmatprep.subr.mxu0 0.0
    %798 = vmatpush2.msra.mxu0 0.0
    %799 = vmatprep.subr.mxu0 0.0
    %800 = vmatpush2.msra.mxu0 0.0
    %801 = vmatprep.subr.mxu0 0.0
    %802 = vmatpush2.msra.mxu0 0.0
    %803 = vmatprep.subr.mxu0 0.0
    %804 = vmatpush2.msra.mxu0 0.0
    %805 = vmatprep.subr.mxu0 0.0
    %806 = vmatpush2.msra.mxu0 0.0
    %807 = vmatprep.subr.mxu0 0.0
    %808 = vmatpush2.msra.mxu0 0.0
    %809 = vmatprep.subr.mxu0 0.0
    %810 = vmatpush2.msra.mxu0 0.0
    %811 = vmatprep.subr.mxu0 0.0
    %812 = vmatpush2.msra.mxu0 0.0
    %813 = vmatprep.mubr.f32.mxu0 0.0
    %814 = vmatmul.mubr.f32.gmra.mxu0 %v601
    %v815 = vpop.f32.mrf.mxu0
    %v816 = vadd.f32 %v747, %v815
    %v817 = vpop.f32.mrf.mxu0
    %818 = vdwg.mxu0
    %v819 = vadd.f32 %v369, %v670
    %v820 = vxor.u32 %v819, 2147483648
    %v821 = vmul.f32 %v820, 1.442695
    %v822 = vpow.pop %v821
    %v823 = vadd.f32 %v822, 1.0
    %v824 = vrcp.pop %v823
    %v825 = vmul.f32 1.0, %v824
    %v826 = vadd.f32 %v468, %v740
    %v827 = vxor.u32 %v826, 2147483648
    %v828 = vmul.f32 %v827, 1.442695
    %v829 = vpow.pop %v828
    %v830 = vadd.f32 %v829, 1.0
    %v831 = vrcp.pop %v830
    %v832 = vmul.f32 1.0, %v831
    %v833 = vmul.f32 %v825, %v816
    %v834 = vadd.f32 %v567, %v833
    %v835 = vtanh.pop %v834
    %v836 = vsub.f32 1.0, %v832
    %v837 = vmul.f32 %v836, %v835
    %v838 = vmul.f32 %v832, %v598
    %v839 = vadd.f32 %v837, %v838
    %v841 = vsel %vm599, %v839, 0
    %843 = vmatprep.subr.mxu0 0.0
    %844 = vmatpush1.msra.mxu0 0.0
    %845 = vmatprep.subr.mxu0 0.0
    %846 = vmatpush1.msra.mxu0 0.0
    %847 = vmatprep.subr.mxu0 0.0
    %848 = vmatpush1.msra.mxu0 0.0
    %849 = vmatprep.subr.mxu0 0.0
    %850 = vmatpush1.msra.mxu0 0.0
    %851 = vmatprep.subr.mxu0 0.0
    %852 = vmatpush1.msra.mxu0 0.0
    %853 = vmatprep.subr.mxu0 0.0
    %854 = vmatpush1.msra.mxu0 0.0
    %855 = vmatprep.subr.mxu0 0.0
    %856 = vmatpush1.msra.mxu0 0.0
    %857 = vmatprep.subr.mxu0 0.0
    %858 = vmatpush1.msra.mxu0 0.0
    %859 = vmatprep.subr.mxu0 0.0
    %860 = vmatpush1.msra.mxu0 0.0
    %861 = vmatprep.subr.mxu0 0.0
    %862 = vmatpush1.msra.mxu0 0.0
    %863 = vmatprep.subr.mxu0 0.0
    %864 = vmatpush1.msra.mxu0 0.0
    %865 = vmatprep.subr.mxu0 0.0
    %866 = vmatpush1.msra.mxu0 0.0
    %867 = vmatprep.subr.mxu0 0.0
    %868 = vmatpush1.msra.mxu0 %v588
    %869 = vmatprep.subr.mxu0 0.0
    %870 = vmatpush1.msra.mxu0 %v587
    %871 = vmatprep.subr.mxu0 0.0
    %872 = vmatpush1.msra.mxu0 %v586
    %873 = vmatprep.subr.mxu0 0.0
    %874 = vmatpush1.msra.mxu0 %v585
    %875 = vmatprep.subr.mxu0 0.0
    %876 = vmatpush2.msra.mxu0 0.0
    %877 = vmatprep.subr.mxu0 0.0
    %878 = vmatpush2.msra.mxu0 0.0
    %879 = vmatprep.subr.mxu0 0.0
    %880 = vmatpush2.msra.mxu0 0.0
    %881 = vmatprep.subr.mxu0 0.0
    %882 = vmatpush2.msra.mxu0 0.0
    %883 = vmatprep.subr.mxu0 0.0
    %884 = vmatpush2.msra.mxu0 0.0
    %885 = vmatprep.subr.mxu0 0.0
    %886 = vmatpush2.msra.mxu0 0.0
    %887 = vmatprep.subr.mxu0 0.0
    %888 = vmatpush2.msra.mxu0 0.0
    %889 = vmatprep.subr.mxu0 0.0
    %890 = vmatpush2.msra.mxu0 0.0
    %891 = vmatprep.subr.mxu0 0.0
    %892 = vmatpush2.msra.mxu0 0.0
    %893 = vmatprep.subr.mxu0 0.0
    %894 = vmatpush2.msra.mxu0 0.0
    %895 = vmatprep.subr.mxu0 0.0
    %896 = vmatpush2.msra.mxu0 0.0
    %897 = vmatprep.subr.mxu0 0.0
    %898 = vmatpush2.msra.mxu0 0.0
    %899 = vmatprep.subr.mxu0 0.0
    %900 = vmatpush2.msra.mxu0 0.0
    %901 = vmatprep.subr.mxu0 0.0
    %902 = vmatpush2.msra.mxu0 0.0
    %903 = vmatprep.subr.mxu0 0.0
    %904 = vmatpush2.msra.mxu0 0.0
    %905 = vmatprep.subr.mxu0 0.0
    %906 = vmatpush2.msra.mxu0 0.0
    %907 = vmatprep.mubr.f32.mxu0 0.0
    %908 = vmatmul.mubr.f32.gmra.mxu0 %v841
    %v909 = vpop.f32.mrf.mxu0
    %v910 = vadd.f32 0.0, %v909
    %v911 = vpop.f32.mrf.mxu0
    %912 = vdwg.mxu0
    %913 = vmatprep.subr.mxu0 0.0
    %914 = vmatpush1.msra.mxu0 0.0
    %915 = vmatprep.subr.mxu0 0.0
    %916 = vmatpush1.msra.mxu0 0.0
    %917 = vmatprep.subr.mxu0 0.0
    %918 = vmatpush1.msra.mxu0 0.0
    %919 = vmatprep.subr.mxu0 0.0
    %920 = vmatpush1.msra.mxu0 0.0
    %921 = vmatprep.subr.mxu0 0.0
    %922 = vmatpush1.msra.mxu0 0.0
    %923 = vmatprep.subr.mxu0 0.0
    %924 = vmatpush1.msra.mxu0 0.0
    %925 = vmatprep.subr.mxu0 0.0
    %926 = vmatpush1.msra.mxu0 0.0
    %927 = vmatprep.subr.mxu0 0.0
    %928 = vmatpush1.msra.mxu0 0.0
    %929 = vmatprep.subr.mxu0 0.0
    %930 = vmatpush1.msra.mxu0 0.0
    %931 = vmatprep.subr.mxu0 0.0
    %932 = vmatpush1.msra.mxu0 0.0
    %933 = vmatprep.subr.mxu0 0.0
    %934 = vmatpush1.msra.mxu0 0.0
    %935 = vmatprep.subr.mxu0 0.0
    %936 = vmatpush1.msra.mxu0 0.0
    %937 = vmatprep.subr.mxu0 0.0
    %938 = vmatpush1.msra.mxu0 %v592
    %939 = vmatprep.subr.mxu0 0.0
    %940 = vmatpush1.msra.mxu0 %v591
    %941 = vmatprep.subr.mxu0 0.0
    %942 = vmatpush1.msra.mxu0 %v590
    %943 = vmatprep.subr.mxu0 0.0
    %944 = vmatpush1.msra.mxu0 %v589
    %945 = vmatprep.subr.mxu0 0.0
    %946 = vmatpush2.msra.mxu0 0.0
    %947 = vmatprep.subr.mxu0 0.0
    %948 = vmatpush2.msra.mxu0 0.0
    %949 = vmatprep.subr.mxu0 0.0
    %950 = vmatpush2.msra.mxu0 0.0
    %951 = vmatprep.subr.mxu0 0.0
    %952 = vmatpush2.msra.mxu0 0.0
    %953 = vmatprep.subr.mxu0 0.0
    %954 = vmatpush2.msra.mxu0 0.0
    %955 = vmatprep.subr.mxu0 0.0
    %956 = vmatpush2.msra.mxu0 0.0
    %957 = vmatprep.subr.mxu0 0.0
    %958 = vmatpush2.msra.mxu0 0.0
    %959 = vmatprep.subr.mxu0 0.0
    %960 = vmatpush2.msra.mxu0 0.0
    %961 = vmatprep.subr.mxu0 0.0
    %962 = vmatpush2.msra.mxu0 0.0
    %963 = vmatprep.subr.mxu0 0.0
    %964 = vmatpush2.msra.mxu0 0.0
    %965 = vmatprep.subr.mxu0 0.0
    %966 = vmatpush2.msra.mxu0 0.0
    %967 = vmatprep.subr.mxu0 0.0
    %968 = vmatpush2.msra.mxu0 0.0
    %969 = vmatprep.subr.mxu0 0.0
    %970 = vmatpush2.msra.mxu0 0.0
    %971 = vmatprep.subr.mxu0 0.0
    %972 = vmatpush2.msra.mxu0 0.0
    %973 = vmatprep.subr.mxu0 0.0
    %974 = vmatpush2.msra.mxu0 0.0
    %975 = vmatprep.subr.mxu0 0.0
    %976 = vmatpush2.msra.mxu0 0.0
    %977 = vmatprep.mubr.f32.mxu0 0.0
    %978 = vmatmul.mubr.f32.gmra.mxu0 %v841
    %v979 = vpop.f32.mrf.mxu0
    %v980 = vadd.f32 0.0, %v979
    %v981 = vpop.f32.mrf.mxu0
    %982 = vdwg.mxu0
    %983 = vmatprep.subr.mxu0 0.0
    %984 = vmatpush1.msra.mxu0 0.0
    %985 = vmatprep.subr.mxu0 0.0
    %986 = vmatpush1.msra.mxu0 0.0
    %987 = vmatprep.subr.mxu0 0.0
    %988 = vmatpush1.msra.mxu0 0.0
    %989 = vmatprep.subr.mxu0 0.0
    %990 = vmatpush1.msra.mxu0 0.0
    %991 = vmatprep.subr.mxu0 0.0
    %992 = vmatpush1.msra.mxu0 0.0
    %993 = vmatprep.subr.mxu0 0.0
    %994 = vmatpush1.msra.mxu0 0.0
    %995 = vmatprep.subr.mxu0 0.0
    %996 = vmatpush1.msra.mxu0 0.0
    %997 = vmatprep.subr.mxu0 0.0
    %998 = vmatpush1.msra.mxu0 0.0
    %999 = vmatprep.subr.mxu0 0.0
    %1000 = vmatpush1.msra.mxu0 0.0
    %1001 = vmatprep.subr.mxu0 0.0
    %1002 = vmatpush1.msra.mxu0 0.0
    %1003 = vmatprep.subr.mxu0 0.0
    %1004 = vmatpush1.msra.mxu0 0.0
    %1005 = vmatprep.subr.mxu0 0.0
    %1006 = vmatpush1.msra.mxu0 0.0
    %1007 = vmatprep.subr.mxu0 0.0
    %1008 = vmatpush1.msra.mxu0 %v596
    %1009 = vmatprep.subr.mxu0 0.0
    %1010 = vmatpush1.msra.mxu0 %v595
    %1011 = vmatprep.subr.mxu0 0.0
    %1012 = vmatpush1.msra.mxu0 %v594
    %1013 = vmatprep.subr.mxu0 0.0
    %1014 = vmatpush1.msra.mxu0 %v593
    %1015 = vmatprep.subr.mxu0 0.0
    %1016 = vmatpush2.msra.mxu0 0.0
    %1017 = vmatprep.subr.mxu0 0.0
    %1018 = vmatpush2.msra.mxu0 0.0
    %1019 = vmatprep.subr.mxu0 0.0
    %1020 = vmatpush2.msra.mxu0 0.0
    %1021 = vmatprep.subr.mxu0 0.0
    %1022 = vmatpush2.msra.mxu0 0.0
    %1023 = vmatprep.subr.mxu0 0.0
    %1024 = vmatpush2.msra.mxu0 0.0
    %1025 = vmatprep.subr.mxu0 0.0
    %1026 = vmatpush2.msra.mxu0 0.0
    %1027 = vmatprep.subr.mxu0 0.0
    %1028 = vmatpush2.msra.mxu0 0.0
    %1029 = vmatprep.subr.mxu0 0.0
    %1030 = vmatpush2.msra.mxu0 0.0
    %1031 = vmatprep.subr.mxu0 0.0
    %1032 = vmatpush2.msra.mxu0 0.0
    %1033 = vmatprep.subr.mxu0 0.0
    %1034 = vmatpush2.msra.mxu0 0.0
    %1035 = vmatprep.subr.mxu0 0.0
    %1036 = vmatpush2.msra.mxu0 0.0
    %1037 = vmatprep.subr.mxu0 0.0
    %1038 = vmatpush2.msra.mxu0 0.0
    %1039 = vmatprep.subr.mxu0 0.0
    %1040 = vmatpush2.msra.mxu0 0.0
    %1041 = vmatprep.subr.mxu0 0.0
    %1042 = vmatpush2.msra.mxu0 0.0
    %1043 = vmatprep.subr.mxu0 0.0
    %1044 = vmatpush2.msra.mxu0 0.0
    %1045 = vmatprep.subr.mxu0 0.0
    %1046 = vmatpush2.msra.mxu0 0.0
    %1047 = vmatprep.mubr.f32.mxu0 0.0
    %1048 = vmatmul.mubr.f32.gmra.mxu0 %v841
    %v1049 = vpop.f32.mrf.mxu0
    %v1050 = vadd.f32 %v747, %v1049
    %v1051 = vpop.f32.mrf.mxu0
    %1052 = vdwg.mxu0
    %v1054 = vrot.slane %v910, 4
    %v1056 = vadd.f32 %v369, %v1054
    %v1057 = vxor.u32 %v1056, 2147483648
    %v1058 = vmul.f32 %v1057, 1.442695
    %v1059 = vpow.pop %v1058
    %v1060 = vadd.f32 %v1059, 1.0
    %v1061 = vrcp.pop %v1060
    %v1062 = vmul.f32 1.0, %v1061
    %v1064 = vrot.slane %v980, 4
    %v1066 = vadd.f32 %v468, %v1064
    %v1067 = vxor.u32 %v1066, 2147483648
    %v1068 = vmul.f32 %v1067, 1.442695
    %v1069 = vpow.pop %v1068
    %v1070 = vadd.f32 %v1069, 1.0
    %v1071 = vrcp.pop %v1070
    %v1072 = vmul.f32 1.0, %v1071
    %v1074 = vrot.slane %v1050, 4
    %v1076 = vmul.f32 %v1062, %v1074
    %v1077 = vadd.f32 %v567, %v1076
    %v1078 = vtanh.pop %v1077
    %v1079 = vsub.f32 1.0, %v1072
    %v1080 = vmul.f32 %v1079, %v1078
    %v1081 = vrot.slane %v839, 4
    %v1083 = vmul.f32 %v1072, %v1081
    %v1084 = vadd.f32 %v1080, %v1083
    %v1086 = vrot.slane %v1084, 4
    %v1087 = vsel %vm599, %v1086, 0
    %1089 = vmatprep.subr.mxu0 0.0
    %1090 = vmatpush1.msra.mxu0 0.0
    %1091 = vmatprep.subr.mxu0 0.0
    %1092 = vmatpush1.msra.mxu0 0.0
    %1093 = vmatprep.subr.mxu0 0.0
    %1094 = vmatpush1.msra.mxu0 0.0
    %1095 = vmatprep.subr.mxu0 0.0
    %1096 = vmatpush1.msra.mxu0 0.0
    %1097 = vmatprep.subr.mxu0 0.0
    %1098 = vmatpush1.msra.mxu0 0.0
    %1099 = vmatprep.subr.mxu0 0.0
    %1100 = vmatpush1.msra.mxu0 0.0
    %1101 = vmatprep.subr.mxu0 0.0
    %1102 = vmatpush1.msra.mxu0 0.0
    %1103 = vmatprep.subr.mxu0 0.0
    %1104 = vmatpush1.msra.mxu0 0.0
    %1105 = vmatprep.subr.mxu0 0.0
    %1106 = vmatpush1.msra.mxu0 0.0
    %1107 = vmatprep.subr.mxu0 0.0
    %1108 = vmatpush1.msra.mxu0 0.0
    %1109 = vmatprep.subr.mxu0 0.0
    %1110 = vmatpush1.msra.mxu0 0.0
    %1111 = vmatprep.subr.mxu0 0.0
    %1112 = vmatpush1.msra.mxu0 0.0
    %1113 = vmatprep.subr.mxu0 0.0
    %1114 = vmatpush1.msra.mxu0 %v588
    %1115 = vmatprep.subr.mxu0 0.0
    %1116 = vmatpush1.msra.mxu0 %v587
    %1117 = vmatprep.subr.mxu0 0.0
    %1118 = vmatpush1.msra.mxu0 %v586
    %1119 = vmatprep.subr.mxu0 0.0
    %1120 = vmatpush1.msra.mxu0 %v585
    %1121 = vmatprep.subr.mxu0 0.0
    %1122 = vmatpush2.msra.mxu0 0.0
    %1123 = vmatprep.subr.mxu0 0.0
    %1124 = vmatpush2.msra.mxu0 0.0
    %1125 = vmatprep.subr.mxu0 0.0
    %1126 = vmatpush2.msra.mxu0 0.0
    %1127 = vmatprep.subr.mxu0 0.0
    %1128 = vmatpush2.msra.mxu0 0.0
    %1129 = vmatprep.subr.mxu0 0.0
    %1130 = vmatpush2.msra.mxu0 0.0
    %1131 = vmatprep.subr.mxu0 0.0
    %1132 = vmatpush2.msra.mxu0 0.0
    %1133 = vmatprep.subr.mxu0 0.0
    %1134 = vmatpush2.msra.mxu0 0.0
    %1135 = vmatprep.subr.mxu0 0.0
    %1136 = vmatpush2.msra.mxu0 0.0
    %1137 = vmatprep.subr.mxu0 0.0
    %1138 = vmatpush2.msra.mxu0 0.0
    %1139 = vmatprep.subr.mxu0 0.0
    %1140 = vmatpush2.msra.mxu0 0.0
    %1141 = vmatprep.subr.mxu0 0.0
    %1142 = vmatpush2.msra.mxu0 0.0
    %1143 = vmatprep.subr.mxu0 0.0
    %1144 = vmatpush2.msra.mxu0 0.0
    %1145 = vmatprep.subr.mxu0 0.0
    %1146 = vmatpush2.msra.mxu0 0.0
    %1147 = vmatprep.subr.mxu0 0.0
    %1148 = vmatpush2.msra.mxu0 0.0
    %1149 = vmatprep.subr.mxu0 0.0
    %1150 = vmatpush2.msra.mxu0 0.0
    %1151 = vmatprep.subr.mxu0 0.0
    %1152 = vmatpush2.msra.mxu0 0.0
    %1153 = vmatprep.mubr.f32.mxu0 0.0
    %1154 = vmatmul.mubr.f32.gmra.mxu0 %v1087
    %v1155 = vpop.f32.mrf.mxu0
    %v1156 = vadd.f32 0.0, %v1155
    %v1157 = vpop.f32.mrf.mxu0
    %1158 = vdwg.mxu0
    %1159 = vmatprep.subr.mxu0 0.0
    %1160 = vmatpush1.msra.mxu0 0.0
    %1161 = vmatprep.subr.mxu0 0.0
    %1162 = vmatpush1.msra.mxu0 0.0
    %1163 = vmatprep.subr.mxu0 0.0
    %1164 = vmatpush1.msra.mxu0 0.0
    %1165 = vmatprep.subr.mxu0 0.0
    %1166 = vmatpush1.msra.mxu0 0.0
    %1167 = vmatprep.subr.mxu0 0.0
    %1168 = vmatpush1.msra.mxu0 0.0
    %1169 = vmatprep.subr.mxu0 0.0
    %1170 = vmatpush1.msra.mxu0 0.0
    %1171 = vmatprep.subr.mxu0 0.0
    %1172 = vmatpush1.msra.mxu0 0.0
    %1173 = vmatprep.subr.mxu0 0.0
    %1174 = vmatpush1.msra.mxu0 0.0
    %1175 = vmatprep.subr.mxu0 0.0
    %1176 = vmatpush1.msra.mxu0 0.0
    %1177 = vmatprep.subr.mxu0 0.0
    %1178 = vmatpush1.msra.mxu0 0.0
    %1179 = vmatprep.subr.mxu0 0.0
    %1180 = vmatpush1.msra.mxu0 0.0
    %1181 = vmatprep.subr.mxu0 0.0
    %1182 = vmatpush1.msra.mxu0 0.0
    %1183 = vmatprep.subr.mxu0 0.0
    %1184 = vmatpush1.msra.mxu0 %v592
    %1185 = vmatprep.subr.mxu0 0.0
    %1186 = vmatpush1.msra.mxu0 %v591
    %1187 = vmatprep.subr.mxu0 0.0
    %1188 = vmatpush1.msra.mxu0 %v590
    %1189 = vmatprep.subr.mxu0 0.0
    %1190 = vmatpush1.msra.mxu0 %v589
    %1191 = vmatprep.subr.mxu0 0.0
    %1192 = vmatpush2.msra.mxu0 0.0
    %1193 = vmatprep.subr.mxu0 0.0
    %1194 = vmatpush2.msra.mxu0 0.0
    %1195 = vmatprep.subr.mxu0 0.0
    %1196 = vmatpush2.msra.mxu0 0.0
    %1197 = vmatprep.subr.mxu0 0.0
    %1198 = vmatpush2.msra.mxu0 0.0
    %1199 = vmatprep.subr.mxu0 0.0
    %1200 = vmatpush2.msra.mxu0 0.0
    %1201 = vmatprep.subr.mxu0 0.0
    %1202 = vmatpush2.msra.mxu0 0.0
    %1203 = vmatprep.subr.mxu0 0.0
    %1204 = vmatpush2.msra.mxu0 0.0
    %1205 = vmatprep.subr.mxu0 0.0
    %1206 = vmatpush2.msra.mxu0 0.0
    %1207 = vmatprep.subr.mxu0 0.0
    %1208 = vmatpush2.msra.mxu0 0.0
    %1209 = vmatprep.subr.mxu0 0.0
    %1210 = vmatpush2.msra.mxu0 0.0
    %1211 = vmatprep.subr.mxu0 0.0
    %1212 = vmatpush2.msra.mxu0 0.0
    %1213 = vmatprep.subr.mxu0 0.0
    %1214 = vmatpush2.msra.mxu0 0.0
    %1215 = vmatprep.subr.mxu0 0.0
    %1216 = vmatpush2.msra.mxu0 0.0
    %1217 = vmatprep.subr.mxu0 0.0
    %1218 = vmatpush2.msra.mxu0 0.0
    %1219 = vmatprep.subr.mxu0 0.0
    %1220 = vmatpush2.msra.mxu0 0.0
    %1221 = vmatprep.subr.mxu0 0.0
    %1222 = vmatpush2.msra.mxu0 0.0
    %1223 = vmatprep.mubr.f32.mxu0 0.0
    %1224 = vmatmul.mubr.f32.gmra.mxu0 %v1087
    %v1225 = vpop.f32.mrf.mxu0
    %v1226 = vadd.f32 0.0, %v1225
    %v1227 = vpop.f32.mrf.mxu0
    %1228 = vdwg.mxu0
    %1229 = vmatprep.subr.mxu0 0.0
    %1230 = vmatpush1.msra.mxu0 0.0
    %1231 = vmatprep.subr.mxu0 0.0
    %1232 = vmatpush1.msra.mxu0 0.0
    %1233 = vmatprep.subr.mxu0 0.0
    %1234 = vmatpush1.msra.mxu0 0.0
    %1235 = vmatprep.subr.mxu0 0.0
    %1236 = vmatpush1.msra.mxu0 0.0
    %1237 = vmatprep.subr.mxu0 0.0
    %1238 = vmatpush1.msra.mxu0 0.0
    %1239 = vmatprep.subr.mxu0 0.0
    %1240 = vmatpush1.msra.mxu0 0.0
    %1241 = vmatprep.subr.mxu0 0.0
    %1242 = vmatpush1.msra.mxu0 0.0
    %1243 = vmatprep.subr.mxu0 0.0
    %1244 = vmatpush1.msra.mxu0 0.0
    %1245 = vmatprep.subr.mxu0 0.0
    %1246 = vmatpush1.msra.mxu0 0.0
    %1247 = vmatprep.subr.mxu0 0.0
    %1248 = vmatpush1.msra.mxu0 0.0
    %1249 = vmatprep.subr.mxu0 0.0
    %1250 = vmatpush1.msra.mxu0 0.0
    %1251 = vmatprep.subr.mxu0 0.0
    %1252 = vmatpush1.msra.mxu0 0.0
    %1253 = vmatprep.subr.mxu0 0.0
    %1254 = vmatpush1.msra.mxu0 %v596
    %1255 = vmatprep.subr.mxu0 0.0
    %1256 = vmatpush1.msra.mxu0 %v595
    %1257 = vmatprep.subr.mxu0 0.0
    %1258 = vmatpush1.msra.mxu0 %v594
    %1259 = vmatprep.subr.mxu0 0.0
    %1260 = vmatpush1.msra.mxu0 %v593
    %1261 = vmatprep.subr.mxu0 0.0
    %1262 = vmatpush2.msra.mxu0 0.0
    %1263 = vmatprep.subr.mxu0 0.0
    %1264 = vmatpush2.msra.mxu0 0.0
    %1265 = vmatprep.subr.mxu0 0.0
    %1266 = vmatpush2.msra.mxu0 0.0
    %1267 = vmatprep.subr.mxu0 0.0
    %1268 = vmatpush2.msra.mxu0 0.0
    %1269 = vmatprep.subr.mxu0 0.0
    %1270 = vmatpush2.msra.mxu0 0.0
    %1271 = vmatprep.subr.mxu0 0.0
    %1272 = vmatpush2.msra.mxu0 0.0
    %1273 = vmatprep.subr.mxu0 0.0
    %1274 = vmatpush2.msra.mxu0 0.0
    %1275 = vmatprep.subr.mxu0 0.0
    %1276 = vmatpush2.msra.mxu0 0.0
    %1277 = vmatprep.subr.mxu0 0.0
    %1278 = vmatpush2.msra.mxu0 0.0
    %1279 = vmatprep.subr.mxu0 0.0
    %1280 = vmatpush2.msra.mxu0 0.0
    %1281 = vmatprep.subr.mxu0 0.0
    %1282 = vmatpush2.msra.mxu0 0.0
    %1283 = vmatprep.subr.mxu0 0.0
    %1284 = vmatpush2.msra.mxu0 0.0
    %1285 = vmatprep.subr.mxu0 0.0
    %1286 = vmatpush2.msra.mxu0 0.0
    %1287 = vmatprep.subr.mxu0 0.0
    %1288 = vmatpush2.msra.mxu0 0.0
    %1289 = vmatprep.subr.mxu0 0.0
    %1290 = vmatpush2.msra.mxu0 0.0
    %1291 = vmatprep.subr.mxu0 0.0
    %1292 = vmatpush2.msra.mxu0 0.0
    %1293 = vmatprep.mubr.f32.mxu0 0.0
    %1294 = vmatmul.mubr.f32.gmra.mxu0 %v1087
    %v1295 = vpop.f32.mrf.mxu0
    %v1296 = vadd.f32 %v747, %v1295
    %v1297 = vpop.f32.mrf.mxu0
    %1298 = vdwg.mxu0
    %v1299 = vadd.f32 %v374, %v1156
    %v1300 = vxor.u32 %v1299, 2147483648
    %v1301 = vmul.f32 %v1300, 1.442695
    %v1302 = vpow.pop %v1301
    %v1303 = vadd.f32 %v1302, 1.0
    %v1304 = vrcp.pop %v1303
    %v1305 = vmul.f32 1.0, %v1304
    %v1306 = vadd.f32 %v473, %v1226
    %v1307 = vxor.u32 %v1306, 2147483648
    %v1308 = vmul.f32 %v1307, 1.442695
    %v1309 = vpow.pop %v1308
    %v1310 = vadd.f32 %v1309, 1.0
    %v1311 = vrcp.pop %v1310
    %v1312 = vmul.f32 1.0, %v1311
    %v1313 = vmul.f32 %v1305, %v1296
    %v1314 = vadd.f32 %v572, %v1313
    %v1315 = vtanh.pop %v1314
    %v1316 = vsub.f32 1.0, %v1312
    %v1317 = vmul.f32 %v1316, %v1315
    %v1319 = vmul.f32 %v1312, %v1086
    %v1320 = vadd.f32 %v1317, %v1319
    %v1322 = vsel %vm599, %v1320, 0
    %1324 = vmatprep.subr.mxu0 0.0
    %1325 = vmatpush1.msra.mxu0 0.0
    %1326 = vmatprep.subr.mxu0 0.0
    %1327 = vmatpush1.msra.mxu0 0.0
    %1328 = vmatprep.subr.mxu0 0.0
    %1329 = vmatpush1.msra.mxu0 0.0
    %1330 = vmatprep.subr.mxu0 0.0
    %1331 = vmatpush1.msra.mxu0 0.0
    %1332 = vmatprep.subr.mxu0 0.0
    %1333 = vmatpush1.msra.mxu0 0.0
    %1334 = vmatprep.subr.mxu0 0.0
    %1335 = vmatpush1.msra.mxu0 0.0
    %1336 = vmatprep.subr.mxu0 0.0
    %1337 = vmatpush1.msra.mxu0 0.0
    %1338 = vmatprep.subr.mxu0 0.0
    %1339 = vmatpush1.msra.mxu0 0.0
    %1340 = vmatprep.subr.mxu0 0.0
    %1341 = vmatpush1.msra.mxu0 0.0
    %1342 = vmatprep.subr.mxu0 0.0
    %1343 = vmatpush1.msra.mxu0 0.0
    %1344 = vmatprep.subr.mxu0 0.0
    %1345 = vmatpush1.msra.mxu0 0.0
    %1346 = vmatprep.subr.mxu0 0.0
    %1347 = vmatpush1.msra.mxu0 0.0
    %1348 = vmatprep.subr.mxu0 0.0
    %1349 = vmatpush1.msra.mxu0 %v588
    %1350 = vmatprep.subr.mxu0 0.0
    %1351 = vmatpush1.msra.mxu0 %v587
    %1352 = vmatprep.subr.mxu0 0.0
    %1353 = vmatpush1.msra.mxu0 %v586
    %1354 = vmatprep.subr.mxu0 0.0
    %1355 = vmatpush1.msra.mxu0 %v585
    %1356 = vmatprep.subr.mxu0 0.0
    %1357 = vmatpush2.msra.mxu0 0.0
    %1358 = vmatprep.subr.mxu0 0.0
    %1359 = vmatpush2.msra.mxu0 0.0
    %1360 = vmatprep.subr.mxu0 0.0
    %1361 = vmatpush2.msra.mxu0 0.0
    %1362 = vmatprep.subr.mxu0 0.0
    %1363 = vmatpush2.msra.mxu0 0.0
    %1364 = vmatprep.subr.mxu0 0.0
    %1365 = vmatpush2.msra.mxu0 0.0
    %1366 = vmatprep.subr.mxu0 0.0
    %1367 = vmatpush2.msra.mxu0 0.0
    %1368 = vmatprep.subr.mxu0 0.0
    %1369 = vmatpush2.msra.mxu0 0.0
    %1370 = vmatprep.subr.mxu0 0.0
    %1371 = vmatpush2.msra.mxu0 0.0
    %1372 = vmatprep.subr.mxu0 0.0
    %1373 = vmatpush2.msra.mxu0 0.0
    %1374 = vmatprep.subr.mxu0 0.0
    %1375 = vmatpush2.msra.mxu0 0.0
    %1376 = vmatprep.subr.mxu0 0.0
    %1377 = vmatpush2.msra.mxu0 0.0
    %1378 = vmatprep.subr.mxu0 0.0
    %1379 = vmatpush2.msra.mxu0 0.0
    %1380 = vmatprep.subr.mxu0 0.0
    %1381 = vmatpush2.msra.mxu0 0.0
    %1382 = vmatprep.subr.mxu0 0.0
    %1383 = vmatpush2.msra.mxu0 0.0
    %1384 = vmatprep.subr.mxu0 0.0
    %1385 = vmatpush2.msra.mxu0 0.0
    %1386 = vmatprep.subr.mxu0 0.0
    %1387 = vmatpush2.msra.mxu0 0.0
    %1388 = vmatprep.mubr.f32.mxu0 0.0
    %1389 = vmatmul.mubr.f32.gmra.mxu0 %v1322
    %v1390 = vpop.f32.mrf.mxu0
    %v1391 = vadd.f32 0.0, %v1390
    %v1392 = vpop.f32.mrf.mxu0
    %1393 = vdwg.mxu0
    %1394 = vmatprep.subr.mxu0 0.0
    %1395 = vmatpush1.msra.mxu0 0.0
    %1396 = vmatprep.subr.mxu0 0.0
    %1397 = vmatpush1.msra.mxu0 0.0
    %1398 = vmatprep.subr.mxu0 0.0
    %1399 = vmatpush1.msra.mxu0 0.0
    %1400 = vmatprep.subr.mxu0 0.0
    %1401 = vmatpush1.msra.mxu0 0.0
    %1402 = vmatprep.subr.mxu0 0.0
    %1403 = vmatpush1.msra.mxu0 0.0
    %1404 = vmatprep.subr.mxu0 0.0
    %1405 = vmatpush1.msra.mxu0 0.0
    %1406 = vmatprep.subr.mxu0 0.0
    %1407 = vmatpush1.msra.mxu0 0.0
    %1408 = vmatprep.subr.mxu0 0.0
    %1409 = vmatpush1.msra.mxu0 0.0
    %1410 = vmatprep.subr.mxu0 0.0
    %1411 = vmatpush1.msra.mxu0 0.0
    %1412 = vmatprep.subr.mxu0 0.0
    %1413 = vmatpush1.msra.mxu0 0.0
    %1414 = vmatprep.subr.mxu0 0.0
    %1415 = vmatpush1.msra.mxu0 0.0
    %1416 = vmatprep.subr.mxu0 0.0
    %1417 = vmatpush1.msra.mxu0 0.0
    %1418 = vmatprep.subr.mxu0 0.0
    %1419 = vmatpush1.msra.mxu0 %v592
    %1420 = vmatprep.subr.mxu0 0.0
    %1421 = vmatpush1.msra.mxu0 %v591
    %1422 = vmatprep.subr.mxu0 0.0
    %1423 = vmatpush1.msra.mxu0 %v590
    %1424 = vmatprep.subr.mxu0 0.0
    %1425 = vmatpush1.msra.mxu0 %v589
    %1426 = vmatprep.subr.mxu0 0.0
    %1427 = vmatpush2.msra.mxu0 0.0
    %1428 = vmatprep.subr.mxu0 0.0
    %1429 = vmatpush2.msra.mxu0 0.0
    %1430 = vmatprep.subr.mxu0 0.0
    %1431 = vmatpush2.msra.mxu0 0.0
    %1432 = vmatprep.subr.mxu0 0.0
    %1433 = vmatpush2.msra.mxu0 0.0
    %1434 = vmatprep.subr.mxu0 0.0
    %1435 = vmatpush2.msra.mxu0 0.0
    %1436 = vmatprep.subr.mxu0 0.0
    %1437 = vmatpush2.msra.mxu0 0.0
    %1438 = vmatprep.subr.mxu0 0.0
    %1439 = vmatpush2.msra.mxu0 0.0
    %1440 = vmatprep.subr.mxu0 0.0
    %1441 = vmatpush2.msra.mxu0 0.0
    %1442 = vmatprep.subr.mxu0 0.0
    %1443 = vmatpush2.msra.mxu0 0.0
    %1444 = vmatprep.subr.mxu0 0.0
    %1445 = vmatpush2.msra.mxu0 0.0
    %1446 = vmatprep.subr.mxu0 0.0
    %1447 = vmatpush2.msra.mxu0 0.0
    %1448 = vmatprep.subr.mxu0 0.0
    %1449 = vmatpush2.msra.mxu0 0.0
    %1450 = vmatprep.subr.mxu0 0.0
    %1451 = vmatpush2.msra.mxu0 0.0
    %1452 = vmatprep.subr.mxu0 0.0
    %1453 = vmatpush2.msra.mxu0 0.0
    %1454 = vmatprep.subr.mxu0 0.0
    %1455 = vmatpush2.msra.mxu0 0.0
    %1456 = vmatprep.subr.mxu0 0.0
    %1457 = vmatpush2.msra.mxu0 0.0
    %1458 = vmatprep.mubr.f32.mxu0 0.0
    %1459 = vmatmul.mubr.f32.gmra.mxu0 %v1322
    %v1460 = vpop.f32.mrf.mxu0
    %v1461 = vadd.f32 0.0, %v1460
    %v1462 = vpop.f32.mrf.mxu0
    %1463 = vdwg.mxu0
    %1464 = vmatprep.subr.mxu0 0.0
    %1465 = vmatpush1.msra.mxu0 0.0
    %1466 = vmatprep.subr.mxu0 0.0
    %1467 = vmatpush1.msra.mxu0 0.0
    %1468 = vmatprep.subr.mxu0 0.0
    %1469 = vmatpush1.msra.mxu0 0.0
    %1470 = vmatprep.subr.mxu0 0.0
    %1471 = vmatpush1.msra.mxu0 0.0
    %1472 = vmatprep.subr.mxu0 0.0
    %1473 = vmatpush1.msra.mxu0 0.0
    %1474 = vmatprep.subr.mxu0 0.0
    %1475 = vmatpush1.msra.mxu0 0.0
    %1476 = vmatprep.subr.mxu0 0.0
    %1477 = vmatpush1.msra.mxu0 0.0
    %1478 = vmatprep.subr.mxu0 0.0
    %1479 = vmatpush1.msra.mxu0 0.0
    %1480 = vmatprep.subr.mxu0 0.0
    %1481 = vmatpush1.msra.mxu0 0.0
    %1482 = vmatprep.subr.mxu0 0.0
    %1483 = vmatpush1.msra.mxu0 0.0
    %1484 = vmatprep.subr.mxu0 0.0
    %1485 = vmatpush1.msra.mxu0 0.0
    %1486 = vmatprep.subr.mxu0 0.0
    %1487 = vmatpush1.msra.mxu0 0.0
    %1488 = vmatprep.subr.mxu0 0.0
    %1489 = vmatpush1.msra.mxu0 %v596
    %1490 = vmatprep.subr.mxu0 0.0
    %1491 = vmatpush1.msra.mxu0 %v595
    %1492 = vmatprep.subr.mxu0 0.0
    %1493 = vmatpush1.msra.mxu0 %v594
    %1494 = vmatprep.subr.mxu0 0.0
    %1495 = vmatpush1.msra.mxu0 %v593
    %1496 = vmatprep.subr.mxu0 0.0
    %1497 = vmatpush2.msra.mxu0 0.0
    %1498 = vmatprep.subr.mxu0 0.0
    %1499 = vmatpush2.msra.mxu0 0.0
    %1500 = vmatprep.subr.mxu0 0.0
    %1501 = vmatpush2.msra.mxu0 0.0
    %1502 = vmatprep.subr.mxu0 0.0
    %1503 = vmatpush2.msra.mxu0 0.0
    %1504 = vmatprep.subr.mxu0 0.0
    %1505 = vmatpush2.msra.mxu0 0.0
    %1506 = vmatprep.subr.mxu0 0.0
    %1507 = vmatpush2.msra.mxu0 0.0
    %1508 = vmatprep.subr.mxu0 0.0
    %1509 = vmatpush2.msra.mxu0 0.0
    %1510 = vmatprep.subr.mxu0 0.0
    %1511 = vmatpush2.msra.mxu0 0.0
    %1512 = vmatprep.subr.mxu0 0.0
    %1513 = vmatpush2.msra.mxu0 0.0
    %1514 = vmatprep.subr.mxu0 0.0
    %1515 = vmatpush2.msra.mxu0 0.0
    %1516 = vmatprep.subr.mxu0 0.0
    %1517 = vmatpush2.msra.mxu0 0.0
    %1518 = vmatprep.subr.mxu0 0.0
    %1519 = vmatpush2.msra.mxu0 0.0
    %1520 = vmatprep.subr.mxu0 0.0
    %1521 = vmatpush2.msra.mxu0 0.0
    %1522 = vmatprep.subr.mxu0 0.0
    %1523 = vmatpush2.msra.mxu0 0.0
    %1524 = vmatprep.subr.mxu0 0.0
    %1525 = vmatpush2.msra.mxu0 0.0
    %1526 = vmatprep.subr.mxu0 0.0
    %1527 = vmatpush2.msra.mxu0 0.0
    %1528 = vmatprep.mubr.f32.mxu0 0.0
    %1529 = vmatmul.mubr.f32.gmra.mxu0 %v1322
    %v1530 = vpop.f32.mrf.mxu0
    %v1531 = vadd.f32 %v747, %v1530
    %v1532 = vpop.f32.mrf.mxu0
    %1533 = vdwg.mxu0
    %v1535 = vrot.slane %v1391, 4
    %v1537 = vadd.f32 %v374, %v1535
    %v1538 = vxor.u32 %v1537, 2147483648
    %v1539 = vmul.f32 %v1538, 1.442695
    %v1540 = vpow.pop %v1539
    %v1541 = vadd.f32 %v1540, 1.0
    %v1542 = vrcp.pop %v1541
    %v1543 = vmul.f32 1.0, %v1542
    %v1545 = vrot.slane %v1461, 4
    %v1547 = vadd.f32 %v473, %v1545
    %v1548 = vxor.u32 %v1547, 2147483648
    %v1549 = vmul.f32 %v1548, 1.442695
    %v1550 = vpow.pop %v1549
    %v1551 = vadd.f32 %v1550, 1.0
    %v1552 = vrcp.pop %v1551
    %v1553 = vmul.f32 1.0, %v1552
    %v1555 = vrot.slane %v1531, 4
    %v1557 = vmul.f32 %v1543, %v1555
    %v1558 = vadd.f32 %v572, %v1557
    %v1559 = vtanh.pop %v1558
    %v1560 = vsub.f32 1.0, %v1553
    %v1561 = vmul.f32 %v1560, %v1559
    %v1562 = vrot.slane %v1320, 4
    %v1564 = vmul.f32 %v1553, %v1562
    %v1565 = vadd.f32 %v1561, %v1564
    %v1567 = vrot.slane %v1565, 4
    %v1568 = vsel %vm599, %v1567, 0
    %1570 = vmatprep.subr.mxu0 0.0
    %1571 = vmatpush1.msra.mxu0 0.0
    %1572 = vmatprep.subr.mxu0 0.0
    %1573 = vmatpush1.msra.mxu0 0.0
    %1574 = vmatprep.subr.mxu0 0.0
    %1575 = vmatpush1.msra.mxu0 0.0
    %1576 = vmatprep.subr.mxu0 0.0
    %1577 = vmatpush1.msra.mxu0 0.0
    %1578 = vmatprep.subr.mxu0 0.0
    %1579 = vmatpush1.msra.mxu0 0.0
    %1580 = vmatprep.subr.mxu0 0.0
    %1581 = vmatpush1.msra.mxu0 0.0
    %1582 = vmatprep.subr.mxu0 0.0
    %1583 = vmatpush1.msra.mxu0 0.0
    %1584 = vmatprep.subr.mxu0 0.0
    %1585 = vmatpush1.msra.mxu0 0.0
    %1586 = vmatprep.subr.mxu0 0.0
    %1587 = vmatpush1.msra.mxu0 0.0
    %1588 = vmatprep.subr.mxu0 0.0
    %1589 = vmatpush1.msra.mxu0 0.0
    %1590 = vmatprep.subr.mxu0 0.0
    %1591 = vmatpush1.msra.mxu0 0.0
    %1592 = vmatprep.subr.mxu0 0.0
    %1593 = vmatpush1.msra.mxu0 0.0
    %1594 = vmatprep.subr.mxu0 0.0
    %1595 = vmatpush1.msra.mxu0 %v588
    %1596 = vmatprep.subr.mxu0 0.0
    %1597 = vmatpush1.msra.mxu0 %v587
    %1598 = vmatprep.subr.mxu0 0.0
    %1599 = vmatpush1.msra.mxu0 %v586
    %1600 = vmatprep.subr.mxu0 0.0
    %1601 = vmatpush1.msra.mxu0 %v585
    %1602 = vmatprep.subr.mxu0 0.0
    %1603 = vmatpush2.msra.mxu0 0.0
    %1604 = vmatprep.subr.mxu0 0.0
    %1605 = vmatpush2.msra.mxu0 0.0
    %1606 = vmatprep.subr.mxu0 0.0
    %1607 = vmatpush2.msra.mxu0 0.0
    %1608 = vmatprep.subr.mxu0 0.0
    %1609 = vmatpush2.msra.mxu0 0.0
    %1610 = vmatprep.subr.mxu0 0.0
    %1611 = vmatpush2.msra.mxu0 0.0
    %1612 = vmatprep.subr.mxu0 0.0
    %1613 = vmatpush2.msra.mxu0 0.0
    %1614 = vmatprep.subr.mxu0 0.0
    %1615 = vmatpush2.msra.mxu0 0.0
    %1616 = vmatprep.subr.mxu0 0.0
    %1617 = vmatpush2.msra.mxu0 0.0
    %1618 = vmatprep.subr.mxu0 0.0
    %1619 = vmatpush2.msra.mxu0 0.0
    %1620 = vmatprep.subr.mxu0 0.0
    %1621 = vmatpush2.msra.mxu0 0.0
    %1622 = vmatprep.subr.mxu0 0.0
    %1623 = vmatpush2.msra.mxu0 0.0
    %1624 = vmatprep.subr.mxu0 0.0
    %1625 = vmatpush2.msra.mxu0 0.0
    %1626 = vmatprep.subr.mxu0 0.0
    %1627 = vmatpush2.msra.mxu0 0.0
    %1628 = vmatprep.subr.mxu0 0.0
    %1629 = vmatpush2.msra.mxu0 0.0
    %1630 = vmatprep.subr.mxu0 0.0
    %1631 = vmatpush2.msra.mxu0 0.0
    %1632 = vmatprep.subr.mxu0 0.0
    %1633 = vmatpush2.msra.mxu0 0.0
    %1634 = vmatprep.mubr.f32.mxu0 0.0
    %1635 = vmatmul.mubr.f32.gmra.mxu0 %v1568
    %v1636 = vpop.f32.mrf.mxu0
    %v1637 = vadd.f32 0.0, %v1636
    %v1638 = vpop.f32.mrf.mxu0
    %1639 = vdwg.mxu0
    %1640 = vmatprep.subr.mxu0 0.0
    %1641 = vmatpush1.msra.mxu0 0.0
    %1642 = vmatprep.subr.mxu0 0.0
    %1643 = vmatpush1.msra.mxu0 0.0
    %1644 = vmatprep.subr.mxu0 0.0
    %1645 = vmatpush1.msra.mxu0 0.0
    %1646 = vmatprep.subr.mxu0 0.0
    %1647 = vmatpush1.msra.mxu0 0.0
    %1648 = vmatprep.subr.mxu0 0.0
    %1649 = vmatpush1.msra.mxu0 0.0
    %1650 = vmatprep.subr.mxu0 0.0
    %1651 = vmatpush1.msra.mxu0 0.0
    %1652 = vmatprep.subr.mxu0 0.0
    %1653 = vmatpush1.msra.mxu0 0.0
    %1654 = vmatprep.subr.mxu0 0.0
    %1655 = vmatpush1.msra.mxu0 0.0
    %1656 = vmatprep.subr.mxu0 0.0
    %1657 = vmatpush1.msra.mxu0 0.0
    %1658 = vmatprep.subr.mxu0 0.0
    %1659 = vmatpush1.msra.mxu0 0.0
    %1660 = vmatprep.subr.mxu0 0.0
    %1661 = vmatpush1.msra.mxu0 0.0
    %1662 = vmatprep.subr.mxu0 0.0
    %1663 = vmatpush1.msra.mxu0 0.0
    %1664 = vmatprep.subr.mxu0 0.0
    %1665 = vmatpush1.msra.mxu0 %v592
    %1666 = vmatprep.subr.mxu0 0.0
    %1667 = vmatpush1.msra.mxu0 %v591
    %1668 = vmatprep.subr.mxu0 0.0
    %1669 = vmatpush1.msra.mxu0 %v590
    %1670 = vmatprep.subr.mxu0 0.0
    %1671 = vmatpush1.msra.mxu0 %v589
    %1672 = vmatprep.subr.mxu0 0.0
    %1673 = vmatpush2.msra.mxu0 0.0
    %1674 = vmatprep.subr.mxu0 0.0
    %1675 = vmatpush2.msra.mxu0 0.0
    %1676 = vmatprep.subr.mxu0 0.0
    %1677 = vmatpush2.msra.mxu0 0.0
    %1678 = vmatprep.subr.mxu0 0.0
    %1679 = vmatpush2.msra.mxu0 0.0
    %1680 = vmatprep.subr.mxu0 0.0
    %1681 = vmatpush2.msra.mxu0 0.0
    %1682 = vmatprep.subr.mxu0 0.0
    %1683 = vmatpush2.msra.mxu0 0.0
    %1684 = vmatprep.subr.mxu0 0.0
    %1685 = vmatpush2.msra.mxu0 0.0
    %1686 = vmatprep.subr.mxu0 0.0
    %1687 = vmatpush2.msra.mxu0 0.0
    %1688 = vmatprep.subr.mxu0 0.0
    %1689 = vmatpush2.msra.mxu0 0.0
    %1690 = vmatprep.subr.mxu0 0.0
    %1691 = vmatpush2.msra.mxu0 0.0
    %1692 = vmatprep.subr.mxu0 0.0
    %1693 = vmatpush2.msra.mxu0 0.0
    %1694 = vmatprep.subr.mxu0 0.0
    %1695 = vmatpush2.msra.mxu0 0.0
    %1696 = vmatprep.subr.mxu0 0.0
    %1697 = vmatpush2.msra.mxu0 0.0
    %1698 = vmatprep.subr.mxu0 0.0
    %1699 = vmatpush2.msra.mxu0 0.0
    %1700 = vmatprep.subr.mxu0 0.0
    %1701 = vmatpush2.msra.mxu0 0.0
    %1702 = vmatprep.subr.mxu0 0.0
    %1703 = vmatpush2.msra.mxu0 0.0
    %1704 = vmatprep.mubr.f32.mxu0 0.0
    %1705 = vmatmul.mubr.f32.gmra.mxu0 %v1568
    %v1706 = vpop.f32.mrf.mxu0
    %v1707 = vadd.f32 0.0, %v1706
    %v1708 = vpop.f32.mrf.mxu0
    %1709 = vdwg.mxu0
    %1710 = vmatprep.subr.mxu0 0.0
    %1711 = vmatpush1.msra.mxu0 0.0
    %1712 = vmatprep.subr.mxu0 0.0
    %1713 = vmatpush1.msra.mxu0 0.0
    %1714 = vmatprep.subr.mxu0 0.0
    %1715 = vmatpush1.msra.mxu0 0.0
    %1716 = vmatprep.subr.mxu0 0.0
    %1717 = vmatpush1.msra.mxu0 0.0
    %1718 = vmatprep.subr.mxu0 0.0
    %1719 = vmatpush1.msra.mxu0 0.0
    %1720 = vmatprep.subr.mxu0 0.0
    %1721 = vmatpush1.msra.mxu0 0.0
    %1722 = vmatprep.subr.mxu0 0.0
    %1723 = vmatpush1.msra.mxu0 0.0
    %1724 = vmatprep.subr.mxu0 0.0
    %1725 = vmatpush1.msra.mxu0 0.0
    %1726 = vmatprep.subr.mxu0 0.0
    %1727 = vmatpush1.msra.mxu0 0.0
    %1728 = vmatprep.subr.mxu0 0.0
    %1729 = vmatpush1.msra.mxu0 0.0
    %1730 = vmatprep.subr.mxu0 0.0
    %1731 = vmatpush1.msra.mxu0 0.0
    %1732 = vmatprep.subr.mxu0 0.0
    %1733 = vmatpush1.msra.mxu0 0.0
    %1734 = vmatprep.subr.mxu0 0.0
    %1735 = vmatpush1.msra.mxu0 %v596
    %1736 = vmatprep.subr.mxu0 0.0
    %1737 = vmatpush1.msra.mxu0 %v595
    %1738 = vmatprep.subr.mxu0 0.0
    %1739 = vmatpush1.msra.mxu0 %v594
    %1740 = vmatprep.subr.mxu0 0.0
    %1741 = vmatpush1.msra.mxu0 %v593
    %1742 = vmatprep.subr.mxu0 0.0
    %1743 = vmatpush2.msra.mxu0 0.0
    %1744 = vmatprep.subr.mxu0 0.0
    %1745 = vmatpush2.msra.mxu0 0.0
    %1746 = vmatprep.subr.mxu0 0.0
    %1747 = vmatpush2.msra.mxu0 0.0
    %1748 = vmatprep.subr.mxu0 0.0
    %1749 = vmatpush2.msra.mxu0 0.0
    %1750 = vmatprep.subr.mxu0 0.0
    %1751 = vmatpush2.msra.mxu0 0.0
    %1752 = vmatprep.subr.mxu0 0.0
    %1753 = vmatpush2.msra.mxu0 0.0
    %1754 = vmatprep.subr.mxu0 0.0
    %1755 = vmatpush2.msra.mxu0 0.0
    %1756 = vmatprep.subr.mxu0 0.0
    %1757 = vmatpush2.msra.mxu0 0.0
    %1758 = vmatprep.subr.mxu0 0.0
    %1759 = vmatpush2.msra.mxu0 0.0
    %1760 = vmatprep.subr.mxu0 0.0
    %1761 = vmatpush2.msra.mxu0 0.0
    %1762 = vmatprep.subr.mxu0 0.0
    %1763 = vmatpush2.msra.mxu0 0.0
    %1764 = vmatprep.subr.mxu0 0.0
    %1765 = vmatpush2.msra.mxu0 0.0
    %1766 = vmatprep.subr.mxu0 0.0
    %1767 = vmatpush2.msra.mxu0 0.0
    %1768 = vmatprep.subr.mxu0 0.0
    %1769 = vmatpush2.msra.mxu0 0.0
    %1770 = vmatprep.subr.mxu0 0.0
    %1771 = vmatpush2.msra.mxu0 0.0
    %1772 = vmatprep.subr.mxu0 0.0
    %1773 = vmatpush2.msra.mxu0 0.0
    %1774 = vmatprep.mubr.f32.mxu0 0.0
    %1775 = vmatmul.mubr.f32.gmra.mxu0 %v1568
    %v1776 = vpop.f32.mrf.mxu0
    %v1777 = vadd.f32 %v747, %v1776
    %v1778 = vpop.f32.mrf.mxu0
    %1779 = vdwg.mxu0
    %v1780 = vadd.f32 %v379, %v1637
    %v1781 = vxor.u32 %v1780, 2147483648
    %v1782 = vmul.f32 %v1781, 1.442695
    %v1783 = vpow.pop %v1782
    %v1784 = vadd.f32 %v1783, 1.0
    %v1785 = vrcp.pop %v1784
    %v1786 = vmul.f32 1.0, %v1785
    %v1787 = vadd.f32 %v478, %v1707
    %v1788 = vxor.u32 %v1787, 2147483648
    %v1789 = vmul.f32 %v1788, 1.442695
    %v1790 = vpow.pop %v1789
    %v1791 = vadd.f32 %v1790, 1.0
    %v1792 = vrcp.pop %v1791
    %v1793 = vmul.f32 1.0, %v1792
    %v1794 = vmul.f32 %v1786, %v1777
    %v1795 = vadd.f32 %v577, %v1794
    %v1796 = vtanh.pop %v1795
    %v1797 = vsub.f32 1.0, %v1793
    %v1798 = vmul.f32 %v1797, %v1796
    %v1800 = vmul.f32 %v1793, %v1567
    %v1801 = vadd.f32 %v1798, %v1800
    %v1803 = vsel %vm599, %v1801, 0
    %1805 = vmatprep.subr.mxu0 0.0
    %1806 = vmatpush1.msra.mxu0 0.0
    %1807 = vmatprep.subr.mxu0 0.0
    %1808 = vmatpush1.msra.mxu0 0.0
    %1809 = vmatprep.subr.mxu0 0.0
    %1810 = vmatpush1.msra.mxu0 0.0
    %1811 = vmatprep.subr.mxu0 0.0
    %1812 = vmatpush1.msra.mxu0 0.0
    %1813 = vmatprep.subr.mxu0 0.0
    %1814 = vmatpush1.msra.mxu0 0.0
    %1815 = vmatprep.subr.mxu0 0.0
    %1816 = vmatpush1.msra.mxu0 0.0
    %1817 = vmatprep.subr.mxu0 0.0
    %1818 = vmatpush1.msra.mxu0 0.0
    %1819 = vmatprep.subr.mxu0 0.0
    %1820 = vmatpush1.msra.mxu0 0.0
    %1821 = vmatprep.subr.mxu0 0.0
    %1822 = vmatpush1.msra.mxu0 0.0
    %1823 = vmatprep.subr.mxu0 0.0
    %1824 = vmatpush1.msra.mxu0 0.0
    %1825 = vmatprep.subr.mxu0 0.0
    %1826 = vmatpush1.msra.mxu0 0.0
    %1827 = vmatprep.subr.mxu0 0.0
    %1828 = vmatpush1.msra.mxu0 0.0
    %1829 = vmatprep.subr.mxu0 0.0
    %1830 = vmatpush1.msra.mxu0 %v588
    %1831 = vmatprep.subr.mxu0 0.0
    %1832 = vmatpush1.msra.mxu0 %v587
    %1833 = vmatprep.subr.mxu0 0.0
    %1834 = vmatpush1.msra.mxu0 %v586
    %1835 = vmatprep.subr.mxu0 0.0
    %1836 = vmatpush1.msra.mxu0 %v585
    %1837 = vmatprep.subr.mxu0 0.0
    %1838 = vmatpush2.msra.mxu0 0.0
    %1839 = vmatprep.subr.mxu0 0.0
    %1840 = vmatpush2.msra.mxu0 0.0
    %1841 = vmatprep.subr.mxu0 0.0
    %1842 = vmatpush2.msra.mxu0 0.0
    %1843 = vmatprep.subr.mxu0 0.0
    %1844 = vmatpush2.msra.mxu0 0.0
    %1845 = vmatprep.subr.mxu0 0.0
    %1846 = vmatpush2.msra.mxu0 0.0
    %1847 = vmatprep.subr.mxu0 0.0
    %1848 = vmatpush2.msra.mxu0 0.0
    %1849 = vmatprep.subr.mxu0 0.0
    %1850 = vmatpush2.msra.mxu0 0.0
    %1851 = vmatprep.subr.mxu0 0.0
    %1852 = vmatpush2.msra.mxu0 0.0
    %1853 = vmatprep.subr.mxu0 0.0
    %1854 = vmatpush2.msra.mxu0 0.0
    %1855 = vmatprep.subr.mxu0 0.0
    %1856 = vmatpush2.msra.mxu0 0.0
    %1857 = vmatprep.subr.mxu0 0.0
    %1858 = vmatpush2.msra.mxu0 0.0
    %1859 = vmatprep.subr.mxu0 0.0
    %1860 = vmatpush2.msra.mxu0 0.0
    %1861 = vmatprep.subr.mxu0 0.0
    %1862 = vmatpush2.msra.mxu0 0.0
    %1863 = vmatprep.subr.mxu0 0.0
    %1864 = vmatpush2.msra.mxu0 0.0
    %1865 = vmatprep.subr.mxu0 0.0
    %1866 = vmatpush2.msra.mxu0 0.0
    %1867 = vmatprep.subr.mxu0 0.0
    %1868 = vmatpush2.msra.mxu0 0.0
    %1869 = vmatprep.mubr.f32.mxu0 0.0
    %1870 = vmatmul.mubr.f32.gmra.mxu0 %v1803
    %v1871 = vpop.f32.mrf.mxu0
    %v1872 = vadd.f32 0.0, %v1871
    %v1873 = vpop.f32.mrf.mxu0
    %1874 = vdwg.mxu0
    %1875 = vmatprep.subr.mxu0 0.0
    %1876 = vmatpush1.msra.mxu0 0.0
    %1877 = vmatprep.subr.mxu0 0.0
    %1878 = vmatpush1.msra.mxu0 0.0
    %1879 = vmatprep.subr.mxu0 0.0
    %1880 = vmatpush1.msra.mxu0 0.0
    %1881 = vmatprep.subr.mxu0 0.0
    %1882 = vmatpush1.msra.mxu0 0.0
    %1883 = vmatprep.subr.mxu0 0.0
    %1884 = vmatpush1.msra.mxu0 0.0
    %1885 = vmatprep.subr.mxu0 0.0
    %1886 = vmatpush1.msra.mxu0 0.0
    %1887 = vmatprep.subr.mxu0 0.0
    %1888 = vmatpush1.msra.mxu0 0.0
    %1889 = vmatprep.subr.mxu0 0.0
    %1890 = vmatpush1.msra.mxu0 0.0
    %1891 = vmatprep.subr.mxu0 0.0
    %1892 = vmatpush1.msra.mxu0 0.0
    %1893 = vmatprep.subr.mxu0 0.0
    %1894 = vmatpush1.msra.mxu0 0.0
    %1895 = vmatprep.subr.mxu0 0.0
    %1896 = vmatpush1.msra.mxu0 0.0
    %1897 = vmatprep.subr.mxu0 0.0
    %1898 = vmatpush1.msra.mxu0 0.0
    %1899 = vmatprep.subr.mxu0 0.0
    %1900 = vmatpush1.msra.mxu0 %v592
    %1901 = vmatprep.subr.mxu0 0.0
    %1902 = vmatpush1.msra.mxu0 %v591
    %1903 = vmatprep.subr.mxu0 0.0
    %1904 = vmatpush1.msra.mxu0 %v590
    %1905 = vmatprep.subr.mxu0 0.0
    %1906 = vmatpush1.msra.mxu0 %v589
    %1907 = vmatprep.subr.mxu0 0.0
    %1908 = vmatpush2.msra.mxu0 0.0
    %1909 = vmatprep.subr.mxu0 0.0
    %1910 = vmatpush2.msra.mxu0 0.0
    %1911 = vmatprep.subr.mxu0 0.0
    %1912 = vmatpush2.msra.mxu0 0.0
    %1913 = vmatprep.subr.mxu0 0.0
    %1914 = vmatpush2.msra.mxu0 0.0
    %1915 = vmatprep.subr.mxu0 0.0
    %1916 = vmatpush2.msra.mxu0 0.0
    %1917 = vmatprep.subr.mxu0 0.0
    %1918 = vmatpush2.msra.mxu0 0.0
    %1919 = vmatprep.subr.mxu0 0.0
    %1920 = vmatpush2.msra.mxu0 0.0
    %1921 = vmatprep.subr.mxu0 0.0
    %1922 = vmatpush2.msra.mxu0 0.0
    %1923 = vmatprep.subr.mxu0 0.0
    %1924 = vmatpush2.msra.mxu0 0.0
    %1925 = vmatprep.subr.mxu0 0.0
    %1926 = vmatpush2.msra.mxu0 0.0
    %1927 = vmatprep.subr.mxu0 0.0
    %1928 = vmatpush2.msra.mxu0 0.0
    %1929 = vmatprep.subr.mxu0 0.0
    %1930 = vmatpush2.msra.mxu0 0.0
    %1931 = vmatprep.subr.mxu0 0.0
    %1932 = vmatpush2.msra.mxu0 0.0
    %1933 = vmatprep.subr.mxu0 0.0
    %1934 = vmatpush2.msra.mxu0 0.0
    %1935 = vmatprep.subr.mxu0 0.0
    %1936 = vmatpush2.msra.mxu0 0.0
    %1937 = vmatprep.subr.mxu0 0.0
    %1938 = vmatpush2.msra.mxu0 0.0
    %1939 = vmatprep.mubr.f32.mxu0 0.0
    %1940 = vmatmul.mubr.f32.gmra.mxu0 %v1803
    %v1941 = vpop.f32.mrf.mxu0
    %v1942 = vadd.f32 0.0, %v1941
    %v1943 = vpop.f32.mrf.mxu0
    %1944 = vdwg.mxu0
    %1945 = vmatprep.subr.mxu0 0.0
    %1946 = vmatpush1.msra.mxu0 0.0
    %1947 = vmatprep.subr.mxu0 0.0
    %1948 = vmatpush1.msra.mxu0 0.0
    %1949 = vmatprep.subr.mxu0 0.0
    %1950 = vmatpush1.msra.mxu0 0.0
    %1951 = vmatprep.subr.mxu0 0.0
    %1952 = vmatpush1.msra.mxu0 0.0
    %1953 = vmatprep.subr.mxu0 0.0
    %1954 = vmatpush1.msra.mxu0 0.0
    %1955 = vmatprep.subr.mxu0 0.0
    %1956 = vmatpush1.msra.mxu0 0.0
    %1957 = vmatprep.subr.mxu0 0.0
    %1958 = vmatpush1.msra.mxu0 0.0
    %1959 = vmatprep.subr.mxu0 0.0
    %1960 = vmatpush1.msra.mxu0 0.0
    %1961 = vmatprep.subr.mxu0 0.0
    %1962 = vmatpush1.msra.mxu0 0.0
    %1963 = vmatprep.subr.mxu0 0.0
    %1964 = vmatpush1.msra.mxu0 0.0
    %1965 = vmatprep.subr.mxu0 0.0
    %1966 = vmatpush1.msra.mxu0 0.0
    %1967 = vmatprep.subr.mxu0 0.0
    %1968 = vmatpush1.msra.mxu0 0.0
    %1969 = vmatprep.subr.mxu0 0.0
    %1970 = vmatpush1.msra.mxu0 %v596
    %1971 = vmatprep.subr.mxu0 0.0
    %1972 = vmatpush1.msra.mxu0 %v595
    %1973 = vmatprep.subr.mxu0 0.0
    %1974 = vmatpush1.msra.mxu0 %v594
    %1975 = vmatprep.subr.mxu0 0.0
    %1976 = vmatpush1.msra.mxu0 %v593
    %1977 = vmatprep.subr.mxu0 0.0
    %1978 = vmatpush2.msra.mxu0 0.0
    %1979 = vmatprep.subr.mxu0 0.0
    %1980 = vmatpush2.msra.mxu0 0.0
    %1981 = vmatprep.subr.mxu0 0.0
    %1982 = vmatpush2.msra.mxu0 0.0
    %1983 = vmatprep.subr.mxu0 0.0
    %1984 = vmatpush2.msra.mxu0 0.0
    %1985 = vmatprep.subr.mxu0 0.0
    %1986 = vmatpush2.msra.mxu0 0.0
    %1987 = vmatprep.subr.mxu0 0.0
    %1988 = vmatpush2.msra.mxu0 0.0
    %1989 = vmatprep.subr.mxu0 0.0
    %1990 = vmatpush2.msra.mxu0 0.0
    %1991 = vmatprep.subr.mxu0 0.0
    %1992 = vmatpush2.msra.mxu0 0.0
    %1993 = vmatprep.subr.mxu0 0.0
    %1994 = vmatpush2.msra.mxu0 0.0
    %1995 = vmatprep.subr.mxu0 0.0
    %1996 = vmatpush2.msra.mxu0 0.0
    %1997 = vmatprep.subr.mxu0 0.0
    %1998 = vmatpush2.msra.mxu0 0.0
    %1999 = vmatprep.subr.mxu0 0.0
    %2000 = vmatpush2.msra.mxu0 0.0
    %2001 = vmatprep.subr.mxu0 0.0
    %2002 = vmatpush2.msra.mxu0 0.0
    %2003 = vmatprep.subr.mxu0 0.0
    %2004 = vmatpush2.msra.mxu0 0.0
    %2005 = vmatprep.subr.mxu0 0.0
    %2006 = vmatpush2.msra.mxu0 0.0
    %2007 = vmatprep.subr.mxu0 0.0
    %2008 = vmatpush2.msra.mxu0 0.0
    %2009 = vmatprep.mubr.f32.mxu0 0.0
    %2010 = vmatmul.mubr.f32.gmra.mxu0 %v1803
    %v2011 = vpop.f32.mrf.mxu0
    %v2012 = vadd.f32 %v747, %v2011
    %v2013 = vpop.f32.mrf.mxu0
    %2014 = vdwg.mxu0
    %v2016 = vrot.slane %v1872, 4
    %v2018 = vadd.f32 %v379, %v2016
    %v2019 = vxor.u32 %v2018, 2147483648
    %v2020 = vmul.f32 %v2019, 1.442695
    %v2021 = vpow.pop %v2020
    %v2022 = vadd.f32 %v2021, 1.0
    %v2023 = vrcp.pop %v2022
    %v2024 = vmul.f32 1.0, %v2023
    %v2026 = vrot.slane %v1942, 4
    %v2028 = vadd.f32 %v478, %v2026
    %v2029 = vxor.u32 %v2028, 2147483648
    %v2030 = vmul.f32 %v2029, 1.442695
    %v2031 = vpow.pop %v2030
    %v2032 = vadd.f32 %v2031, 1.0
    %v2033 = vrcp.pop %v2032
    %v2034 = vmul.f32 1.0, %v2033
    %v2036 = vrot.slane %v2012, 4
    %v2038 = vmul.f32 %v2024, %v2036
    %v2039 = vadd.f32 %v577, %v2038
    %v2040 = vtanh.pop %v2039
    %v2041 = vsub.f32 1.0, %v2034
    %v2042 = vmul.f32 %v2041, %v2040
    %v2043 = vrot.slane %v1801, 4
    %v2045 = vmul.f32 %v2034, %v2043
    %v2046 = vadd.f32 %v2042, %v2045
    %v2048 = vrot.slane %v2046, 4
    %v2049 = vsel %vm599, %v2048, 0
    %2051 = vmatprep.subr.mxu0 0.0
    %2052 = vmatpush1.msra.mxu0 0.0
    %2053 = vmatprep.subr.mxu0 0.0
    %2054 = vmatpush1.msra.mxu0 0.0
    %2055 = vmatprep.subr.mxu0 0.0
    %2056 = vmatpush1.msra.mxu0 0.0
    %2057 = vmatprep.subr.mxu0 0.0
    %2058 = vmatpush1.msra.mxu0 0.0
    %2059 = vmatprep.subr.mxu0 0.0
    %2060 = vmatpush1.msra.mxu0 0.0
    %2061 = vmatprep.subr.mxu0 0.0
    %2062 = vmatpush1.msra.mxu0 0.0
    %2063 = vmatprep.subr.mxu0 0.0
    %2064 = vmatpush1.msra.mxu0 0.0
    %2065 = vmatprep.subr.mxu0 0.0
    %2066 = vmatpush1.msra.mxu0 0.0
    %2067 = vmatprep.subr.mxu0 0.0
    %2068 = vmatpush1.msra.mxu0 0.0
    %2069 = vmatprep.subr.mxu0 0.0
    %2070 = vmatpush1.msra.mxu0 0.0
    %2071 = vmatprep.subr.mxu0 0.0
    %2072 = vmatpush1.msra.mxu0 0.0
    %2073 = vmatprep.subr.mxu0 0.0
    %2074 = vmatpush1.msra.mxu0 0.0
    %2075 = vmatprep.subr.mxu0 0.0
    %2076 = vmatpush1.msra.mxu0 %v588
    %2077 = vmatprep.subr.mxu0 0.0
    %2078 = vmatpush1.msra.mxu0 %v587
    %2079 = vmatprep.subr.mxu0 0.0
    %2080 = vmatpush1.msra.mxu0 %v586
    %2081 = vmatprep.subr.mxu0 0.0
    %2082 = vmatpush1.msra.mxu0 %v585
    %2083 = vmatprep.subr.mxu0 0.0
    %2084 = vmatpush2.msra.mxu0 0.0
    %2085 = vmatprep.subr.mxu0 0.0
    %2086 = vmatpush2.msra.mxu0 0.0
    %2087 = vmatprep.subr.mxu0 0.0
    %2088 = vmatpush2.msra.mxu0 0.0
    %2089 = vmatprep.subr.mxu0 0.0
    %2090 = vmatpush2.msra.mxu0 0.0
    %2091 = vmatprep.subr.mxu0 0.0
    %2092 = vmatpush2.msra.mxu0 0.0
    %2093 = vmatprep.subr.mxu0 0.0
    %2094 = vmatpush2.msra.mxu0 0.0
    %2095 = vmatprep.subr.mxu0 0.0
    %2096 = vmatpush2.msra.mxu0 0.0
    %2097 = vmatprep.subr.mxu0 0.0
    %2098 = vmatpush2.msra.mxu0 0.0
    %2099 = vmatprep.subr.mxu0 0.0
    %2100 = vmatpush2.msra.mxu0 0.0
    %2101 = vmatprep.subr.mxu0 0.0
    %2102 = vmatpush2.msra.mxu0 0.0
    %2103 = vmatprep.subr.mxu0 0.0
    %2104 = vmatpush2.msra.mxu0 0.0
    %2105 = vmatprep.subr.mxu0 0.0
    %2106 = vmatpush2.msra.mxu0 0.0
    %2107 = vmatprep.subr.mxu0 0.0
    %2108 = vmatpush2.msra.mxu0 0.0
    %2109 = vmatprep.subr.mxu0 0.0
    %2110 = vmatpush2.msra.mxu0 0.0
    %2111 = vmatprep.subr.mxu0 0.0
    %2112 = vmatpush2.msra.mxu0 0.0
    %2113 = vmatprep.subr.mxu0 0.0
    %2114 = vmatpush2.msra.mxu0 0.0
    %2115 = vmatprep.mubr.f32.mxu0 0.0
    %2116 = vmatmul.mubr.f32.gmra.mxu0 %v2049
    %v2117 = vpop.f32.mrf.mxu0
    %v2118 = vadd.f32 0.0, %v2117
    %v2119 = vpop.f32.mrf.mxu0
    %2120 = vdwg.mxu0
    %2121 = vmatprep.subr.mxu0 0.0
    %2122 = vmatpush1.msra.mxu0 0.0
    %2123 = vmatprep.subr.mxu0 0.0
    %2124 = vmatpush1.msra.mxu0 0.0
    %2125 = vmatprep.subr.mxu0 0.0
    %2126 = vmatpush1.msra.mxu0 0.0
    %2127 = vmatprep.subr.mxu0 0.0
    %2128 = vmatpush1.msra.mxu0 0.0
    %2129 = vmatprep.subr.mxu0 0.0
    %2130 = vmatpush1.msra.mxu0 0.0
    %2131 = vmatprep.subr.mxu0 0.0
    %2132 = vmatpush1.msra.mxu0 0.0
    %2133 = vmatprep.subr.mxu0 0.0
    %2134 = vmatpush1.msra.mxu0 0.0
    %2135 = vmatprep.subr.mxu0 0.0
    %2136 = vmatpush1.msra.mxu0 0.0
    %2137 = vmatprep.subr.mxu0 0.0
    %2138 = vmatpush1.msra.mxu0 0.0
    %2139 = vmatprep.subr.mxu0 0.0
    %2140 = vmatpush1.msra.mxu0 0.0
    %2141 = vmatprep.subr.mxu0 0.0
    %2142 = vmatpush1.msra.mxu0 0.0
    %2143 = vmatprep.subr.mxu0 0.0
    %2144 = vmatpush1.msra.mxu0 0.0
    %2145 = vmatprep.subr.mxu0 0.0
    %2146 = vmatpush1.msra.mxu0 %v592
    %2147 = vmatprep.subr.mxu0 0.0
    %2148 = vmatpush1.msra.mxu0 %v591
    %2149 = vmatprep.subr.mxu0 0.0
    %2150 = vmatpush1.msra.mxu0 %v590
    %2151 = vmatprep.subr.mxu0 0.0
    %2152 = vmatpush1.msra.mxu0 %v589
    %2153 = vmatprep.subr.mxu0 0.0
    %2154 = vmatpush2.msra.mxu0 0.0
    %2155 = vmatprep.subr.mxu0 0.0
    %2156 = vmatpush2.msra.mxu0 0.0
    %2157 = vmatprep.subr.mxu0 0.0
    %2158 = vmatpush2.msra.mxu0 0.0
    %2159 = vmatprep.subr.mxu0 0.0
    %2160 = vmatpush2.msra.mxu0 0.0
    %2161 = vmatprep.subr.mxu0 0.0
    %2162 = vmatpush2.msra.mxu0 0.0
    %2163 = vmatprep.subr.mxu0 0.0
    %2164 = vmatpush2.msra.mxu0 0.0
    %2165 = vmatprep.subr.mxu0 0.0
    %2166 = vmatpush2.msra.mxu0 0.0
    %2167 = vmatprep.subr.mxu0 0.0
    %2168 = vmatpush2.msra.mxu0 0.0
    %2169 = vmatprep.subr.mxu0 0.0
    %2170 = vmatpush2.msra.mxu0 0.0
    %2171 = vmatprep.subr.mxu0 0.0
    %2172 = vmatpush2.msra.mxu0 0.0
    %2173 = vmatprep.subr.mxu0 0.0
    %2174 = vmatpush2.msra.mxu0 0.0
    %2175 = vmatprep.subr.mxu0 0.0
    %2176 = vmatpush2.msra.mxu0 0.0
    %2177 = vmatprep.subr.mxu0 0.0
    %2178 = vmatpush2.msra.mxu0 0.0
    %2179 = vmatprep.subr.mxu0 0.0
    %2180 = vmatpush2.msra.mxu0 0.0
    %2181 = vmatprep.subr.mxu0 0.0
    %2182 = vmatpush2.msra.mxu0 0.0
    %2183 = vmatprep.subr.mxu0 0.0
    %2184 = vmatpush2.msra.mxu0 0.0
    %2185 = vmatprep.mubr.f32.mxu0 0.0
    %2186 = vmatmul.mubr.f32.gmra.mxu0 %v2049
    %v2187 = vpop.f32.mrf.mxu0
    %v2188 = vadd.f32 0.0, %v2187
    %v2189 = vpop.f32.mrf.mxu0
    %2190 = vdwg.mxu0
    %2191 = vmatprep.subr.mxu0 0.0
    %2192 = vmatpush1.msra.mxu0 0.0
    %2193 = vmatprep.subr.mxu0 0.0
    %2194 = vmatpush1.msra.mxu0 0.0
    %2195 = vmatprep.subr.mxu0 0.0
    %2196 = vmatpush1.msra.mxu0 0.0
    %2197 = vmatprep.subr.mxu0 0.0
    %2198 = vmatpush1.msra.mxu0 0.0
    %2199 = vmatprep.subr.mxu0 0.0
    %2200 = vmatpush1.msra.mxu0 0.0
    %2201 = vmatprep.subr.mxu0 0.0
    %2202 = vmatpush1.msra.mxu0 0.0
    %2203 = vmatprep.subr.mxu0 0.0
    %2204 = vmatpush1.msra.mxu0 0.0
    %2205 = vmatprep.subr.mxu0 0.0
    %2206 = vmatpush1.msra.mxu0 0.0
    %2207 = vmatprep.subr.mxu0 0.0
    %2208 = vmatpush1.msra.mxu0 0.0
    %2209 = vmatprep.subr.mxu0 0.0
    %2210 = vmatpush1.msra.mxu0 0.0
    %2211 = vmatprep.subr.mxu0 0.0
    %2212 = vmatpush1.msra.mxu0 0.0
    %2213 = vmatprep.subr.mxu0 0.0
    %2214 = vmatpush1.msra.mxu0 0.0
    %2215 = vmatprep.subr.mxu0 0.0
    %2216 = vmatpush1.msra.mxu0 %v596
    %2217 = vmatprep.subr.mxu0 0.0
    %2218 = vmatpush1.msra.mxu0 %v595
    %2219 = vmatprep.subr.mxu0 0.0
    %2220 = vmatpush1.msra.mxu0 %v594
    %2221 = vmatprep.subr.mxu0 0.0
    %2222 = vmatpush1.msra.mxu0 %v593
    %2223 = vmatprep.subr.mxu0 0.0
    %2224 = vmatpush2.msra.mxu0 0.0
    %2225 = vmatprep.subr.mxu0 0.0
    %2226 = vmatpush2.msra.mxu0 0.0
    %2227 = vmatprep.subr.mxu0 0.0
    %2228 = vmatpush2.msra.mxu0 0.0
    %2229 = vmatprep.subr.mxu0 0.0
    %2230 = vmatpush2.msra.mxu0 0.0
    %2231 = vmatprep.subr.mxu0 0.0
    %2232 = vmatpush2.msra.mxu0 0.0
    %2233 = vmatprep.subr.mxu0 0.0
    %2234 = vmatpush2.msra.mxu0 0.0
    %2235 = vmatprep.subr.mxu0 0.0
    %2236 = vmatpush2.msra.mxu0 0.0
    %2237 = vmatprep.subr.mxu0 0.0
    %2238 = vmatpush2.msra.mxu0 0.0
    %2239 = vmatprep.subr.mxu0 0.0
    %2240 = vmatpush2.msra.mxu0 0.0
    %2241 = vmatprep.subr.mxu0 0.0
    %2242 = vmatpush2.msra.mxu0 0.0
    %2243 = vmatprep.subr.mxu0 0.0
    %2244 = vmatpush2.msra.mxu0 0.0
    %2245 = vmatprep.subr.mxu0 0.0
    %2246 = vmatpush2.msra.mxu0 0.0
    %2247 = vmatprep.subr.mxu0 0.0
    %2248 = vmatpush2.msra.mxu0 0.0
    %2249 = vmatprep.subr.mxu0 0.0
    %2250 = vmatpush2.msra.mxu0 0.0
    %2251 = vmatprep.subr.mxu0 0.0
    %2252 = vmatpush2.msra.mxu0 0.0
    %2253 = vmatprep.subr.mxu0 0.0
    %2254 = vmatpush2.msra.mxu0 0.0
    %2255 = vmatprep.mubr.f32.mxu0 0.0
    %2256 = vmatmul.mubr.f32.gmra.mxu0 %v2049
    %v2257 = vpop.f32.mrf.mxu0
    %v2258 = vadd.f32 %v747, %v2257
    %v2259 = vpop.f32.mrf.mxu0
    %2260 = vdwg.mxu0
    %v2261 = vadd.f32 %v384, %v2118
    %v2262 = vxor.u32 %v2261, 2147483648
    %v2263 = vmul.f32 %v2262, 1.442695
    %v2264 = vpow.pop %v2263
    %v2265 = vadd.f32 %v2264, 1.0
    %v2266 = vrcp.pop %v2265
    %v2267 = vmul.f32 1.0, %v2266
    %v2268 = vadd.f32 %v483, %v2188
    %v2269 = vxor.u32 %v2268, 2147483648
    %v2270 = vmul.f32 %v2269, 1.442695
    %v2271 = vpow.pop %v2270
    %v2272 = vadd.f32 %v2271, 1.0
    %v2273 = vrcp.pop %v2272
    %v2274 = vmul.f32 1.0, %v2273
    %v2275 = vmul.f32 %v2267, %v2258
    %v2276 = vadd.f32 %v582, %v2275
    %v2277 = vtanh.pop %v2276
    %v2278 = vsub.f32 1.0, %v2274
    %v2279 = vmul.f32 %v2278, %v2277
    %v2281 = vmul.f32 %v2274, %v2048
    %v2282 = vadd.f32 %v2279, %v2281
    %v2284 = vsel %vm599, %v2282, 0
    %2286 = vmatprep.subr.mxu0 0.0
    %2287 = vmatpush1.msra.mxu0 0.0
    %2288 = vmatprep.subr.mxu0 0.0
    %2289 = vmatpush1.msra.mxu0 0.0
    %2290 = vmatprep.subr.mxu0 0.0
    %2291 = vmatpush1.msra.mxu0 0.0
    %2292 = vmatprep.subr.mxu0 0.0
    %2293 = vmatpush1.msra.mxu0 0.0
    %2294 = vmatprep.subr.mxu0 0.0
    %2295 = vmatpush1.msra.mxu0 0.0
    %2296 = vmatprep.subr.mxu0 0.0
    %2297 = vmatpush1.msra.mxu0 0.0
    %2298 = vmatprep.subr.mxu0 0.0
    %2299 = vmatpush1.msra.mxu0 0.0
    %2300 = vmatprep.subr.mxu0 0.0
    %2301 = vmatpush1.msra.mxu0 0.0
    %2302 = vmatprep.subr.mxu0 0.0
    %2303 = vmatpush1.msra.mxu0 0.0
    %2304 = vmatprep.subr.mxu0 0.0
    %2305 = vmatpush1.msra.mxu0 0.0
    %2306 = vmatprep.subr.mxu0 0.0
    %2307 = vmatpush1.msra.mxu0 0.0
    %2308 = vmatprep.subr.mxu0 0.0
    %2309 = vmatpush1.msra.mxu0 0.0
    %2310 = vmatprep.subr.mxu0 0.0
    %2311 = vmatpush1.msra.mxu0 %v588
    %2312 = vmatprep.subr.mxu0 0.0
    %2313 = vmatpush1.msra.mxu0 %v587
    %2314 = vmatprep.subr.mxu0 0.0
    %2315 = vmatpush1.msra.mxu0 %v586
    %2316 = vmatprep.subr.mxu0 0.0
    %2317 = vmatpush1.msra.mxu0 %v585
    %2318 = vmatprep.subr.mxu0 0.0
    %2319 = vmatpush2.msra.mxu0 0.0
    %2320 = vmatprep.subr.mxu0 0.0
    %2321 = vmatpush2.msra.mxu0 0.0
    %2322 = vmatprep.subr.mxu0 0.0
    %2323 = vmatpush2.msra.mxu0 0.0
    %2324 = vmatprep.subr.mxu0 0.0
    %2325 = vmatpush2.msra.mxu0 0.0
    %2326 = vmatprep.subr.mxu0 0.0
    %2327 = vmatpush2.msra.mxu0 0.0
    %2328 = vmatprep.subr.mxu0 0.0
    %2329 = vmatpush2.msra.mxu0 0.0
    %2330 = vmatprep.subr.mxu0 0.0
    %2331 = vmatpush2.msra.mxu0 0.0
    %2332 = vmatprep.subr.mxu0 0.0
    %2333 = vmatpush2.msra.mxu0 0.0
    %2334 = vmatprep.subr.mxu0 0.0
    %2335 = vmatpush2.msra.mxu0 0.0
    %2336 = vmatprep.subr.mxu0 0.0
    %2337 = vmatpush2.msra.mxu0 0.0
    %2338 = vmatprep.subr.mxu0 0.0
    %2339 = vmatpush2.msra.mxu0 0.0
    %2340 = vmatprep.subr.mxu0 0.0
    %2341 = vmatpush2.msra.mxu0 0.0
    %2342 = vmatprep.subr.mxu0 0.0
    %2343 = vmatpush2.msra.mxu0 0.0
    %2344 = vmatprep.subr.mxu0 0.0
    %2345 = vmatpush2.msra.mxu0 0.0
    %2346 = vmatprep.subr.mxu0 0.0
    %2347 = vmatpush2.msra.mxu0 0.0
    %2348 = vmatprep.subr.mxu0 0.0
    %2349 = vmatpush2.msra.mxu0 0.0
    %2350 = vmatprep.mubr.f32.mxu0 0.0
    %2351 = vmatmul.mubr.f32.gmra.mxu0 %v2284
    %v2352 = vpop.f32.mrf.mxu0
    %v2353 = vadd.f32 0.0, %v2352
    %v2354 = vpop.f32.mrf.mxu0
    %2355 = vdwg.mxu0
    %2356 = vmatprep.subr.mxu0 0.0
    %2357 = vmatpush1.msra.mxu0 0.0
    %2358 = vmatprep.subr.mxu0 0.0
    %2359 = vmatpush1.msra.mxu0 0.0
    %2360 = vmatprep.subr.mxu0 0.0
    %2361 = vmatpush1.msra.mxu0 0.0
    %2362 = vmatprep.subr.mxu0 0.0
    %2363 = vmatpush1.msra.mxu0 0.0
    %2364 = vmatprep.subr.mxu0 0.0
    %2365 = vmatpush1.msra.mxu0 0.0
    %2366 = vmatprep.subr.mxu0 0.0
    %2367 = vmatpush1.msra.mxu0 0.0
    %2368 = vmatprep.subr.mxu0 0.0
    %2369 = vmatpush1.msra.mxu0 0.0
    %2370 = vmatprep.subr.mxu0 0.0
    %2371 = vmatpush1.msra.mxu0 0.0
    %2372 = vmatprep.subr.mxu0 0.0
    %2373 = vmatpush1.msra.mxu0 0.0
    %2374 = vmatprep.subr.mxu0 0.0
    %2375 = vmatpush1.msra.mxu0 0.0
    %2376 = vmatprep.subr.mxu0 0.0
    %2377 = vmatpush1.msra.mxu0 0.0
    %2378 = vmatprep.subr.mxu0 0.0
    %2379 = vmatpush1.msra.mxu0 0.0
    %2380 = vmatprep.subr.mxu0 0.0
    %2381 = vmatpush1.msra.mxu0 %v592
    %2382 = vmatprep.subr.mxu0 0.0
    %2383 = vmatpush1.msra.mxu0 %v591
    %2384 = vmatprep.subr.mxu0 0.0
    %2385 = vmatpush1.msra.mxu0 %v590
    %2386 = vmatprep.subr.mxu0 0.0
    %2387 = vmatpush1.msra.mxu0 %v589
    %2388 = vmatprep.subr.mxu0 0.0
    %2389 = vmatpush2.msra.mxu0 0.0
    %2390 = vmatprep.subr.mxu0 0.0
    %2391 = vmatpush2.msra.mxu0 0.0
    %2392 = vmatprep.subr.mxu0 0.0
    %2393 = vmatpush2.msra.mxu0 0.0
    %2394 = vmatprep.subr.mxu0 0.0
    %2395 = vmatpush2.msra.mxu0 0.0
    %2396 = vmatprep.subr.mxu0 0.0
    %2397 = vmatpush2.msra.mxu0 0.0
    %2398 = vmatprep.subr.mxu0 0.0
    %2399 = vmatpush2.msra.mxu0 0.0
    %2400 = vmatprep.subr.mxu0 0.0
    %2401 = vmatpush2.msra.mxu0 0.0
    %2402 = vmatprep.subr.mxu0 0.0
    %2403 = vmatpush2.msra.mxu0 0.0
    %2404 = vmatprep.subr.mxu0 0.0
    %2405 = vmatpush2.msra.mxu0 0.0
    %2406 = vmatprep.subr.mxu0 0.0
    %2407 = vmatpush2.msra.mxu0 0.0
    %2408 = vmatprep.subr.mxu0 0.0
    %2409 = vmatpush2.msra.mxu0 0.0
    %2410 = vmatprep.subr.mxu0 0.0
    %2411 = vmatpush2.msra.mxu0 0.0
    %2412 = vmatprep.subr.mxu0 0.0
    %2413 = vmatpush2.msra.mxu0 0.0
    %2414 = vmatprep.subr.mxu0 0.0
    %2415 = vmatpush2.msra.mxu0 0.0
    %2416 = vmatprep.subr.mxu0 0.0
    %2417 = vmatpush2.msra.mxu0 0.0
    %2418 = vmatprep.subr.mxu0 0.0
    %2419 = vmatpush2.msra.mxu0 0.0
    %2420 = vmatprep.mubr.f32.mxu0 0.0
    %2421 = vmatmul.mubr.f32.gmra.mxu0 %v2284
    %v2422 = vpop.f32.mrf.mxu0
    %v2423 = vadd.f32 0.0, %v2422
    %v2424 = vpop.f32.mrf.mxu0
    %2425 = vdwg.mxu0
    %2426 = vmatprep.subr.mxu0 0.0
    %2427 = vmatpush1.msra.mxu0 0.0
    %2428 = vmatprep.subr.mxu0 0.0
    %2429 = vmatpush1.msra.mxu0 0.0
    %2430 = vmatprep.subr.mxu0 0.0
    %2431 = vmatpush1.msra.mxu0 0.0
    %2432 = vmatprep.subr.mxu0 0.0
    %2433 = vmatpush1.msra.mxu0 0.0
    %2434 = vmatprep.subr.mxu0 0.0
    %2435 = vmatpush1.msra.mxu0 0.0
    %2436 = vmatprep.subr.mxu0 0.0
    %2437 = vmatpush1.msra.mxu0 0.0
    %2438 = vmatprep.subr.mxu0 0.0
    %2439 = vmatpush1.msra.mxu0 0.0
    %2440 = vmatprep.subr.mxu0 0.0
    %2441 = vmatpush1.msra.mxu0 0.0
    %2442 = vmatprep.subr.mxu0 0.0
    %2443 = vmatpush1.msra.mxu0 0.0
    %2444 = vmatprep.subr.mxu0 0.0
    %2445 = vmatpush1.msra.mxu0 0.0
    %2446 = vmatprep.subr.mxu0 0.0
    %2447 = vmatpush1.msra.mxu0 0.0
    %2448 = vmatprep.subr.mxu0 0.0
    %2449 = vmatpush1.msra.mxu0 0.0
    %2450 = vmatprep.subr.mxu0 0.0
    %2451 = vmatpush1.msra.mxu0 %v596
    %2452 = vmatprep.subr.mxu0 0.0
    %2453 = vmatpush1.msra.mxu0 %v595
    %2454 = vmatprep.subr.mxu0 0.0
    %2455 = vmatpush1.msra.mxu0 %v594
    %2456 = vmatprep.subr.mxu0 0.0
    %2457 = vmatpush1.msra.mxu0 %v593
    %2458 = vmatprep.subr.mxu0 0.0
    %2459 = vmatpush2.msra.mxu0 0.0
    %2460 = vmatprep.subr.mxu0 0.0
    %2461 = vmatpush2.msra.mxu0 0.0
    %2462 = vmatprep.subr.mxu0 0.0
    %2463 = vmatpush2.msra.mxu0 0.0
    %2464 = vmatprep.subr.mxu0 0.0
    %2465 = vmatpush2.msra.mxu0 0.0
    %2466 = vmatprep.subr.mxu0 0.0
    %2467 = vmatpush2.msra.mxu0 0.0
    %2468 = vmatprep.subr.mxu0 0.0
    %2469 = vmatpush2.msra.mxu0 0.0
    %2470 = vmatprep.subr.mxu0 0.0
    %2471 = vmatpush2.msra.mxu0 0.0
    %2472 = vmatprep.subr.mxu0 0.0
    %2473 = vmatpush2.msra.mxu0 0.0
    %2474 = vmatprep.subr.mxu0 0.0
    %2475 = vmatpush2.msra.mxu0 0.0
    %2476 = vmatprep.subr.mxu0 0.0
    %2477 = vmatpush2.msra.mxu0 0.0
    %2478 = vmatprep.subr.mxu0 0.0
    %2479 = vmatpush2.msra.mxu0 0.0
    %2480 = vmatprep.subr.mxu0 0.0
    %2481 = vmatpush2.msra.mxu0 0.0
    %2482 = vmatprep.subr.mxu0 0.0
    %2483 = vmatpush2.msra.mxu0 0.0
    %2484 = vmatprep.subr.mxu0 0.0
    %2485 = vmatpush2.msra.mxu0 0.0
    %2486 = vmatprep.subr.mxu0 0.0
    %2487 = vmatpush2.msra.mxu0 0.0
    %2488 = vmatprep.subr.mxu0 0.0
    %2489 = vmatpush2.msra.mxu0 0.0
    %2490 = vmatprep.mubr.f32.mxu0 0.0
    %2491 = vmatmul.mubr.f32.gmra.mxu0 %v2284
    %v2492 = vpop.f32.mrf.mxu0
    %v2493 = vadd.f32 %v747, %v2492
    %v2494 = vpop.f32.mrf.mxu0
    %2495 = vdwg.mxu0
    %v2497 = vrot.slane %v2353, 4
    %v2499 = vadd.f32 %v384, %v2497
    %v2500 = vxor.u32 %v2499, 2147483648
    %v2501 = vmul.f32 %v2500, 1.442695
    %v2502 = vpow.pop %v2501
    %v2503 = vadd.f32 %v2502, 1.0
    %v2504 = vrcp.pop %v2503
    %v2505 = vmul.f32 1.0, %v2504
    %v2507 = vrot.slane %v2423, 4
    %v2509 = vadd.f32 %v483, %v2507
    %v2510 = vxor.u32 %v2509, 2147483648
    %v2511 = vmul.f32 %v2510, 1.442695
    %v2512 = vpow.pop %v2511
    %v2513 = vadd.f32 %v2512, 1.0
    %v2514 = vrcp.pop %v2513
    %v2515 = vmul.f32 1.0, %v2514
    %v2517 = vrot.slane %v2493, 4
    %v2519 = vmul.f32 %v2505, %v2517
    %v2520 = vadd.f32 %v582, %v2519
    %v2521 = vtanh.pop %v2520
    %v2522 = vsub.f32 1.0, %v2515
    %v2523 = vmul.f32 %v2522, %v2521
    %v2524 = vrot.slane %v2282, 4
    %v2526 = vmul.f32 %v2515, %v2524
    %v2527 = vadd.f32 %v2523, %v2526
    %vm2528 = vcmask 261124
    %2529 = vst.msk [vmem:[#allocation25 - $0x4] sm:$0xf0] %vm2528, %v2527
    %v2530 = vsel %vm298, %v839, %v1084
    %v2531 = vsel %vm298, %v1320, %v1565
    %v2532 = vsel %vm298, %v1801, %v2046
    %v2533 = vsel %vm298, %v2282, %v2527
    %v2534 = vld [vmem:[#allocation16] sm:$0xff]
    %v2535 = vld [vmem:[#allocation16 + $0x8] sm:$0xff]
    %v2536 = vld [vmem:[#allocation16 + $0x10] sm:$0xff]
    %v2537 = vld [vmem:[#allocation16 + $0x18] sm:$0xff]
    %v2538 = vld [vmem:[%s18] sm:$0x1]
    %v2540 = vlaneseq
    %v2541 = vshrl.u32 %v2540, 7
    %v2542 = vsub.s32 0, %v2541
    %v2543 = vrot.slane %v2538, %v2542
    %v2546 = vsel %vm599, %v2530, 0
    %v2549 = vsel %vm599, %v2531, 0
    %v2552 = vsel %vm599, %v2532, 0
    %v2555 = vsel %vm599, %v2533, 0
    %2557 = vmatprep.subr.mxu0 0.0
    %2558 = vmatpush1.msra.mxu0 0.0
    %2559 = vmatprep.subr.mxu0 0.0
    %2560 = vmatpush1.msra.mxu0 0.0
    %2561 = vmatprep.subr.mxu0 0.0
    %2562 = vmatpush1.msra.mxu0 0.0
    %2563 = vmatprep.subr.mxu0 0.0
    %2564 = vmatpush1.msra.mxu0 0.0
    %2565 = vmatprep.subr.mxu0 0.0
    %2566 = vmatpush1.msra.mxu0 0.0
    %2567 = vmatprep.subr.mxu0 0.0
    %2568 = vmatpush1.msra.mxu0 0.0
    %2569 = vmatprep.subr.mxu0 0.0
    %2570 = vmatpush1.msra.mxu0 0.0
    %2571 = vmatprep.subr.mxu0 0.0
    %2572 = vmatpush1.msra.mxu0 0.0
    %2573 = vmatprep.subr.mxu0 0.0
    %2574 = vmatpush1.msra.mxu0 0.0
    %2575 = vmatprep.subr.mxu0 0.0
    %2576 = vmatpush1.msra.mxu0 0.0
    %2577 = vmatprep.subr.mxu0 0.0
    %2578 = vmatpush1.msra.mxu0 0.0
    %2579 = vmatprep.subr.mxu0 0.0
    %2580 = vmatpush1.msra.mxu0 0.0
    %2581 = vmatprep.subr.mxu0 0.0
    %2582 = vmatpush1.msra.mxu0 %v2537
    %2583 = vmatprep.subr.mxu0 0.0
    %2584 = vmatpush1.msra.mxu0 %v2536
    %2585 = vmatprep.subr.mxu0 0.0
    %2586 = vmatpush1.msra.mxu0 %v2535
    %2587 = vmatprep.subr.mxu0 0.0
    %2588 = vmatpush1.msra.mxu0 %v2534
    %2589 = vmatprep.subr.mxu0 0.0
    %2590 = vmatpush2.msra.mxu0 0.0
    %2591 = vmatprep.subr.mxu0 0.0
    %2592 = vmatpush2.msra.mxu0 0.0
    %2593 = vmatprep.subr.mxu0 0.0
    %2594 = vmatpush2.msra.mxu0 0.0
    %2595 = vmatprep.subr.mxu0 0.0
    %2596 = vmatpush2.msra.mxu0 0.0
    %2597 = vmatprep.subr.mxu0 0.0
    %2598 = vmatpush2.msra.mxu0 0.0
    %2599 = vmatprep.subr.mxu0 0.0
    %2600 = vmatpush2.msra.mxu0 0.0
    %2601 = vmatprep.subr.mxu0 0.0
    %2602 = vmatpush2.msra.mxu0 0.0
    %2603 = vmatprep.subr.mxu0 0.0
    %2604 = vmatpush2.msra.mxu0 0.0
    %2605 = vmatprep.subr.mxu0 0.0
    %2606 = vmatpush2.msra.mxu0 0.0
    %2607 = vmatprep.subr.mxu0 0.0
    %2608 = vmatpush2.msra.mxu0 0.0
    %2609 = vmatprep.subr.mxu0 0.0
    %2610 = vmatpush2.msra.mxu0 0.0
    %2611 = vmatprep.subr.mxu0 0.0
    %2612 = vmatpush2.msra.mxu0 0.0
    %2613 = vmatprep.subr.mxu0 0.0
    %2614 = vmatpush2.msra.mxu0 0.0
    %2615 = vmatprep.subr.mxu0 0.0
    %2616 = vmatpush2.msra.mxu0 0.0
    %2617 = vmatprep.subr.mxu0 0.0
    %2618 = vmatpush2.msra.mxu0 0.0
    %2619 = vmatprep.subr.mxu0 0.0
    %2620 = vmatpush2.msra.mxu0 0.0
    %2621 = vmatprep.mubr.f32.mxu0 0.0
    %2622 = vmatmul.mubr.f32.gmra.mxu0 %v2546
    %v2623 = vpop.f32.mrf.mxu0
    %v2624 = vadd.f32 %v2543, %v2623
    %v2625 = vpop.f32.mrf.mxu0
    %2626 = vmatprep.mubr.f32.mxu0 0.0
    %2627 = vmatmul.mubr.f32.gmra.mxu0 %v2549
    %v2628 = vpop.f32.mrf.mxu0
    %v2629 = vadd.f32 %v2543, %v2628
    %v2630 = vpop.f32.mrf.mxu0
    %2631 = vmatprep.mubr.f32.mxu0 0.0
    %2632 = vmatmul.mubr.f32.gmra.mxu0 %v2552
    %v2633 = vpop.f32.mrf.mxu0
    %v2634 = vadd.f32 %v2543, %v2633
    %v2635 = vpop.f32.mrf.mxu0
    %2636 = vmatprep.mubr.f32.mxu0 0.0
    %2637 = vmatmul.mubr.f32.gmra.mxu0 %v2555
    %v2638 = vpop.f32.mrf.mxu0
    %v2639 = vadd.f32 %v2543, %v2638
    %v2640 = vpop.f32.mrf.mxu0
    %2641 = vdwg.mxu0
    %v2642 = vld [vmem:[#allocation17] sm:$0xff]
    %v2643 = vld [vmem:[#allocation17 + $0x8] sm:$0xff]
    %v2644 = vld [vmem:[#allocation17 + $0x10] sm:$0xff]
    %v2645 = vld [vmem:[#allocation17 + $0x18] sm:$0xff]
    %v2646 = vld [vmem:[%s19] sm:$0x1]
    %v2648 = vlaneseq
    %v2649 = vshrl.u32 %v2648, 7
    %v2650 = vsub.s32 0, %v2649
    %v2651 = vrot.slane %v2646, %v2650
    %2653 = vmatprep.subr.mxu0 0.0
    %2654 = vmatpush1.msra.mxu0 0.0
    %2655 = vmatprep.subr.mxu0 0.0
    %2656 = vmatpush1.msra.mxu0 0.0
    %2657 = vmatprep.subr.mxu0 0.0
    %2658 = vmatpush1.msra.mxu0 0.0
    %2659 = vmatprep.subr.mxu0 0.0
    %2660 = vmatpush1.msra.mxu0 0.0
    %2661 = vmatprep.subr.mxu0 0.0
    %2662 = vmatpush1.msra.mxu0 0.0
    %2663 = vmatprep.subr.mxu0 0.0
    %2664 = vmatpush1.msra.mxu0 0.0
    %2665 = vmatprep.subr.mxu0 0.0
    %2666 = vmatpush1.msra.mxu0 0.0
    %2667 = vmatprep.subr.mxu0 0.0
    %2668 = vmatpush1.msra.mxu0 0.0
    %2669 = vmatprep.subr.mxu0 0.0
    %2670 = vmatpush1.msra.mxu0 0.0
    %2671 = vmatprep.subr.mxu0 0.0
    %2672 = vmatpush1.msra.mxu0 0.0
    %2673 = vmatprep.subr.mxu0 0.0
    %2674 = vmatpush1.msra.mxu0 0.0
    %2675 = vmatprep.subr.mxu0 0.0
    %2676 = vmatpush1.msra.mxu0 0.0
    %2677 = vmatprep.subr.mxu0 0.0
    %2678 = vmatpush1.msra.mxu0 %v2645
    %2679 = vmatprep.subr.mxu0 0.0
    %2680 = vmatpush1.msra.mxu0 %v2644
    %2681 = vmatprep.subr.mxu0 0.0
    %2682 = vmatpush1.msra.mxu0 %v2643
    %2683 = vmatprep.subr.mxu0 0.0
    %2684 = vmatpush1.msra.mxu0 %v2642
    %2685 = vmatprep.subr.mxu0 0.0
    %2686 = vmatpush2.msra.mxu0 0.0
    %2687 = vmatprep.subr.mxu0 0.0
    %2688 = vmatpush2.msra.mxu0 0.0
    %2689 = vmatprep.subr.mxu0 0.0
    %2690 = vmatpush2.msra.mxu0 0.0
    %2691 = vmatprep.subr.mxu0 0.0
    %2692 = vmatpush2.msra.mxu0 0.0
    %2693 = vmatprep.subr.mxu0 0.0
    %2694 = vmatpush2.msra.mxu0 0.0
    %2695 = vmatprep.subr.mxu0 0.0
    %2696 = vmatpush2.msra.mxu0 0.0
    %2697 = vmatprep.subr.mxu0 0.0
    %2698 = vmatpush2.msra.mxu0 0.0
    %2699 = vmatprep.subr.mxu0 0.0
    %2700 = vmatpush2.msra.mxu0 0.0
    %2701 = vmatprep.subr.mxu0 0.0
    %2702 = vmatpush2.msra.mxu0 0.0
    %2703 = vmatprep.subr.mxu0 0.0
    %2704 = vmatpush2.msra.mxu0 0.0
    %2705 = vmatprep.subr.mxu0 0.0
    %2706 = vmatpush2.msra.mxu0 0.0
    %2707 = vmatprep.subr.mxu0 0.0
    %2708 = vmatpush2.msra.mxu0 0.0
    %2709 = vmatprep.subr.mxu0 0.0
    %2710 = vmatpush2.msra.mxu0 0.0
    %2711 = vmatprep.subr.mxu0 0.0
    %2712 = vmatpush2.msra.mxu0 0.0
    %2713 = vmatprep.subr.mxu0 0.0
    %2714 = vmatpush2.msra.mxu0 0.0
    %2715 = vmatprep.subr.mxu0 0.0
    %2716 = vmatpush2.msra.mxu0 0.0
    %2717 = vmatprep.mubr.f32.mxu0 0.0
    %2718 = vmatmul.mubr.f32.gmra.mxu0 %v2546
    %v2719 = vpop.f32.mrf.mxu0
    %v2720 = vadd.f32 %v2651, %v2719
    %v2721 = vpop.f32.mrf.mxu0
    %2722 = vmatprep.mubr.f32.mxu0 0.0
    %2723 = vmatmul.mubr.f32.gmra.mxu0 %v2549
    %v2724 = vpop.f32.mrf.mxu0
    %v2725 = vadd.f32 %v2651, %v2724
    %v2726 = vpop.f32.mrf.mxu0
    %2727 = vmatprep.mubr.f32.mxu0 0.0
    %2728 = vmatmul.mubr.f32.gmra.mxu0 %v2552
    %v2729 = vpop.f32.mrf.mxu0
    %v2730 = vadd.f32 %v2651, %v2729
    %v2731 = vpop.f32.mrf.mxu0
    %2732 = vmatprep.mubr.f32.mxu0 0.0
    %2733 = vmatmul.mubr.f32.gmra.mxu0 %v2555
    %v2734 = vpop.f32.mrf.mxu0
    %v2735 = vadd.f32 %v2651, %v2734
    %v2736 = vpop.f32.mrf.mxu0
    %2737 = vdwg.mxu0
    %v2738 = vld [vmem:[#allocation19] sm:$0xff]
    %v2739 = vld [vmem:[#allocation19 + $0x8] sm:$0xff]
    %v2740 = vld [vmem:[#allocation19 + $0x10] sm:$0xff]
    %v2741 = vld [vmem:[#allocation19 + $0x18] sm:$0xff]
    %v2742 = vld [vmem:[%s20] sm:$0x1]
    %v2744 = vlaneseq
    %v2745 = vshrl.u32 %v2744, 7
    %v2746 = vsub.s32 0, %v2745
    %v2747 = vrot.slane %v2742, %v2746
    %2749 = vmatprep.subr.mxu0 0.0
    %2750 = vmatpush1.msra.mxu0 0.0
    %2751 = vmatprep.subr.mxu0 0.0
    %2752 = vmatpush1.msra.mxu0 0.0
    %2753 = vmatprep.subr.mxu0 0.0
    %2754 = vmatpush1.msra.mxu0 0.0
    %2755 = vmatprep.subr.mxu0 0.0
    %2756 = vmatpush1.msra.mxu0 0.0
    %2757 = vmatprep.subr.mxu0 0.0
    %2758 = vmatpush1.msra.mxu0 0.0
    %2759 = vmatprep.subr.mxu0 0.0
    %2760 = vmatpush1.msra.mxu0 0.0
    %2761 = vmatprep.subr.mxu0 0.0
    %2762 = vmatpush1.msra.mxu0 0.0
    %2763 = vmatprep.subr.mxu0 0.0
    %2764 = vmatpush1.msra.mxu0 0.0
    %2765 = vmatprep.subr.mxu0 0.0
    %2766 = vmatpush1.msra.mxu0 0.0
    %2767 = vmatprep.subr.mxu0 0.0
    %2768 = vmatpush1.msra.mxu0 0.0
    %2769 = vmatprep.subr.mxu0 0.0
    %2770 = vmatpush1.msra.mxu0 0.0
    %2771 = vmatprep.subr.mxu0 0.0
    %2772 = vmatpush1.msra.mxu0 0.0
    %2773 = vmatprep.subr.mxu0 0.0
    %2774 = vmatpush1.msra.mxu0 %v2741
    %2775 = vmatprep.subr.mxu0 0.0
    %2776 = vmatpush1.msra.mxu0 %v2740
    %2777 = vmatprep.subr.mxu0 0.0
    %2778 = vmatpush1.msra.mxu0 %v2739
    %2779 = vmatprep.subr.mxu0 0.0
    %2780 = vmatpush1.msra.mxu0 %v2738
    %2781 = vmatprep.subr.mxu0 0.0
    %2782 = vmatpush2.msra.mxu0 0.0
    %2783 = vmatprep.subr.mxu0 0.0
    %2784 = vmatpush2.msra.mxu0 0.0
    %2785 = vmatprep.subr.mxu0 0.0
    %2786 = vmatpush2.msra.mxu0 0.0
    %2787 = vmatprep.subr.mxu0 0.0
    %2788 = vmatpush2.msra.mxu0 0.0
    %2789 = vmatprep.subr.mxu0 0.0
    %2790 = vmatpush2.msra.mxu0 0.0
    %2791 = vmatprep.subr.mxu0 0.0
    %2792 = vmatpush2.msra.mxu0 0.0
    %2793 = vmatprep.subr.mxu0 0.0
    %2794 = vmatpush2.msra.mxu0 0.0
    %2795 = vmatprep.subr.mxu0 0.0
    %2796 = vmatpush2.msra.mxu0 0.0
    %2797 = vmatprep.subr.mxu0 0.0
    %2798 = vmatpush2.msra.mxu0 0.0
    %2799 = vmatprep.subr.mxu0 0.0
    %2800 = vmatpush2.msra.mxu0 0.0
    %2801 = vmatprep.subr.mxu0 0.0
    %2802 = vmatpush2.msra.mxu0 0.0
    %2803 = vmatprep.subr.mxu0 0.0
    %2804 = vmatpush2.msra.mxu0 0.0
    %2805 = vmatprep.subr.mxu0 0.0
    %2806 = vmatpush2.msra.mxu0 0.0
    %2807 = vmatprep.subr.mxu0 0.0
    %2808 = vmatpush2.msra.mxu0 0.0
    %2809 = vmatprep.subr.mxu0 0.0
    %2810 = vmatpush2.msra.mxu0 0.0
    %2811 = vmatprep.subr.mxu0 0.0
    %2812 = vmatpush2.msra.mxu0 0.0
    %2813 = vmatprep.mubr.f32.mxu0 0.0
    %2814 = vmatmul.mubr.f32.gmra.mxu0 %v2546
    %v2815 = vpop.f32.mrf.mxu0
    %v2816 = vadd.f32 %v2747, %v2815
    %v2817 = vpop.f32.mrf.mxu0
    %2818 = vmatprep.mubr.f32.mxu0 0.0
    %2819 = vmatmul.mubr.f32.gmra.mxu0 %v2549
    %v2820 = vpop.f32.mrf.mxu0
    %v2821 = vadd.f32 %v2747, %v2820
    %v2822 = vpop.f32.mrf.mxu0
    %2823 = vmatprep.mubr.f32.mxu0 0.0
    %2824 = vmatmul.mubr.f32.gmra.mxu0 %v2552
    %v2825 = vpop.f32.mrf.mxu0
    %v2826 = vadd.f32 %v2747, %v2825
    %v2827 = vpop.f32.mrf.mxu0
    %2828 = vmatprep.mubr.f32.mxu0 0.0
    %2829 = vmatmul.mubr.f32.gmra.mxu0 %v2555
    %v2830 = vpop.f32.mrf.mxu0
    %v2831 = vadd.f32 %v2747, %v2830
    %v2832 = vpop.f32.mrf.mxu0
    %2833 = vdwg.mxu0
    %v2834 = vld [vmem:[#allocation20] sm:$0xff]
    %v2835 = vld [vmem:[#allocation20 + $0x8] sm:$0xff]
    %v2836 = vld [vmem:[#allocation20 + $0x10] sm:$0xff]
    %v2837 = vld [vmem:[#allocation20 + $0x18] sm:$0xff]
    %v2838 = vld [vmem:[#allocation22] sm:$0xff]
    %v2839 = vld [vmem:[#allocation22 + $0x8] sm:$0xff]
    %v2840 = vld [vmem:[#allocation22 + $0x10] sm:$0xff]
    %v2841 = vld [vmem:[#allocation22 + $0x18] sm:$0xff]
    %v2842 = vld [vmem:[#allocation23] sm:$0xff]
    %v2843 = vld [vmem:[#allocation23 + $0x8] sm:$0xff]
    %v2844 = vld [vmem:[#allocation23 + $0x10] sm:$0xff]
    %v2845 = vld [vmem:[#allocation23 + $0x18] sm:$0xff]
    %v2846 = vld [vmem:[%s21] sm:$0x1]
    %s2847 = scalar_lea.vmem [#allocation5], 4
    %v2848 = vld [vmem:[%s2847] sm:$0xf]
    %v2850 = vsel %vm599, %v2848, 0
    %2852 = vmatprep.subr.mxu0 0.0
    %2853 = vmatpush1.msra.mxu0 0.0
    %2854 = vmatprep.subr.mxu0 0.0
    %2855 = vmatpush1.msra.mxu0 0.0
    %2856 = vmatprep.subr.mxu0 0.0
    %2857 = vmatpush1.msra.mxu0 0.0
    %2858 = vmatprep.subr.mxu0 0.0
    %2859 = vmatpush1.msra.mxu0 0.0
    %2860 = vmatprep.subr.mxu0 0.0
    %2861 = vmatpush1.msra.mxu0 0.0
    %2862 = vmatprep.subr.mxu0 0.0
    %2863 = vmatpush1.msra.mxu0 0.0
    %2864 = vmatprep.subr.mxu0 0.0
    %2865 = vmatpush1.msra.mxu0 0.0
    %2866 = vmatprep.subr.mxu0 0.0
    %2867 = vmatpush1.msra.mxu0 0.0
    %2868 = vmatprep.subr.mxu0 0.0
    %2869 = vmatpush1.msra.mxu0 0.0
    %2870 = vmatprep.subr.mxu0 0.0
    %2871 = vmatpush1.msra.mxu0 0.0
    %2872 = vmatprep.subr.mxu0 0.0
    %2873 = vmatpush1.msra.mxu0 0.0
    %2874 = vmatprep.subr.mxu0 0.0
    %2875 = vmatpush1.msra.mxu0 0.0
    %2876 = vmatprep.subr.mxu0 0.0
    %2877 = vmatpush1.msra.mxu0 %v2837
    %2878 = vmatprep.subr.mxu0 0.0
    %2879 = vmatpush1.msra.mxu0 %v2836
    %2880 = vmatprep.subr.mxu0 0.0
    %2881 = vmatpush1.msra.mxu0 %v2835
    %2882 = vmatprep.subr.mxu0 0.0
    %2883 = vmatpush1.msra.mxu0 %v2834
    %2884 = vmatprep.subr.mxu0 0.0
    %2885 = vmatpush2.msra.mxu0 0.0
    %2886 = vmatprep.subr.mxu0 0.0
    %2887 = vmatpush2.msra.mxu0 0.0
    %2888 = vmatprep.subr.mxu0 0.0
    %2889 = vmatpush2.msra.mxu0 0.0
    %2890 = vmatprep.subr.mxu0 0.0
    %2891 = vmatpush2.msra.mxu0 0.0
    %2892 = vmatprep.subr.mxu0 0.0
    %2893 = vmatpush2.msra.mxu0 0.0
    %2894 = vmatprep.subr.mxu0 0.0
    %2895 = vmatpush2.msra.mxu0 0.0
    %2896 = vmatprep.subr.mxu0 0.0
    %2897 = vmatpush2.msra.mxu0 0.0
    %2898 = vmatprep.subr.mxu0 0.0
    %2899 = vmatpush2.msra.mxu0 0.0
    %2900 = vmatprep.subr.mxu0 0.0
    %2901 = vmatpush2.msra.mxu0 0.0
    %2902 = vmatprep.subr.mxu0 0.0
    %2903 = vmatpush2.msra.mxu0 0.0
    %2904 = vmatprep.subr.mxu0 0.0
    %2905 = vmatpush2.msra.mxu0 0.0
    %2906 = vmatprep.subr.mxu0 0.0
    %2907 = vmatpush2.msra.mxu0 0.0
    %2908 = vmatprep.subr.mxu0 0.0
    %2909 = vmatpush2.msra.mxu0 0.0
    %2910 = vmatprep.subr.mxu0 0.0
    %2911 = vmatpush2.msra.mxu0 0.0
    %2912 = vmatprep.subr.mxu0 0.0
    %2913 = vmatpush2.msra.mxu0 0.0
    %2914 = vmatprep.subr.mxu0 0.0
    %2915 = vmatpush2.msra.mxu0 0.0
    %2916 = vmatprep.mubr.f32.mxu0 0.0
    %2917 = vmatmul.mubr.f32.gmra.mxu0 %v2850
    %v2918 = vpop.f32.mrf.mxu0
    %v2919 = vadd.f32 0.0, %v2918
    %v2920 = vpop.f32.mrf.mxu0
    %2921 = vdwg.mxu0
    %2922 = vmatprep.subr.mxu0 0.0
    %2923 = vmatpush1.msra.mxu0 0.0
    %2924 = vmatprep.subr.mxu0 0.0
    %2925 = vmatpush1.msra.mxu0 0.0
    %2926 = vmatprep.subr.mxu0 0.0
    %2927 = vmatpush1.msra.mxu0 0.0
    %2928 = vmatprep.subr.mxu0 0.0
    %2929 = vmatpush1.msra.mxu0 0.0
    %2930 = vmatprep.subr.mxu0 0.0
    %2931 = vmatpush1.msra.mxu0 0.0
    %2932 = vmatprep.subr.mxu0 0.0
    %2933 = vmatpush1.msra.mxu0 0.0
    %2934 = vmatprep.subr.mxu0 0.0
    %2935 = vmatpush1.msra.mxu0 0.0
    %2936 = vmatprep.subr.mxu0 0.0
    %2937 = vmatpush1.msra.mxu0 0.0
    %2938 = vmatprep.subr.mxu0 0.0
    %2939 = vmatpush1.msra.mxu0 0.0
    %2940 = vmatprep.subr.mxu0 0.0
    %2941 = vmatpush1.msra.mxu0 0.0
    %2942 = vmatprep.subr.mxu0 0.0
    %2943 = vmatpush1.msra.mxu0 0.0
    %2944 = vmatprep.subr.mxu0 0.0
    %2945 = vmatpush1.msra.mxu0 0.0
    %2946 = vmatprep.subr.mxu0 0.0
    %2947 = vmatpush1.msra.mxu0 %v2841
    %2948 = vmatprep.subr.mxu0 0.0
    %2949 = vmatpush1.msra.mxu0 %v2840
    %2950 = vmatprep.subr.mxu0 0.0
    %2951 = vmatpush1.msra.mxu0 %v2839
    %2952 = vmatprep.subr.mxu0 0.0
    %2953 = vmatpush1.msra.mxu0 %v2838
    %2954 = vmatprep.subr.mxu0 0.0
    %2955 = vmatpush2.msra.mxu0 0.0
    %2956 = vmatprep.subr.mxu0 0.0
    %2957 = vmatpush2.msra.mxu0 0.0
    %2958 = vmatprep.subr.mxu0 0.0
    %2959 = vmatpush2.msra.mxu0 0.0
    %2960 = vmatprep.subr.mxu0 0.0
    %2961 = vmatpush2.msra.mxu0 0.0
    %2962 = vmatprep.subr.mxu0 0.0
    %2963 = vmatpush2.msra.mxu0 0.0
    %2964 = vmatprep.subr.mxu0 0.0
    %2965 = vmatpush2.msra.mxu0 0.0
    %2966 = vmatprep.subr.mxu0 0.0
    %2967 = vmatpush2.msra.mxu0 0.0
    %2968 = vmatprep.subr.mxu0 0.0
    %2969 = vmatpush2.msra.mxu0 0.0
    %2970 = vmatprep.subr.mxu0 0.0
    %2971 = vmatpush2.msra.mxu0 0.0
    %2972 = vmatprep.subr.mxu0 0.0
    %2973 = vmatpush2.msra.mxu0 0.0
    %2974 = vmatprep.subr.mxu0 0.0
    %2975 = vmatpush2.msra.mxu0 0.0
    %2976 = vmatprep.subr.mxu0 0.0
    %2977 = vmatpush2.msra.mxu0 0.0
    %2978 = vmatprep.subr.mxu0 0.0
    %2979 = vmatpush2.msra.mxu0 0.0
    %2980 = vmatprep.subr.mxu0 0.0
    %2981 = vmatpush2.msra.mxu0 0.0
    %2982 = vmatprep.subr.mxu0 0.0
    %2983 = vmatpush2.msra.mxu0 0.0
    %2984 = vmatprep.subr.mxu0 0.0
    %2985 = vmatpush2.msra.mxu0 0.0
    %2986 = vmatprep.mubr.f32.mxu0 0.0
    %2987 = vmatmul.mubr.f32.gmra.mxu0 %v2850
    %v2988 = vpop.f32.mrf.mxu0
    %v2989 = vadd.f32 0.0, %v2988
    %v2990 = vpop.f32.mrf.mxu0
    %2991 = vdwg.mxu0
    %v2993 = vlaneseq
    %v2994 = vshrl.u32 %v2993, 7
    %v2995 = vsub.s32 0, %v2994
    %v2996 = vrot.slane %v2846, %v2995
    %2998 = vmatprep.subr.mxu0 0.0
    %2999 = vmatpush1.msra.mxu0 0.0
    %3000 = vmatprep.subr.mxu0 0.0
    %3001 = vmatpush1.msra.mxu0 0.0
    %3002 = vmatprep.subr.mxu0 0.0
    %3003 = vmatpush1.msra.mxu0 0.0
    %3004 = vmatprep.subr.mxu0 0.0
    %3005 = vmatpush1.msra.mxu0 0.0
    %3006 = vmatprep.subr.mxu0 0.0
    %3007 = vmatpush1.msra.mxu0 0.0
    %3008 = vmatprep.subr.mxu0 0.0
    %3009 = vmatpush1.msra.mxu0 0.0
    %3010 = vmatprep.subr.mxu0 0.0
    %3011 = vmatpush1.msra.mxu0 0.0
    %3012 = vmatprep.subr.mxu0 0.0
    %3013 = vmatpush1.msra.mxu0 0.0
    %3014 = vmatprep.subr.mxu0 0.0
    %3015 = vmatpush1.msra.mxu0 0.0
    %3016 = vmatprep.subr.mxu0 0.0
    %3017 = vmatpush1.msra.mxu0 0.0
    %3018 = vmatprep.subr.mxu0 0.0
    %3019 = vmatpush1.msra.mxu0 0.0
    %3020 = vmatprep.subr.mxu0 0.0
    %3021 = vmatpush1.msra.mxu0 0.0
    %3022 = vmatprep.subr.mxu0 0.0
    %3023 = vmatpush1.msra.mxu0 %v2845
    %3024 = vmatprep.subr.mxu0 0.0
    %3025 = vmatpush1.msra.mxu0 %v2844
    %3026 = vmatprep.subr.mxu0 0.0
    %3027 = vmatpush1.msra.mxu0 %v2843
    %3028 = vmatprep.subr.mxu0 0.0
    %3029 = vmatpush1.msra.mxu0 %v2842
    %3030 = vmatprep.subr.mxu0 0.0
    %3031 = vmatpush2.msra.mxu0 0.0
    %3032 = vmatprep.subr.mxu0 0.0
    %3033 = vmatpush2.msra.mxu0 0.0
    %3034 = vmatprep.subr.mxu0 0.0
    %3035 = vmatpush2.msra.mxu0 0.0
    %3036 = vmatprep.subr.mxu0 0.0
    %3037 = vmatpush2.msra.mxu0 0.0
    %3038 = vmatprep.subr.mxu0 0.0
    %3039 = vmatpush2.msra.mxu0 0.0
    %3040 = vmatprep.subr.mxu0 0.0
    %3041 = vmatpush2.msra.mxu0 0.0
    %3042 = vmatprep.subr.mxu0 0.0
    %3043 = vmatpush2.msra.mxu0 0.0
    %3044 = vmatprep.subr.mxu0 0.0
    %3045 = vmatpush2.msra.mxu0 0.0
    %3046 = vmatprep.subr.mxu0 0.0
    %3047 = vmatpush2.msra.mxu0 0.0
    %3048 = vmatprep.subr.mxu0 0.0
    %3049 = vmatpush2.msra.mxu0 0.0
    %3050 = vmatprep.subr.mxu0 0.0
    %3051 = vmatpush2.msra.mxu0 0.0
    %3052 = vmatprep.subr.mxu0 0.0
    %3053 = vmatpush2.msra.mxu0 0.0
    %3054 = vmatprep.subr.mxu0 0.0
    %3055 = vmatpush2.msra.mxu0 0.0
    %3056 = vmatprep.subr.mxu0 0.0
    %3057 = vmatpush2.msra.mxu0 0.0
    %3058 = vmatprep.subr.mxu0 0.0
    %3059 = vmatpush2.msra.mxu0 0.0
    %3060 = vmatprep.subr.mxu0 0.0
    %3061 = vmatpush2.msra.mxu0 0.0
    %3062 = vmatprep.mubr.f32.mxu0 0.0
    %3063 = vmatmul.mubr.f32.gmra.mxu0 %v2850
    %v3064 = vpop.f32.mrf.mxu0
    %v3065 = vadd.f32 %v2996, %v3064
    %v3066 = vpop.f32.mrf.mxu0
    %3067 = vdwg.mxu0
    %v3068 = vadd.f32 %v2624, %v2919
    %v3069 = vxor.u32 %v3068, 2147483648
    %v3070 = vmul.f32 %v3069, 1.442695
    %v3071 = vpow.pop %v3070
    %v3072 = vadd.f32 %v3071, 1.0
    %v3073 = vrcp.pop %v3072
    %v3074 = vmul.f32 1.0, %v3073
    %v3075 = vadd.f32 %v2720, %v2989
    %v3076 = vxor.u32 %v3075, 2147483648
    %v3077 = vmul.f32 %v3076, 1.442695
    %v3078 = vpow.pop %v3077
    %v3079 = vadd.f32 %v3078, 1.0
    %v3080 = vrcp.pop %v3079
    %v3081 = vmul.f32 1.0, %v3080
    %v3082 = vmul.f32 %v3074, %v3065
    %v3083 = vadd.f32 %v2816, %v3082
    %v3084 = vtanh.pop %v3083
    %v3085 = vsub.f32 1.0, %v3081
    %v3086 = vmul.f32 %v3085, %v3084
    %v3087 = vmul.f32 %v3081, %v2848
    %v3088 = vadd.f32 %v3086, %v3087
    %v3090 = vsel %vm599, %v3088, 0
    %3092 = vmatprep.subr.mxu0 0.0
    %3093 = vmatpush1.msra.mxu0 0.0
    %3094 = vmatprep.subr.mxu0 0.0
    %3095 = vmatpush1.msra.mxu0 0.0
    %3096 = vmatprep.subr.mxu0 0.0
    %3097 = vmatpush1.msra.mxu0 0.0
    %3098 = vmatprep.subr.mxu0 0.0
    %3099 = vmatpush1.msra.mxu0 0.0
    %3100 = vmatprep.subr.mxu0 0.0
    %3101 = vmatpush1.msra.mxu0 0.0
    %3102 = vmatprep.subr.mxu0 0.0
    %3103 = vmatpush1.msra.mxu0 0.0
    %3104 = vmatprep.subr.mxu0 0.0
    %3105 = vmatpush1.msra.mxu0 0.0
    %3106 = vmatprep.subr.mxu0 0.0
    %3107 = vmatpush1.msra.mxu0 0.0
    %3108 = vmatprep.subr.mxu0 0.0
    %3109 = vmatpush1.msra.mxu0 0.0
    %3110 = vmatprep.subr.mxu0 0.0
    %3111 = vmatpush1.msra.mxu0 0.0
    %3112 = vmatprep.subr.mxu0 0.0
    %3113 = vmatpush1.msra.mxu0 0.0
    %3114 = vmatprep.subr.mxu0 0.0
    %3115 = vmatpush1.msra.mxu0 0.0
    %3116 = vmatprep.subr.mxu0 0.0
    %3117 = vmatpush1.msra.mxu0 %v2837
    %3118 = vmatprep.subr.mxu0 0.0
    %3119 = vmatpush1.msra.mxu0 %v2836
    %3120 = vmatprep.subr.mxu0 0.0
    %3121 = vmatpush1.msra.mxu0 %v2835
    %3122 = vmatprep.subr.mxu0 0.0
    %3123 = vmatpush1.msra.mxu0 %v2834
    %3124 = vmatprep.subr.mxu0 0.0
    %3125 = vmatpush2.msra.mxu0 0.0
    %3126 = vmatprep.subr.mxu0 0.0
    %3127 = vmatpush2.msra.mxu0 0.0
    %3128 = vmatprep.subr.mxu0 0.0
    %3129 = vmatpush2.msra.mxu0 0.0
    %3130 = vmatprep.subr.mxu0 0.0
    %3131 = vmatpush2.msra.mxu0 0.0
    %3132 = vmatprep.subr.mxu0 0.0
    %3133 = vmatpush2.msra.mxu0 0.0
    %3134 = vmatprep.subr.mxu0 0.0
    %3135 = vmatpush2.msra.mxu0 0.0
    %3136 = vmatprep.subr.mxu0 0.0
    %3137 = vmatpush2.msra.mxu0 0.0
    %3138 = vmatprep.subr.mxu0 0.0
    %3139 = vmatpush2.msra.mxu0 0.0
    %3140 = vmatprep.subr.mxu0 0.0
    %3141 = vmatpush2.msra.mxu0 0.0
    %3142 = vmatprep.subr.mxu0 0.0
    %3143 = vmatpush2.msra.mxu0 0.0
    %3144 = vmatprep.subr.mxu0 0.0
    %3145 = vmatpush2.msra.mxu0 0.0
    %3146 = vmatprep.subr.mxu0 0.0
    %3147 = vmatpush2.msra.mxu0 0.0
    %3148 = vmatprep.subr.mxu0 0.0
    %3149 = vmatpush2.msra.mxu0 0.0
    %3150 = vmatprep.subr.mxu0 0.0
    %3151 = vmatpush2.msra.mxu0 0.0
    %3152 = vmatprep.subr.mxu0 0.0
    %3153 = vmatpush2.msra.mxu0 0.0
    %3154 = vmatprep.subr.mxu0 0.0
    %3155 = vmatpush2.msra.mxu0 0.0
    %3156 = vmatprep.mubr.f32.mxu0 0.0
    %3157 = vmatmul.mubr.f32.gmra.mxu0 %v3090
    %v3158 = vpop.f32.mrf.mxu0
    %v3159 = vadd.f32 0.0, %v3158
    %v3160 = vpop.f32.mrf.mxu0
    %3161 = vdwg.mxu0
    %3162 = vmatprep.subr.mxu0 0.0
    %3163 = vmatpush1.msra.mxu0 0.0
    %3164 = vmatprep.subr.mxu0 0.0
    %3165 = vmatpush1.msra.mxu0 0.0
    %3166 = vmatprep.subr.mxu0 0.0
    %3167 = vmatpush1.msra.mxu0 0.0
    %3168 = vmatprep.subr.mxu0 0.0
    %3169 = vmatpush1.msra.mxu0 0.0
    %3170 = vmatprep.subr.mxu0 0.0
    %3171 = vmatpush1.msra.mxu0 0.0
    %3172 = vmatprep.subr.mxu0 0.0
    %3173 = vmatpush1.msra.mxu0 0.0
    %3174 = vmatprep.subr.mxu0 0.0
    %3175 = vmatpush1.msra.mxu0 0.0
    %3176 = vmatprep.subr.mxu0 0.0
    %3177 = vmatpush1.msra.mxu0 0.0
    %3178 = vmatprep.subr.mxu0 0.0
    %3179 = vmatpush1.msra.mxu0 0.0
    %3180 = vmatprep.subr.mxu0 0.0
    %3181 = vmatpush1.msra.mxu0 0.0
    %3182 = vmatprep.subr.mxu0 0.0
    %3183 = vmatpush1.msra.mxu0 0.0
    %3184 = vmatprep.subr.mxu0 0.0
    %3185 = vmatpush1.msra.mxu0 0.0
    %3186 = vmatprep.subr.mxu0 0.0
    %3187 = vmatpush1.msra.mxu0 %v2841
    %3188 = vmatprep.subr.mxu0 0.0
    %3189 = vmatpush1.msra.mxu0 %v2840
    %3190 = vmatprep.subr.mxu0 0.0
    %3191 = vmatpush1.msra.mxu0 %v2839
    %3192 = vmatprep.subr.mxu0 0.0
    %3193 = vmatpush1.msra.mxu0 %v2838
    %3194 = vmatprep.subr.mxu0 0.0
    %3195 = vmatpush2.msra.mxu0 0.0
    %3196 = vmatprep.subr.mxu0 0.0
    %3197 = vmatpush2.msra.mxu0 0.0
    %3198 = vmatprep.subr.mxu0 0.0
    %3199 = vmatpush2.msra.mxu0 0.0
    %3200 = vmatprep.subr.mxu0 0.0
    %3201 = vmatpush2.msra.mxu0 0.0
    %3202 = vmatprep.subr.mxu0 0.0
    %3203 = vmatpush2.msra.mxu0 0.0
    %3204 = vmatprep.subr.mxu0 0.0
    %3205 = vmatpush2.msra.mxu0 0.0
    %3206 = vmatprep.subr.mxu0 0.0
    %3207 = vmatpush2.msra.mxu0 0.0
    %3208 = vmatprep.subr.mxu0 0.0
    %3209 = vmatpush2.msra.mxu0 0.0
    %3210 = vmatprep.subr.mxu0 0.0
    %3211 = vmatpush2.msra.mxu0 0.0
    %3212 = vmatprep.subr.mxu0 0.0
    %3213 = vmatpush2.msra.mxu0 0.0
    %3214 = vmatprep.subr.mxu0 0.0
    %3215 = vmatpush2.msra.mxu0 0.0
    %3216 = vmatprep.subr.mxu0 0.0
    %3217 = vmatpush2.msra.mxu0 0.0
    %3218 = vmatprep.subr.mxu0 0.0
    %3219 = vmatpush2.msra.mxu0 0.0
    %3220 = vmatprep.subr.mxu0 0.0
    %3221 = vmatpush2.msra.mxu0 0.0
    %3222 = vmatprep.subr.mxu0 0.0
    %3223 = vmatpush2.msra.mxu0 0.0
    %3224 = vmatprep.subr.mxu0 0.0
    %3225 = vmatpush2.msra.mxu0 0.0
    %3226 = vmatprep.mubr.f32.mxu0 0.0
    %3227 = vmatmul.mubr.f32.gmra.mxu0 %v3090
    %v3228 = vpop.f32.mrf.mxu0
    %v3229 = vadd.f32 0.0, %v3228
    %v3230 = vpop.f32.mrf.mxu0
    %3231 = vdwg.mxu0
    %3232 = vmatprep.subr.mxu0 0.0
    %3233 = vmatpush1.msra.mxu0 0.0
    %3234 = vmatprep.subr.mxu0 0.0
    %3235 = vmatpush1.msra.mxu0 0.0
    %3236 = vmatprep.subr.mxu0 0.0
    %3237 = vmatpush1.msra.mxu0 0.0
    %3238 = vmatprep.subr.mxu0 0.0
    %3239 = vmatpush1.msra.mxu0 0.0
    %3240 = vmatprep.subr.mxu0 0.0
    %3241 = vmatpush1.msra.mxu0 0.0
    %3242 = vmatprep.subr.mxu0 0.0
    %3243 = vmatpush1.msra.mxu0 0.0
    %3244 = vmatprep.subr.mxu0 0.0
    %3245 = vmatpush1.msra.mxu0 0.0
    %3246 = vmatprep.subr.mxu0 0.0
    %3247 = vmatpush1.msra.mxu0 0.0
    %3248 = vmatprep.subr.mxu0 0.0
    %3249 = vmatpush1.msra.mxu0 0.0
    %3250 = vmatprep.subr.mxu0 0.0
    %3251 = vmatpush1.msra.mxu0 0.0
    %3252 = vmatprep.subr.mxu0 0.0
    %3253 = vmatpush1.msra.mxu0 0.0
    %3254 = vmatprep.subr.mxu0 0.0
    %3255 = vmatpush1.msra.mxu0 0.0
    %3256 = vmatprep.subr.mxu0 0.0
    %3257 = vmatpush1.msra.mxu0 %v2845
    %3258 = vmatprep.subr.mxu0 0.0
    %3259 = vmatpush1.msra.mxu0 %v2844
    %3260 = vmatprep.subr.mxu0 0.0
    %3261 = vmatpush1.msra.mxu0 %v2843
    %3262 = vmatprep.subr.mxu0 0.0
    %3263 = vmatpush1.msra.mxu0 %v2842
    %3264 = vmatprep.subr.mxu0 0.0
    %3265 = vmatpush2.msra.mxu0 0.0
    %3266 = vmatprep.subr.mxu0 0.0
    %3267 = vmatpush2.msra.mxu0 0.0
    %3268 = vmatprep.subr.mxu0 0.0
    %3269 = vmatpush2.msra.mxu0 0.0
    %3270 = vmatprep.subr.mxu0 0.0
    %3271 = vmatpush2.msra.mxu0 0.0
    %3272 = vmatprep.subr.mxu0 0.0
    %3273 = vmatpush2.msra.mxu0 0.0
    %3274 = vmatprep.subr.mxu0 0.0
    %3275 = vmatpush2.msra.mxu0 0.0
    %3276 = vmatprep.subr.mxu0 0.0
    %3277 = vmatpush2.msra.mxu0 0.0
    %3278 = vmatprep.subr.mxu0 0.0
    %3279 = vmatpush2.msra.mxu0 0.0
    %3280 = vmatprep.subr.mxu0 0.0
    %3281 = vmatpush2.msra.mxu0 0.0
    %3282 = vmatprep.subr.mxu0 0.0
    %3283 = vmatpush2.msra.mxu0 0.0
    %3284 = vmatprep.subr.mxu0 0.0
    %3285 = vmatpush2.msra.mxu0 0.0
    %3286 = vmatprep.subr.mxu0 0.0
    %3287 = vmatpush2.msra.mxu0 0.0
    %3288 = vmatprep.subr.mxu0 0.0
    %3289 = vmatpush2.msra.mxu0 0.0
    %3290 = vmatprep.subr.mxu0 0.0
    %3291 = vmatpush2.msra.mxu0 0.0
    %3292 = vmatprep.subr.mxu0 0.0
    %3293 = vmatpush2.msra.mxu0 0.0
    %3294 = vmatprep.subr.mxu0 0.0
    %3295 = vmatpush2.msra.mxu0 0.0
    %3296 = vmatprep.mubr.f32.mxu0 0.0
    %3297 = vmatmul.mubr.f32.gmra.mxu0 %v3090
    %v3298 = vpop.f32.mrf.mxu0
    %v3299 = vadd.f32 %v2996, %v3298
    %v3300 = vpop.f32.mrf.mxu0
    %3301 = vdwg.mxu0
    %v3303 = vrot.slane %v3159, 4
    %v3305 = vadd.f32 %v2624, %v3303
    %v3306 = vxor.u32 %v3305, 2147483648
    %v3307 = vmul.f32 %v3306, 1.442695
    %v3308 = vpow.pop %v3307
    %v3309 = vadd.f32 %v3308, 1.0
    %v3310 = vrcp.pop %v3309
    %v3311 = vmul.f32 1.0, %v3310
    %v3313 = vrot.slane %v3229, 4
    %v3315 = vadd.f32 %v2720, %v3313
    %v3316 = vxor.u32 %v3315, 2147483648
    %v3317 = vmul.f32 %v3316, 1.442695
    %v3318 = vpow.pop %v3317
    %v3319 = vadd.f32 %v3318, 1.0
    %v3320 = vrcp.pop %v3319
    %v3321 = vmul.f32 1.0, %v3320
    %v3323 = vrot.slane %v3299, 4
    %v3325 = vmul.f32 %v3311, %v3323
    %v3326 = vadd.f32 %v2816, %v3325
    %v3327 = vtanh.pop %v3326
    %v3328 = vsub.f32 1.0, %v3321
    %v3329 = vmul.f32 %v3328, %v3327
    %v3330 = vrot.slane %v3088, 4
    %v3332 = vmul.f32 %v3321, %v3330
    %v3333 = vadd.f32 %v3329, %v3332
    %v3335 = vrot.slane %v3333, 4
    %v3336 = vsel %vm599, %v3335, 0
    %3338 = vmatprep.subr.mxu0 0.0
    %3339 = vmatpush1.msra.mxu0 0.0
    %3340 = vmatprep.subr.mxu0 0.0
    %3341 = vmatpush1.msra.mxu0 0.0
    %3342 = vmatprep.subr.mxu0 0.0
    %3343 = vmatpush1.msra.mxu0 0.0
    %3344 = vmatprep.subr.mxu0 0.0
    %3345 = vmatpush1.msra.mxu0 0.0
    %3346 = vmatprep.subr.mxu0 0.0
    %3347 = vmatpush1.msra.mxu0 0.0
    %3348 = vmatprep.subr.mxu0 0.0
    %3349 = vmatpush1.msra.mxu0 0.0
    %3350 = vmatprep.subr.mxu0 0.0
    %3351 = vmatpush1.msra.mxu0 0.0
    %3352 = vmatprep.subr.mxu0 0.0
    %3353 = vmatpush1.msra.mxu0 0.0
    %3354 = vmatprep.subr.mxu0 0.0
    %3355 = vmatpush1.msra.mxu0 0.0
    %3356 = vmatprep.subr.mxu0 0.0
    %3357 = vmatpush1.msra.mxu0 0.0
    %3358 = vmatprep.subr.mxu0 0.0
    %3359 = vmatpush1.msra.mxu0 0.0
    %3360 = vmatprep.subr.mxu0 0.0
    %3361 = vmatpush1.msra.mxu0 0.0
    %3362 = vmatprep.subr.mxu0 0.0
    %3363 = vmatpush1.msra.mxu0 %v2837
    %3364 = vmatprep.subr.mxu0 0.0
    %3365 = vmatpush1.msra.mxu0 %v2836
    %3366 = vmatprep.subr.mxu0 0.0
    %3367 = vmatpush1.msra.mxu0 %v2835
    %3368 = vmatprep.subr.mxu0 0.0
    %3369 = vmatpush1.msra.mxu0 %v2834
    %3370 = vmatprep.subr.mxu0 0.0
    %3371 = vmatpush2.msra.mxu0 0.0
    %3372 = vmatprep.subr.mxu0 0.0
    %3373 = vmatpush2.msra.mxu0 0.0
    %3374 = vmatprep.subr.mxu0 0.0
    %3375 = vmatpush2.msra.mxu0 0.0
    %3376 = vmatprep.subr.mxu0 0.0
    %3377 = vmatpush2.msra.mxu0 0.0
    %3378 = vmatprep.subr.mxu0 0.0
    %3379 = vmatpush2.msra.mxu0 0.0
    %3380 = vmatprep.subr.mxu0 0.0
    %3381 = vmatpush2.msra.mxu0 0.0
    %3382 = vmatprep.subr.mxu0 0.0
    %3383 = vmatpush2.msra.mxu0 0.0
    %3384 = vmatprep.subr.mxu0 0.0
    %3385 = vmatpush2.msra.mxu0 0.0
    %3386 = vmatprep.subr.mxu0 0.0
    %3387 = vmatpush2.msra.mxu0 0.0
    %3388 = vmatprep.subr.mxu0 0.0
    %3389 = vmatpush2.msra.mxu0 0.0
    %3390 = vmatprep.subr.mxu0 0.0
    %3391 = vmatpush2.msra.mxu0 0.0
    %3392 = vmatprep.subr.mxu0 0.0
    %3393 = vmatpush2.msra.mxu0 0.0
    %3394 = vmatprep.subr.mxu0 0.0
    %3395 = vmatpush2.msra.mxu0 0.0
    %3396 = vmatprep.subr.mxu0 0.0
    %3397 = vmatpush2.msra.mxu0 0.0
    %3398 = vmatprep.subr.mxu0 0.0
    %3399 = vmatpush2.msra.mxu0 0.0
    %3400 = vmatprep.subr.mxu0 0.0
    %3401 = vmatpush2.msra.mxu0 0.0
    %3402 = vmatprep.mubr.f32.mxu0 0.0
    %3403 = vmatmul.mubr.f32.gmra.mxu0 %v3336
    %v3404 = vpop.f32.mrf.mxu0
    %v3405 = vadd.f32 0.0, %v3404
    %v3406 = vpop.f32.mrf.mxu0
    %3407 = vdwg.mxu0
    %3408 = vmatprep.subr.mxu0 0.0
    %3409 = vmatpush1.msra.mxu0 0.0
    %3410 = vmatprep.subr.mxu0 0.0
    %3411 = vmatpush1.msra.mxu0 0.0
    %3412 = vmatprep.subr.mxu0 0.0
    %3413 = vmatpush1.msra.mxu0 0.0
    %3414 = vmatprep.subr.mxu0 0.0
    %3415 = vmatpush1.msra.mxu0 0.0
    %3416 = vmatprep.subr.mxu0 0.0
    %3417 = vmatpush1.msra.mxu0 0.0
    %3418 = vmatprep.subr.mxu0 0.0
    %3419 = vmatpush1.msra.mxu0 0.0
    %3420 = vmatprep.subr.mxu0 0.0
    %3421 = vmatpush1.msra.mxu0 0.0
    %3422 = vmatprep.subr.mxu0 0.0
    %3423 = vmatpush1.msra.mxu0 0.0
    %3424 = vmatprep.subr.mxu0 0.0
    %3425 = vmatpush1.msra.mxu0 0.0
    %3426 = vmatprep.subr.mxu0 0.0
    %3427 = vmatpush1.msra.mxu0 0.0
    %3428 = vmatprep.subr.mxu0 0.0
    %3429 = vmatpush1.msra.mxu0 0.0
    %3430 = vmatprep.subr.mxu0 0.0
    %3431 = vmatpush1.msra.mxu0 0.0
    %3432 = vmatprep.subr.mxu0 0.0
    %3433 = vmatpush1.msra.mxu0 %v2841
    %3434 = vmatprep.subr.mxu0 0.0
    %3435 = vmatpush1.msra.mxu0 %v2840
    %3436 = vmatprep.subr.mxu0 0.0
    %3437 = vmatpush1.msra.mxu0 %v2839
    %3438 = vmatprep.subr.mxu0 0.0
    %3439 = vmatpush1.msra.mxu0 %v2838
    %3440 = vmatprep.subr.mxu0 0.0
    %3441 = vmatpush2.msra.mxu0 0.0
    %3442 = vmatprep.subr.mxu0 0.0
    %3443 = vmatpush2.msra.mxu0 0.0
    %3444 = vmatprep.subr.mxu0 0.0
    %3445 = vmatpush2.msra.mxu0 0.0
    %3446 = vmatprep.subr.mxu0 0.0
    %3447 = vmatpush2.msra.mxu0 0.0
    %3448 = vmatprep.subr.mxu0 0.0
    %3449 = vmatpush2.msra.mxu0 0.0
    %3450 = vmatprep.subr.mxu0 0.0
    %3451 = vmatpush2.msra.mxu0 0.0
    %3452 = vmatprep.subr.mxu0 0.0
    %3453 = vmatpush2.msra.mxu0 0.0
    %3454 = vmatprep.subr.mxu0 0.0
    %3455 = vmatpush2.msra.mxu0 0.0
    %3456 = vmatprep.subr.mxu0 0.0
    %3457 = vmatpush2.msra.mxu0 0.0
    %3458 = vmatprep.subr.mxu0 0.0
    %3459 = vmatpush2.msra.mxu0 0.0
    %3460 = vmatprep.subr.mxu0 0.0
    %3461 = vmatpush2.msra.mxu0 0.0
    %3462 = vmatprep.subr.mxu0 0.0
    %3463 = vmatpush2.msra.mxu0 0.0
    %3464 = vmatprep.subr.mxu0 0.0
    %3465 = vmatpush2.msra.mxu0 0.0
    %3466 = vmatprep.subr.mxu0 0.0
    %3467 = vmatpush2.msra.mxu0 0.0
    %3468 = vmatprep.subr.mxu0 0.0
    %3469 = vmatpush2.msra.mxu0 0.0
    %3470 = vmatprep.subr.mxu0 0.0
    %3471 = vmatpush2.msra.mxu0 0.0
    %3472 = vmatprep.mubr.f32.mxu0 0.0
    %3473 = vmatmul.mubr.f32.gmra.mxu0 %v3336
    %v3474 = vpop.f32.mrf.mxu0
    %v3475 = vadd.f32 0.0, %v3474
    %v3476 = vpop.f32.mrf.mxu0
    %3477 = vdwg.mxu0
    %3478 = vmatprep.subr.mxu0 0.0
    %3479 = vmatpush1.msra.mxu0 0.0
    %3480 = vmatprep.subr.mxu0 0.0
    %3481 = vmatpush1.msra.mxu0 0.0
    %3482 = vmatprep.subr.mxu0 0.0
    %3483 = vmatpush1.msra.mxu0 0.0
    %3484 = vmatprep.subr.mxu0 0.0
    %3485 = vmatpush1.msra.mxu0 0.0
    %3486 = vmatprep.subr.mxu0 0.0
    %3487 = vmatpush1.msra.mxu0 0.0
    %3488 = vmatprep.subr.mxu0 0.0
    %3489 = vmatpush1.msra.mxu0 0.0
    %3490 = vmatprep.subr.mxu0 0.0
    %3491 = vmatpush1.msra.mxu0 0.0
    %3492 = vmatprep.subr.mxu0 0.0
    %3493 = vmatpush1.msra.mxu0 0.0
    %3494 = vmatprep.subr.mxu0 0.0
    %3495 = vmatpush1.msra.mxu0 0.0
    %3496 = vmatprep.subr.mxu0 0.0
    %3497 = vmatpush1.msra.mxu0 0.0
    %3498 = vmatprep.subr.mxu0 0.0
    %3499 = vmatpush1.msra.mxu0 0.0
    %3500 = vmatprep.subr.mxu0 0.0
    %3501 = vmatpush1.msra.mxu0 0.0
    %3502 = vmatprep.subr.mxu0 0.0
    %3503 = vmatpush1.msra.mxu0 %v2845
    %3504 = vmatprep.subr.mxu0 0.0
    %3505 = vmatpush1.msra.mxu0 %v2844
    %3506 = vmatprep.subr.mxu0 0.0
    %3507 = vmatpush1.msra.mxu0 %v2843
    %3508 = vmatprep.subr.mxu0 0.0
    %3509 = vmatpush1.msra.mxu0 %v2842
    %3510 = vmatprep.subr.mxu0 0.0
    %3511 = vmatpush2.msra.mxu0 0.0
    %3512 = vmatprep.subr.mxu0 0.0
    %3513 = vmatpush2.msra.mxu0 0.0
    %3514 = vmatprep.subr.mxu0 0.0
    %3515 = vmatpush2.msra.mxu0 0.0
    %3516 = vmatprep.subr.mxu0 0.0
    %3517 = vmatpush2.msra.mxu0 0.0
    %3518 = vmatprep.subr.mxu0 0.0
    %3519 = vmatpush2.msra.mxu0 0.0
    %3520 = vmatprep.subr.mxu0 0.0
    %3521 = vmatpush2.msra.mxu0 0.0
    %3522 = vmatprep.subr.mxu0 0.0
    %3523 = vmatpush2.msra.mxu0 0.0
    %3524 = vmatprep.subr.mxu0 0.0
    %3525 = vmatpush2.msra.mxu0 0.0
    %3526 = vmatprep.subr.mxu0 0.0
    %3527 = vmatpush2.msra.mxu0 0.0
    %3528 = vmatprep.subr.mxu0 0.0
    %3529 = vmatpush2.msra.mxu0 0.0
    %3530 = vmatprep.subr.mxu0 0.0
    %3531 = vmatpush2.msra.mxu0 0.0
    %3532 = vmatprep.subr.mxu0 0.0
    %3533 = vmatpush2.msra.mxu0 0.0
    %3534 = vmatprep.subr.mxu0 0.0
    %3535 = vmatpush2.msra.mxu0 0.0
    %3536 = vmatprep.subr.mxu0 0.0
    %3537 = vmatpush2.msra.mxu0 0.0
    %3538 = vmatprep.subr.mxu0 0.0
    %3539 = vmatpush2.msra.mxu0 0.0
    %3540 = vmatprep.subr.mxu0 0.0
    %3541 = vmatpush2.msra.mxu0 0.0
    %3542 = vmatprep.mubr.f32.mxu0 0.0
    %3543 = vmatmul.mubr.f32.gmra.mxu0 %v3336
    %v3544 = vpop.f32.mrf.mxu0
    %v3545 = vadd.f32 %v2996, %v3544
    %v3546 = vpop.f32.mrf.mxu0
    %3547 = vdwg.mxu0
    %v3548 = vadd.f32 %v2629, %v3405
    %v3549 = vxor.u32 %v3548, 2147483648
    %v3550 = vmul.f32 %v3549, 1.442695
    %v3551 = vpow.pop %v3550
    %v3552 = vadd.f32 %v3551, 1.0
    %v3553 = vrcp.pop %v3552
    %v3554 = vmul.f32 1.0, %v3553
    %v3555 = vadd.f32 %v2725, %v3475
    %v3556 = vxor.u32 %v3555, 2147483648
    %v3557 = vmul.f32 %v3556, 1.442695
    %v3558 = vpow.pop %v3557
    %v3559 = vadd.f32 %v3558, 1.0
    %v3560 = vrcp.pop %v3559
    %v3561 = vmul.f32 1.0, %v3560
    %v3562 = vmul.f32 %v3554, %v3545
    %v3563 = vadd.f32 %v2821, %v3562
    %v3564 = vtanh.pop %v3563
    %v3565 = vsub.f32 1.0, %v3561
    %v3566 = vmul.f32 %v3565, %v3564
    %v3568 = vmul.f32 %v3561, %v3335
    %v3569 = vadd.f32 %v3566, %v3568
    %v3571 = vsel %vm599, %v3569, 0
    %3573 = vmatprep.subr.mxu0 0.0
    %3574 = vmatpush1.msra.mxu0 0.0
    %3575 = vmatprep.subr.mxu0 0.0
    %3576 = vmatpush1.msra.mxu0 0.0
    %3577 = vmatprep.subr.mxu0 0.0
    %3578 = vmatpush1.msra.mxu0 0.0
    %3579 = vmatprep.subr.mxu0 0.0
    %3580 = vmatpush1.msra.mxu0 0.0
    %3581 = vmatprep.subr.mxu0 0.0
    %3582 = vmatpush1.msra.mxu0 0.0
    %3583 = vmatprep.subr.mxu0 0.0
    %3584 = vmatpush1.msra.mxu0 0.0
    %3585 = vmatprep.subr.mxu0 0.0
    %3586 = vmatpush1.msra.mxu0 0.0
    %3587 = vmatprep.subr.mxu0 0.0
    %3588 = vmatpush1.msra.mxu0 0.0
    %3589 = vmatprep.subr.mxu0 0.0
    %3590 = vmatpush1.msra.mxu0 0.0
    %3591 = vmatprep.subr.mxu0 0.0
    %3592 = vmatpush1.msra.mxu0 0.0
    %3593 = vmatprep.subr.mxu0 0.0
    %3594 = vmatpush1.msra.mxu0 0.0
    %3595 = vmatprep.subr.mxu0 0.0
    %3596 = vmatpush1.msra.mxu0 0.0
    %3597 = vmatprep.subr.mxu0 0.0
    %3598 = vmatpush1.msra.mxu0 %v2837
    %3599 = vmatprep.subr.mxu0 0.0
    %3600 = vmatpush1.msra.mxu0 %v2836
    %3601 = vmatprep.subr.mxu0 0.0
    %3602 = vmatpush1.msra.mxu0 %v2835
    %3603 = vmatprep.subr.mxu0 0.0
    %3604 = vmatpush1.msra.mxu0 %v2834
    %3605 = vmatprep.subr.mxu0 0.0
    %3606 = vmatpush2.msra.mxu0 0.0
    %3607 = vmatprep.subr.mxu0 0.0
    %3608 = vmatpush2.msra.mxu0 0.0
    %3609 = vmatprep.subr.mxu0 0.0
    %3610 = vmatpush2.msra.mxu0 0.0
    %3611 = vmatprep.subr.mxu0 0.0
    %3612 = vmatpush2.msra.mxu0 0.0
    %3613 = vmatprep.subr.mxu0 0.0
    %3614 = vmatpush2.msra.mxu0 0.0
    %3615 = vmatprep.subr.mxu0 0.0
    %3616 = vmatpush2.msra.mxu0 0.0
    %3617 = vmatprep.subr.mxu0 0.0
    %3618 = vmatpush2.msra.mxu0 0.0
    %3619 = vmatprep.subr.mxu0 0.0
    %3620 = vmatpush2.msra.mxu0 0.0
    %3621 = vmatprep.subr.mxu0 0.0
    %3622 = vmatpush2.msra.mxu0 0.0
    %3623 = vmatprep.subr.mxu0 0.0
    %3624 = vmatpush2.msra.mxu0 0.0
    %3625 = vmatprep.subr.mxu0 0.0
    %3626 = vmatpush2.msra.mxu0 0.0
    %3627 = vmatprep.subr.mxu0 0.0
    %3628 = vmatpush2.msra.mxu0 0.0
    %3629 = vmatprep.subr.mxu0 0.0
    %3630 = vmatpush2.msra.mxu0 0.0
    %3631 = vmatprep.subr.mxu0 0.0
    %3632 = vmatpush2.msra.mxu0 0.0
    %3633 = vmatprep.subr.mxu0 0.0
    %3634 = vmatpush2.msra.mxu0 0.0
    %3635 = vmatprep.subr.mxu0 0.0
    %3636 = vmatpush2.msra.mxu0 0.0
    %3637 = vmatprep.mubr.f32.mxu0 0.0
    %3638 = vmatmul.mubr.f32.gmra.mxu0 %v3571
    %v3639 = vpop.f32.mrf.mxu0
    %v3640 = vadd.f32 0.0, %v3639
    %v3641 = vpop.f32.mrf.mxu0
    %3642 = vdwg.mxu0
    %3643 = vmatprep.subr.mxu0 0.0
    %3644 = vmatpush1.msra.mxu0 0.0
    %3645 = vmatprep.subr.mxu0 0.0
    %3646 = vmatpush1.msra.mxu0 0.0
    %3647 = vmatprep.subr.mxu0 0.0
    %3648 = vmatpush1.msra.mxu0 0.0
    %3649 = vmatprep.subr.mxu0 0.0
    %3650 = vmatpush1.msra.mxu0 0.0
    %3651 = vmatprep.subr.mxu0 0.0
    %3652 = vmatpush1.msra.mxu0 0.0
    %3653 = vmatprep.subr.mxu0 0.0
    %3654 = vmatpush1.msra.mxu0 0.0
    %3655 = vmatprep.subr.mxu0 0.0
    %3656 = vmatpush1.msra.mxu0 0.0
    %3657 = vmatprep.subr.mxu0 0.0
    %3658 = vmatpush1.msra.mxu0 0.0
    %3659 = vmatprep.subr.mxu0 0.0
    %3660 = vmatpush1.msra.mxu0 0.0
    %3661 = vmatprep.subr.mxu0 0.0
    %3662 = vmatpush1.msra.mxu0 0.0
    %3663 = vmatprep.subr.mxu0 0.0
    %3664 = vmatpush1.msra.mxu0 0.0
    %3665 = vmatprep.subr.mxu0 0.0
    %3666 = vmatpush1.msra.mxu0 0.0
    %3667 = vmatprep.subr.mxu0 0.0
    %3668 = vmatpush1.msra.mxu0 %v2841
    %3669 = vmatprep.subr.mxu0 0.0
    %3670 = vmatpush1.msra.mxu0 %v2840
    %3671 = vmatprep.subr.mxu0 0.0
    %3672 = vmatpush1.msra.mxu0 %v2839
    %3673 = vmatprep.subr.mxu0 0.0
    %3674 = vmatpush1.msra.mxu0 %v2838
    %3675 = vmatprep.subr.mxu0 0.0
    %3676 = vmatpush2.msra.mxu0 0.0
    %3677 = vmatprep.subr.mxu0 0.0
    %3678 = vmatpush2.msra.mxu0 0.0
    %3679 = vmatprep.subr.mxu0 0.0
    %3680 = vmatpush2.msra.mxu0 0.0
    %3681 = vmatprep.subr.mxu0 0.0
    %3682 = vmatpush2.msra.mxu0 0.0
    %3683 = vmatprep.subr.mxu0 0.0
    %3684 = vmatpush2.msra.mxu0 0.0
    %3685 = vmatprep.subr.mxu0 0.0
    %3686 = vmatpush2.msra.mxu0 0.0
    %3687 = vmatprep.subr.mxu0 0.0
    %3688 = vmatpush2.msra.mxu0 0.0
    %3689 = vmatprep.subr.mxu0 0.0
    %3690 = vmatpush2.msra.mxu0 0.0
    %3691 = vmatprep.subr.mxu0 0.0
    %3692 = vmatpush2.msra.mxu0 0.0
    %3693 = vmatprep.subr.mxu0 0.0
    %3694 = vmatpush2.msra.mxu0 0.0
    %3695 = vmatprep.subr.mxu0 0.0
    %3696 = vmatpush2.msra.mxu0 0.0
    %3697 = vmatprep.subr.mxu0 0.0
    %3698 = vmatpush2.msra.mxu0 0.0
    %3699 = vmatprep.subr.mxu0 0.0
    %3700 = vmatpush2.msra.mxu0 0.0
    %3701 = vmatprep.subr.mxu0 0.0
    %3702 = vmatpush2.msra.mxu0 0.0
    %3703 = vmatprep.subr.mxu0 0.0
    %3704 = vmatpush2.msra.mxu0 0.0
    %3705 = vmatprep.subr.mxu0 0.0
    %3706 = vmatpush2.msra.mxu0 0.0
    %3707 = vmatprep.mubr.f32.mxu0 0.0
    %3708 = vmatmul.mubr.f32.gmra.mxu0 %v3571
    %v3709 = vpop.f32.mrf.mxu0
    %v3710 = vadd.f32 0.0, %v3709
    %v3711 = vpop.f32.mrf.mxu0
    %3712 = vdwg.mxu0
    %3713 = vmatprep.subr.mxu0 0.0
    %3714 = vmatpush1.msra.mxu0 0.0
    %3715 = vmatprep.subr.mxu0 0.0
    %3716 = vmatpush1.msra.mxu0 0.0
    %3717 = vmatprep.subr.mxu0 0.0
    %3718 = vmatpush1.msra.mxu0 0.0
    %3719 = vmatprep.subr.mxu0 0.0
    %3720 = vmatpush1.msra.mxu0 0.0
    %3721 = vmatprep.subr.mxu0 0.0
    %3722 = vmatpush1.msra.mxu0 0.0
    %3723 = vmatprep.subr.mxu0 0.0
    %3724 = vmatpush1.msra.mxu0 0.0
    %3725 = vmatprep.subr.mxu0 0.0
    %3726 = vmatpush1.msra.mxu0 0.0
    %3727 = vmatprep.subr.mxu0 0.0
    %3728 = vmatpush1.msra.mxu0 0.0
    %3729 = vmatprep.subr.mxu0 0.0
    %3730 = vmatpush1.msra.mxu0 0.0
    %3731 = vmatprep.subr.mxu0 0.0
    %3732 = vmatpush1.msra.mxu0 0.0
    %3733 = vmatprep.subr.mxu0 0.0
    %3734 = vmatpush1.msra.mxu0 0.0
    %3735 = vmatprep.subr.mxu0 0.0
    %3736 = vmatpush1.msra.mxu0 0.0
    %3737 = vmatprep.subr.mxu0 0.0
    %3738 = vmatpush1.msra.mxu0 %v2845
    %3739 = vmatprep.subr.mxu0 0.0
    %3740 = vmatpush1.msra.mxu0 %v2844
    %3741 = vmatprep.subr.mxu0 0.0
    %3742 = vmatpush1.msra.mxu0 %v2843
    %3743 = vmatprep.subr.mxu0 0.0
    %3744 = vmatpush1.msra.mxu0 %v2842
    %3745 = vmatprep.subr.mxu0 0.0
    %3746 = vmatpush2.msra.mxu0 0.0
    %3747 = vmatprep.subr.mxu0 0.0
    %3748 = vmatpush2.msra.mxu0 0.0
    %3749 = vmatprep.subr.mxu0 0.0
    %3750 = vmatpush2.msra.mxu0 0.0
    %3751 = vmatprep.subr.mxu0 0.0
    %3752 = vmatpush2.msra.mxu0 0.0
    %3753 = vmatprep.subr.mxu0 0.0
    %3754 = vmatpush2.msra.mxu0 0.0
    %3755 = vmatprep.subr.mxu0 0.0
    %3756 = vmatpush2.msra.mxu0 0.0
    %3757 = vmatprep.subr.mxu0 0.0
    %3758 = vmatpush2.msra.mxu0 0.0
    %3759 = vmatprep.subr.mxu0 0.0
    %3760 = vmatpush2.msra.mxu0 0.0
    %3761 = vmatprep.subr.mxu0 0.0
    %3762 = vmatpush2.msra.mxu0 0.0
    %3763 = vmatprep.subr.mxu0 0.0
    %3764 = vmatpush2.msra.mxu0 0.0
    %3765 = vmatprep.subr.mxu0 0.0
    %3766 = vmatpush2.msra.mxu0 0.0
    %3767 = vmatprep.subr.mxu0 0.0
    %3768 = vmatpush2.msra.mxu0 0.0
    %3769 = vmatprep.subr.mxu0 0.0
    %3770 = vmatpush2.msra.mxu0 0.0
    %3771 = vmatprep.subr.mxu0 0.0
    %3772 = vmatpush2.msra.mxu0 0.0
    %3773 = vmatprep.subr.mxu0 0.0
    %3774 = vmatpush2.msra.mxu0 0.0
    %3775 = vmatprep.subr.mxu0 0.0
    %3776 = vmatpush2.msra.mxu0 0.0
    %3777 = vmatprep.mubr.f32.mxu0 0.0
    %3778 = vmatmul.mubr.f32.gmra.mxu0 %v3571
    %v3779 = vpop.f32.mrf.mxu0
    %v3780 = vadd.f32 %v2996, %v3779
    %v3781 = vpop.f32.mrf.mxu0
    %3782 = vdwg.mxu0
    %v3784 = vrot.slane %v3640, 4
    %v3786 = vadd.f32 %v2629, %v3784
    %v3787 = vxor.u32 %v3786, 2147483648
    %v3788 = vmul.f32 %v3787, 1.442695
    %v3789 = vpow.pop %v3788
    %v3790 = vadd.f32 %v3789, 1.0
    %v3791 = vrcp.pop %v3790
    %v3792 = vmul.f32 1.0, %v3791
    %v3794 = vrot.slane %v3710, 4
    %v3796 = vadd.f32 %v2725, %v3794
    %v3797 = vxor.u32 %v3796, 2147483648
    %v3798 = vmul.f32 %v3797, 1.442695
    %v3799 = vpow.pop %v3798
    %v3800 = vadd.f32 %v3799, 1.0
    %v3801 = vrcp.pop %v3800
    %v3802 = vmul.f32 1.0, %v3801
    %v3804 = vrot.slane %v3780, 4
    %v3806 = vmul.f32 %v3792, %v3804
    %v3807 = vadd.f32 %v2821, %v3806
    %v3808 = vtanh.pop %v3807
    %v3809 = vsub.f32 1.0, %v3802
    %v3810 = vmul.f32 %v3809, %v3808
    %v3811 = vrot.slane %v3569, 4
    %v3813 = vmul.f32 %v3802, %v3811
    %v3814 = vadd.f32 %v3810, %v3813
    %v3816 = vrot.slane %v3814, 4
    %v3817 = vsel %vm599, %v3816, 0
    %3819 = vmatprep.subr.mxu0 0.0
    %3820 = vmatpush1.msra.mxu0 0.0
    %3821 = vmatprep.subr.mxu0 0.0
    %3822 = vmatpush1.msra.mxu0 0.0
    %3823 = vmatprep.subr.mxu0 0.0
    %3824 = vmatpush1.msra.mxu0 0.0
    %3825 = vmatprep.subr.mxu0 0.0
    %3826 = vmatpush1.msra.mxu0 0.0
    %3827 = vmatprep.subr.mxu0 0.0
    %3828 = vmatpush1.msra.mxu0 0.0
    %3829 = vmatprep.subr.mxu0 0.0
    %3830 = vmatpush1.msra.mxu0 0.0
    %3831 = vmatprep.subr.mxu0 0.0
    %3832 = vmatpush1.msra.mxu0 0.0
    %3833 = vmatprep.subr.mxu0 0.0
    %3834 = vmatpush1.msra.mxu0 0.0
    %3835 = vmatprep.subr.mxu0 0.0
    %3836 = vmatpush1.msra.mxu0 0.0
    %3837 = vmatprep.subr.mxu0 0.0
    %3838 = vmatpush1.msra.mxu0 0.0
    %3839 = vmatprep.subr.mxu0 0.0
    %3840 = vmatpush1.msra.mxu0 0.0
    %3841 = vmatprep.subr.mxu0 0.0
    %3842 = vmatpush1.msra.mxu0 0.0
    %3843 = vmatprep.subr.mxu0 0.0
    %3844 = vmatpush1.msra.mxu0 %v2837
    %3845 = vmatprep.subr.mxu0 0.0
    %3846 = vmatpush1.msra.mxu0 %v2836
    %3847 = vmatprep.subr.mxu0 0.0
    %3848 = vmatpush1.msra.mxu0 %v2835
    %3849 = vmatprep.subr.mxu0 0.0
    %3850 = vmatpush1.msra.mxu0 %v2834
    %3851 = vmatprep.subr.mxu0 0.0
    %3852 = vmatpush2.msra.mxu0 0.0
    %3853 = vmatprep.subr.mxu0 0.0
    %3854 = vmatpush2.msra.mxu0 0.0
    %3855 = vmatprep.subr.mxu0 0.0
    %3856 = vmatpush2.msra.mxu0 0.0
    %3857 = vmatprep.subr.mxu0 0.0
    %3858 = vmatpush2.msra.mxu0 0.0
    %3859 = vmatprep.subr.mxu0 0.0
    %3860 = vmatpush2.msra.mxu0 0.0
    %3861 = vmatprep.subr.mxu0 0.0
    %3862 = vmatpush2.msra.mxu0 0.0
    %3863 = vmatprep.subr.mxu0 0.0
    %3864 = vmatpush2.msra.mxu0 0.0
    %3865 = vmatprep.subr.mxu0 0.0
    %3866 = vmatpush2.msra.mxu0 0.0
    %3867 = vmatprep.subr.mxu0 0.0
    %3868 = vmatpush2.msra.mxu0 0.0
    %3869 = vmatprep.subr.mxu0 0.0
    %3870 = vmatpush2.msra.mxu0 0.0
    %3871 = vmatprep.subr.mxu0 0.0
    %3872 = vmatpush2.msra.mxu0 0.0
    %3873 = vmatprep.subr.mxu0 0.0
    %3874 = vmatpush2.msra.mxu0 0.0
    %3875 = vmatprep.subr.mxu0 0.0
    %3876 = vmatpush2.msra.mxu0 0.0
    %3877 = vmatprep.subr.mxu0 0.0
    %3878 = vmatpush2.msra.mxu0 0.0
    %3879 = vmatprep.subr.mxu0 0.0
    %3880 = vmatpush2.msra.mxu0 0.0
    %3881 = vmatprep.subr.mxu0 0.0
    %3882 = vmatpush2.msra.mxu0 0.0
    %3883 = vmatprep.mubr.f32.mxu0 0.0
    %3884 = vmatmul.mubr.f32.gmra.mxu0 %v3817
    %v3885 = vpop.f32.mrf.mxu0
    %v3886 = vadd.f32 0.0, %v3885
    %v3887 = vpop.f32.mrf.mxu0
    %3888 = vdwg.mxu0
    %3889 = vmatprep.subr.mxu0 0.0
    %3890 = vmatpush1.msra.mxu0 0.0
    %3891 = vmatprep.subr.mxu0 0.0
    %3892 = vmatpush1.msra.mxu0 0.0
    %3893 = vmatprep.subr.mxu0 0.0
    %3894 = vmatpush1.msra.mxu0 0.0
    %3895 = vmatprep.subr.mxu0 0.0
    %3896 = vmatpush1.msra.mxu0 0.0
    %3897 = vmatprep.subr.mxu0 0.0
    %3898 = vmatpush1.msra.mxu0 0.0
    %3899 = vmatprep.subr.mxu0 0.0
    %3900 = vmatpush1.msra.mxu0 0.0
    %3901 = vmatprep.subr.mxu0 0.0
    %3902 = vmatpush1.msra.mxu0 0.0
    %3903 = vmatprep.subr.mxu0 0.0
    %3904 = vmatpush1.msra.mxu0 0.0
    %3905 = vmatprep.subr.mxu0 0.0
    %3906 = vmatpush1.msra.mxu0 0.0
    %3907 = vmatprep.subr.mxu0 0.0
    %3908 = vmatpush1.msra.mxu0 0.0
    %3909 = vmatprep.subr.mxu0 0.0
    %3910 = vmatpush1.msra.mxu0 0.0
    %3911 = vmatprep.subr.mxu0 0.0
    %3912 = vmatpush1.msra.mxu0 0.0
    %3913 = vmatprep.subr.mxu0 0.0
    %3914 = vmatpush1.msra.mxu0 %v2841
    %3915 = vmatprep.subr.mxu0 0.0
    %3916 = vmatpush1.msra.mxu0 %v2840
    %3917 = vmatprep.subr.mxu0 0.0
    %3918 = vmatpush1.msra.mxu0 %v2839
    %3919 = vmatprep.subr.mxu0 0.0
    %3920 = vmatpush1.msra.mxu0 %v2838
    %3921 = vmatprep.subr.mxu0 0.0
    %3922 = vmatpush2.msra.mxu0 0.0
    %3923 = vmatprep.subr.mxu0 0.0
    %3924 = vmatpush2.msra.mxu0 0.0
    %3925 = vmatprep.subr.mxu0 0.0
    %3926 = vmatpush2.msra.mxu0 0.0
    %3927 = vmatprep.subr.mxu0 0.0
    %3928 = vmatpush2.msra.mxu0 0.0
    %3929 = vmatprep.subr.mxu0 0.0
    %3930 = vmatpush2.msra.mxu0 0.0
    %3931 = vmatprep.subr.mxu0 0.0
    %3932 = vmatpush2.msra.mxu0 0.0
    %3933 = vmatprep.subr.mxu0 0.0
    %3934 = vmatpush2.msra.mxu0 0.0
    %3935 = vmatprep.subr.mxu0 0.0
    %3936 = vmatpush2.msra.mxu0 0.0
    %3937 = vmatprep.subr.mxu0 0.0
    %3938 = vmatpush2.msra.mxu0 0.0
    %3939 = vmatprep.subr.mxu0 0.0
    %3940 = vmatpush2.msra.mxu0 0.0
    %3941 = vmatprep.subr.mxu0 0.0
    %3942 = vmatpush2.msra.mxu0 0.0
    %3943 = vmatprep.subr.mxu0 0.0
    %3944 = vmatpush2.msra.mxu0 0.0
    %3945 = vmatprep.subr.mxu0 0.0
    %3946 = vmatpush2.msra.mxu0 0.0
    %3947 = vmatprep.subr.mxu0 0.0
    %3948 = vmatpush2.msra.mxu0 0.0
    %3949 = vmatprep.subr.mxu0 0.0
    %3950 = vmatpush2.msra.mxu0 0.0
    %3951 = vmatprep.subr.mxu0 0.0
    %3952 = vmatpush2.msra.mxu0 0.0
    %3953 = vmatprep.mubr.f32.mxu0 0.0
    %3954 = vmatmul.mubr.f32.gmra.mxu0 %v3817
    %v3955 = vpop.f32.mrf.mxu0
    %v3956 = vadd.f32 0.0, %v3955
    %v3957 = vpop.f32.mrf.mxu0
    %3958 = vdwg.mxu0
    %3959 = vmatprep.subr.mxu0 0.0
    %3960 = vmatpush1.msra.mxu0 0.0
    %3961 = vmatprep.subr.mxu0 0.0
    %3962 = vmatpush1.msra.mxu0 0.0
    %3963 = vmatprep.subr.mxu0 0.0
    %3964 = vmatpush1.msra.mxu0 0.0
    %3965 = vmatprep.subr.mxu0 0.0
    %3966 = vmatpush1.msra.mxu0 0.0
    %3967 = vmatprep.subr.mxu0 0.0
    %3968 = vmatpush1.msra.mxu0 0.0
    %3969 = vmatprep.subr.mxu0 0.0
    %3970 = vmatpush1.msra.mxu0 0.0
    %3971 = vmatprep.subr.mxu0 0.0
    %3972 = vmatpush1.msra.mxu0 0.0
    %3973 = vmatprep.subr.mxu0 0.0
    %3974 = vmatpush1.msra.mxu0 0.0
    %3975 = vmatprep.subr.mxu0 0.0
    %3976 = vmatpush1.msra.mxu0 0.0
    %3977 = vmatprep.subr.mxu0 0.0
    %3978 = vmatpush1.msra.mxu0 0.0
    %3979 = vmatprep.subr.mxu0 0.0
    %3980 = vmatpush1.msra.mxu0 0.0
    %3981 = vmatprep.subr.mxu0 0.0
    %3982 = vmatpush1.msra.mxu0 0.0
    %3983 = vmatprep.subr.mxu0 0.0
    %3984 = vmatpush1.msra.mxu0 %v2845
    %3985 = vmatprep.subr.mxu0 0.0
    %3986 = vmatpush1.msra.mxu0 %v2844
    %3987 = vmatprep.subr.mxu0 0.0
    %3988 = vmatpush1.msra.mxu0 %v2843
    %3989 = vmatprep.subr.mxu0 0.0
    %3990 = vmatpush1.msra.mxu0 %v2842
    %3991 = vmatprep.subr.mxu0 0.0
    %3992 = vmatpush2.msra.mxu0 0.0
    %3993 = vmatprep.subr.mxu0 0.0
    %3994 = vmatpush2.msra.mxu0 0.0
    %3995 = vmatprep.subr.mxu0 0.0
    %3996 = vmatpush2.msra.mxu0 0.0
    %3997 = vmatprep.subr.mxu0 0.0
    %3998 = vmatpush2.msra.mxu0 0.0
    %3999 = vmatprep.subr.mxu0 0.0
    %4000 = vmatpush2.msra.mxu0 0.0
    %4001 = vmatprep.subr.mxu0 0.0
    %4002 = vmatpush2.msra.mxu0 0.0
    %4003 = vmatprep.subr.mxu0 0.0
    %4004 = vmatpush2.msra.mxu0 0.0
    %4005 = vmatprep.subr.mxu0 0.0
    %4006 = vmatpush2.msra.mxu0 0.0
    %4007 = vmatprep.subr.mxu0 0.0
    %4008 = vmatpush2.msra.mxu0 0.0
    %4009 = vmatprep.subr.mxu0 0.0
    %4010 = vmatpush2.msra.mxu0 0.0
    %4011 = vmatprep.subr.mxu0 0.0
    %4012 = vmatpush2.msra.mxu0 0.0
    %4013 = vmatprep.subr.mxu0 0.0
    %4014 = vmatpush2.msra.mxu0 0.0
    %4015 = vmatprep.subr.mxu0 0.0
    %4016 = vmatpush2.msra.mxu0 0.0
    %4017 = vmatprep.subr.mxu0 0.0
    %4018 = vmatpush2.msra.mxu0 0.0
    %4019 = vmatprep.subr.mxu0 0.0
    %4020 = vmatpush2.msra.mxu0 0.0
    %4021 = vmatprep.subr.mxu0 0.0
    %4022 = vmatpush2.msra.mxu0 0.0
    %4023 = vmatprep.mubr.f32.mxu0 0.0
    %4024 = vmatmul.mubr.f32.gmra.mxu0 %v3817
    %v4025 = vpop.f32.mrf.mxu0
    %v4026 = vadd.f32 %v2996, %v4025
    %v4027 = vpop.f32.mrf.mxu0
    %4028 = vdwg.mxu0
    %v4029 = vadd.f32 %v2634, %v3886
    %v4030 = vxor.u32 %v4029, 2147483648
    %v4031 = vmul.f32 %v4030, 1.442695
    %v4032 = vpow.pop %v4031
    %v4033 = vadd.f32 %v4032, 1.0
    %v4034 = vrcp.pop %v4033
    %v4035 = vmul.f32 1.0, %v4034
    %v4036 = vadd.f32 %v2730, %v3956
    %v4037 = vxor.u32 %v4036, 2147483648
    %v4038 = vmul.f32 %v4037, 1.442695
    %v4039 = vpow.pop %v4038
    %v4040 = vadd.f32 %v4039, 1.0
    %v4041 = vrcp.pop %v4040
    %v4042 = vmul.f32 1.0, %v4041
    %v4043 = vmul.f32 %v4035, %v4026
    %v4044 = vadd.f32 %v2826, %v4043
    %v4045 = vtanh.pop %v4044
    %v4046 = vsub.f32 1.0, %v4042
    %v4047 = vmul.f32 %v4046, %v4045
    %v4049 = vmul.f32 %v4042, %v3816
    %v4050 = vadd.f32 %v4047, %v4049
    %v4052 = vsel %vm599, %v4050, 0
    %4054 = vmatprep.subr.mxu0 0.0
    %4055 = vmatpush1.msra.mxu0 0.0
    %4056 = vmatprep.subr.mxu0 0.0
    %4057 = vmatpush1.msra.mxu0 0.0
    %4058 = vmatprep.subr.mxu0 0.0
    %4059 = vmatpush1.msra.mxu0 0.0
    %4060 = vmatprep.subr.mxu0 0.0
    %4061 = vmatpush1.msra.mxu0 0.0
    %4062 = vmatprep.subr.mxu0 0.0
    %4063 = vmatpush1.msra.mxu0 0.0
    %4064 = vmatprep.subr.mxu0 0.0
    %4065 = vmatpush1.msra.mxu0 0.0
    %4066 = vmatprep.subr.mxu0 0.0
    %4067 = vmatpush1.msra.mxu0 0.0
    %4068 = vmatprep.subr.mxu0 0.0
    %4069 = vmatpush1.msra.mxu0 0.0
    %4070 = vmatprep.subr.mxu0 0.0
    %4071 = vmatpush1.msra.mxu0 0.0
    %4072 = vmatprep.subr.mxu0 0.0
    %4073 = vmatpush1.msra.mxu0 0.0
    %4074 = vmatprep.subr.mxu0 0.0
    %4075 = vmatpush1.msra.mxu0 0.0
    %4076 = vmatprep.subr.mxu0 0.0
    %4077 = vmatpush1.msra.mxu0 0.0
    %4078 = vmatprep.subr.mxu0 0.0
    %4079 = vmatpush1.msra.mxu0 %v2837
    %4080 = vmatprep.subr.mxu0 0.0
    %4081 = vmatpush1.msra.mxu0 %v2836
    %4082 = vmatprep.subr.mxu0 0.0
    %4083 = vmatpush1.msra.mxu0 %v2835
    %4084 = vmatprep.subr.mxu0 0.0
    %4085 = vmatpush1.msra.mxu0 %v2834
    %4086 = vmatprep.subr.mxu0 0.0
    %4087 = vmatpush2.msra.mxu0 0.0
    %4088 = vmatprep.subr.mxu0 0.0
    %4089 = vmatpush2.msra.mxu0 0.0
    %4090 = vmatprep.subr.mxu0 0.0
    %4091 = vmatpush2.msra.mxu0 0.0
    %4092 = vmatprep.subr.mxu0 0.0
    %4093 = vmatpush2.msra.mxu0 0.0
    %4094 = vmatprep.subr.mxu0 0.0
    %4095 = vmatpush2.msra.mxu0 0.0
    %4096 = vmatprep.subr.mxu0 0.0
    %4097 = vmatpush2.msra.mxu0 0.0
    %4098 = vmatprep.subr.mxu0 0.0
    %4099 = vmatpush2.msra.mxu0 0.0
    %4100 = vmatprep.subr.mxu0 0.0
    %4101 = vmatpush2.msra.mxu0 0.0
    %4102 = vmatprep.subr.mxu0 0.0
    %4103 = vmatpush2.msra.mxu0 0.0
    %4104 = vmatprep.subr.mxu0 0.0
    %4105 = vmatpush2.msra.mxu0 0.0
    %4106 = vmatprep.subr.mxu0 0.0
    %4107 = vmatpush2.msra.mxu0 0.0
    %4108 = vmatprep.subr.mxu0 0.0
    %4109 = vmatpush2.msra.mxu0 0.0
    %4110 = vmatprep.subr.mxu0 0.0
    %4111 = vmatpush2.msra.mxu0 0.0
    %4112 = vmatprep.subr.mxu0 0.0
    %4113 = vmatpush2.msra.mxu0 0.0
    %4114 = vmatprep.subr.mxu0 0.0
    %4115 = vmatpush2.msra.mxu0 0.0
    %4116 = vmatprep.subr.mxu0 0.0
    %4117 = vmatpush2.msra.mxu0 0.0
    %4118 = vmatprep.mubr.f32.mxu0 0.0
    %4119 = vmatmul.mubr.f32.gmra.mxu0 %v4052
    %v4120 = vpop.f32.mrf.mxu0
    %v4121 = vadd.f32 0.0, %v4120
    %v4122 = vpop.f32.mrf.mxu0
    %4123 = vdwg.mxu0
    %4124 = vmatprep.subr.mxu0 0.0
    %4125 = vmatpush1.msra.mxu0 0.0
    %4126 = vmatprep.subr.mxu0 0.0
    %4127 = vmatpush1.msra.mxu0 0.0
    %4128 = vmatprep.subr.mxu0 0.0
    %4129 = vmatpush1.msra.mxu0 0.0
    %4130 = vmatprep.subr.mxu0 0.0
    %4131 = vmatpush1.msra.mxu0 0.0
    %4132 = vmatprep.subr.mxu0 0.0
    %4133 = vmatpush1.msra.mxu0 0.0
    %4134 = vmatprep.subr.mxu0 0.0
    %4135 = vmatpush1.msra.mxu0 0.0
    %4136 = vmatprep.subr.mxu0 0.0
    %4137 = vmatpush1.msra.mxu0 0.0
    %4138 = vmatprep.subr.mxu0 0.0
    %4139 = vmatpush1.msra.mxu0 0.0
    %4140 = vmatprep.subr.mxu0 0.0
    %4141 = vmatpush1.msra.mxu0 0.0
    %4142 = vmatprep.subr.mxu0 0.0
    %4143 = vmatpush1.msra.mxu0 0.0
    %4144 = vmatprep.subr.mxu0 0.0
    %4145 = vmatpush1.msra.mxu0 0.0
    %4146 = vmatprep.subr.mxu0 0.0
    %4147 = vmatpush1.msra.mxu0 0.0
    %4148 = vmatprep.subr.mxu0 0.0
    %4149 = vmatpush1.msra.mxu0 %v2841
    %4150 = vmatprep.subr.mxu0 0.0
    %4151 = vmatpush1.msra.mxu0 %v2840
    %4152 = vmatprep.subr.mxu0 0.0
    %4153 = vmatpush1.msra.mxu0 %v2839
    %4154 = vmatprep.subr.mxu0 0.0
    %4155 = vmatpush1.msra.mxu0 %v2838
    %4156 = vmatprep.subr.mxu0 0.0
    %4157 = vmatpush2.msra.mxu0 0.0
    %4158 = vmatprep.subr.mxu0 0.0
    %4159 = vmatpush2.msra.mxu0 0.0
    %4160 = vmatprep.subr.mxu0 0.0
    %4161 = vmatpush2.msra.mxu0 0.0
    %4162 = vmatprep.subr.mxu0 0.0
    %4163 = vmatpush2.msra.mxu0 0.0
    %4164 = vmatprep.subr.mxu0 0.0
    %4165 = vmatpush2.msra.mxu0 0.0
    %4166 = vmatprep.subr.mxu0 0.0
    %4167 = vmatpush2.msra.mxu0 0.0
    %4168 = vmatprep.subr.mxu0 0.0
    %4169 = vmatpush2.msra.mxu0 0.0
    %4170 = vmatprep.subr.mxu0 0.0
    %4171 = vmatpush2.msra.mxu0 0.0
    %4172 = vmatprep.subr.mxu0 0.0
    %4173 = vmatpush2.msra.mxu0 0.0
    %4174 = vmatprep.subr.mxu0 0.0
    %4175 = vmatpush2.msra.mxu0 0.0
    %4176 = vmatprep.subr.mxu0 0.0
    %4177 = vmatpush2.msra.mxu0 0.0
    %4178 = vmatprep.subr.mxu0 0.0
    %4179 = vmatpush2.msra.mxu0 0.0
    %4180 = vmatprep.subr.mxu0 0.0
    %4181 = vmatpush2.msra.mxu0 0.0
    %4182 = vmatprep.subr.mxu0 0.0
    %4183 = vmatpush2.msra.mxu0 0.0
    %4184 = vmatprep.subr.mxu0 0.0
    %4185 = vmatpush2.msra.mxu0 0.0
    %4186 = vmatprep.subr.mxu0 0.0
    %4187 = vmatpush2.msra.mxu0 0.0
    %4188 = vmatprep.mubr.f32.mxu0 0.0
    %4189 = vmatmul.mubr.f32.gmra.mxu0 %v4052
    %v4190 = vpop.f32.mrf.mxu0
    %v4191 = vadd.f32 0.0, %v4190
    %v4192 = vpop.f32.mrf.mxu0
    %4193 = vdwg.mxu0
    %4194 = vmatprep.subr.mxu0 0.0
    %4195 = vmatpush1.msra.mxu0 0.0
    %4196 = vmatprep.subr.mxu0 0.0
    %4197 = vmatpush1.msra.mxu0 0.0
    %4198 = vmatprep.subr.mxu0 0.0
    %4199 = vmatpush1.msra.mxu0 0.0
    %4200 = vmatprep.subr.mxu0 0.0
    %4201 = vmatpush1.msra.mxu0 0.0
    %4202 = vmatprep.subr.mxu0 0.0
    %4203 = vmatpush1.msra.mxu0 0.0
    %4204 = vmatprep.subr.mxu0 0.0
    %4205 = vmatpush1.msra.mxu0 0.0
    %4206 = vmatprep.subr.mxu0 0.0
    %4207 = vmatpush1.msra.mxu0 0.0
    %4208 = vmatprep.subr.mxu0 0.0
    %4209 = vmatpush1.msra.mxu0 0.0
    %4210 = vmatprep.subr.mxu0 0.0
    %4211 = vmatpush1.msra.mxu0 0.0
    %4212 = vmatprep.subr.mxu0 0.0
    %4213 = vmatpush1.msra.mxu0 0.0
    %4214 = vmatprep.subr.mxu0 0.0
    %4215 = vmatpush1.msra.mxu0 0.0
    %4216 = vmatprep.subr.mxu0 0.0
    %4217 = vmatpush1.msra.mxu0 0.0
    %4218 = vmatprep.subr.mxu0 0.0
    %4219 = vmatpush1.msra.mxu0 %v2845
    %4220 = vmatprep.subr.mxu0 0.0
    %4221 = vmatpush1.msra.mxu0 %v2844
    %4222 = vmatprep.subr.mxu0 0.0
    %4223 = vmatpush1.msra.mxu0 %v2843
    %4224 = vmatprep.subr.mxu0 0.0
    %4225 = vmatpush1.msra.mxu0 %v2842
    %4226 = vmatprep.subr.mxu0 0.0
    %4227 = vmatpush2.msra.mxu0 0.0
    %4228 = vmatprep.subr.mxu0 0.0
    %4229 = vmatpush2.msra.mxu0 0.0
    %4230 = vmatprep.subr.mxu0 0.0
    %4231 = vmatpush2.msra.mxu0 0.0
    %4232 = vmatprep.subr.mxu0 0.0
    %4233 = vmatpush2.msra.mxu0 0.0
    %4234 = vmatprep.subr.mxu0 0.0
    %4235 = vmatpush2.msra.mxu0 0.0
    %4236 = vmatprep.subr.mxu0 0.0
    %4237 = vmatpush2.msra.mxu0 0.0
    %4238 = vmatprep.subr.mxu0 0.0
    %4239 = vmatpush2.msra.mxu0 0.0
    %4240 = vmatprep.subr.mxu0 0.0
    %4241 = vmatpush2.msra.mxu0 0.0
    %4242 = vmatprep.subr.mxu0 0.0
    %4243 = vmatpush2.msra.mxu0 0.0
    %4244 = vmatprep.subr.mxu0 0.0
    %4245 = vmatpush2.msra.mxu0 0.0
    %4246 = vmatprep.subr.mxu0 0.0
    %4247 = vmatpush2.msra.mxu0 0.0
    %4248 = vmatprep.subr.mxu0 0.0
    %4249 = vmatpush2.msra.mxu0 0.0
    %4250 = vmatprep.subr.mxu0 0.0
    %4251 = vmatpush2.msra.mxu0 0.0
    %4252 = vmatprep.subr.mxu0 0.0
    %4253 = vmatpush2.msra.mxu0 0.0
    %4254 = vmatprep.subr.mxu0 0.0
    %4255 = vmatpush2.msra.mxu0 0.0
    %4256 = vmatprep.subr.mxu0 0.0
    %4257 = vmatpush2.msra.mxu0 0.0
    %4258 = vmatprep.mubr.f32.mxu0 0.0
    %4259 = vmatmul.mubr.f32.gmra.mxu0 %v4052
    %v4260 = vpop.f32.mrf.mxu0
    %v4261 = vadd.f32 %v2996, %v4260
    %v4262 = vpop.f32.mrf.mxu0
    %4263 = vdwg.mxu0
    %v4265 = vrot.slane %v4121, 4
    %v4267 = vadd.f32 %v2634, %v4265
    %v4268 = vxor.u32 %v4267, 2147483648
    %v4269 = vmul.f32 %v4268, 1.442695
    %v4270 = vpow.pop %v4269
    %v4271 = vadd.f32 %v4270, 1.0
    %v4272 = vrcp.pop %v4271
    %v4273 = vmul.f32 1.0, %v4272
    %v4275 = vrot.slane %v4191, 4
    %v4277 = vadd.f32 %v2730, %v4275
    %v4278 = vxor.u32 %v4277, 2147483648
    %v4279 = vmul.f32 %v4278, 1.442695
    %v4280 = vpow.pop %v4279
    %v4281 = vadd.f32 %v4280, 1.0
    %v4282 = vrcp.pop %v4281
    %v4283 = vmul.f32 1.0, %v4282
    %v4285 = vrot.slane %v4261, 4
    %v4287 = vmul.f32 %v4273, %v4285
    %v4288 = vadd.f32 %v2826, %v4287
    %v4289 = vtanh.pop %v4288
    %v4290 = vsub.f32 1.0, %v4283
    %v4291 = vmul.f32 %v4290, %v4289
    %v4292 = vrot.slane %v4050, 4
    %v4294 = vmul.f32 %v4283, %v4292
    %v4295 = vadd.f32 %v4291, %v4294
    %v4297 = vrot.slane %v4295, 4
    %v4298 = vsel %vm599, %v4297, 0
    %4300 = vmatprep.subr.mxu0 0.0
    %4301 = vmatpush1.msra.mxu0 0.0
    %4302 = vmatprep.subr.mxu0 0.0
    %4303 = vmatpush1.msra.mxu0 0.0
    %4304 = vmatprep.subr.mxu0 0.0
    %4305 = vmatpush1.msra.mxu0 0.0
    %4306 = vmatprep.subr.mxu0 0.0
    %4307 = vmatpush1.msra.mxu0 0.0
    %4308 = vmatprep.subr.mxu0 0.0
    %4309 = vmatpush1.msra.mxu0 0.0
    %4310 = vmatprep.subr.mxu0 0.0
    %4311 = vmatpush1.msra.mxu0 0.0
    %4312 = vmatprep.subr.mxu0 0.0
    %4313 = vmatpush1.msra.mxu0 0.0
    %4314 = vmatprep.subr.mxu0 0.0
    %4315 = vmatpush1.msra.mxu0 0.0
    %4316 = vmatprep.subr.mxu0 0.0
    %4317 = vmatpush1.msra.mxu0 0.0
    %4318 = vmatprep.subr.mxu0 0.0
    %4319 = vmatpush1.msra.mxu0 0.0
    %4320 = vmatprep.subr.mxu0 0.0
    %4321 = vmatpush1.msra.mxu0 0.0
    %4322 = vmatprep.subr.mxu0 0.0
    %4323 = vmatpush1.msra.mxu0 0.0
    %4324 = vmatprep.subr.mxu0 0.0
    %4325 = vmatpush1.msra.mxu0 %v2837
    %4326 = vmatprep.subr.mxu0 0.0
    %4327 = vmatpush1.msra.mxu0 %v2836
    %4328 = vmatprep.subr.mxu0 0.0
    %4329 = vmatpush1.msra.mxu0 %v2835
    %4330 = vmatprep.subr.mxu0 0.0
    %4331 = vmatpush1.msra.mxu0 %v2834
    %4332 = vmatprep.subr.mxu0 0.0
    %4333 = vmatpush2.msra.mxu0 0.0
    %4334 = vmatprep.subr.mxu0 0.0
    %4335 = vmatpush2.msra.mxu0 0.0
    %4336 = vmatprep.subr.mxu0 0.0
    %4337 = vmatpush2.msra.mxu0 0.0
    %4338 = vmatprep.subr.mxu0 0.0
    %4339 = vmatpush2.msra.mxu0 0.0
    %4340 = vmatprep.subr.mxu0 0.0
    %4341 = vmatpush2.msra.mxu0 0.0
    %4342 = vmatprep.subr.mxu0 0.0
    %4343 = vmatpush2.msra.mxu0 0.0
    %4344 = vmatprep.subr.mxu0 0.0
    %4345 = vmatpush2.msra.mxu0 0.0
    %4346 = vmatprep.subr.mxu0 0.0
    %4347 = vmatpush2.msra.mxu0 0.0
    %4348 = vmatprep.subr.mxu0 0.0
    %4349 = vmatpush2.msra.mxu0 0.0
    %4350 = vmatprep.subr.mxu0 0.0
    %4351 = vmatpush2.msra.mxu0 0.0
    %4352 = vmatprep.subr.mxu0 0.0
    %4353 = vmatpush2.msra.mxu0 0.0
    %4354 = vmatprep.subr.mxu0 0.0
    %4355 = vmatpush2.msra.mxu0 0.0
    %4356 = vmatprep.subr.mxu0 0.0
    %4357 = vmatpush2.msra.mxu0 0.0
    %4358 = vmatprep.subr.mxu0 0.0
    %4359 = vmatpush2.msra.mxu0 0.0
    %4360 = vmatprep.subr.mxu0 0.0
    %4361 = vmatpush2.msra.mxu0 0.0
    %4362 = vmatprep.subr.mxu0 0.0
    %4363 = vmatpush2.msra.mxu0 0.0
    %4364 = vmatprep.mubr.f32.mxu0 0.0
    %4365 = vmatmul.mubr.f32.gmra.mxu0 %v4298
    %v4366 = vpop.f32.mrf.mxu0
    %v4367 = vadd.f32 0.0, %v4366
    %v4368 = vpop.f32.mrf.mxu0
    %4369 = vdwg.mxu0
    %4370 = vmatprep.subr.mxu0 0.0
    %4371 = vmatpush1.msra.mxu0 0.0
    %4372 = vmatprep.subr.mxu0 0.0
    %4373 = vmatpush1.msra.mxu0 0.0
    %4374 = vmatprep.subr.mxu0 0.0
    %4375 = vmatpush1.msra.mxu0 0.0
    %4376 = vmatprep.subr.mxu0 0.0
    %4377 = vmatpush1.msra.mxu0 0.0
    %4378 = vmatprep.subr.mxu0 0.0
    %4379 = vmatpush1.msra.mxu0 0.0
    %4380 = vmatprep.subr.mxu0 0.0
    %4381 = vmatpush1.msra.mxu0 0.0
    %4382 = vmatprep.subr.mxu0 0.0
    %4383 = vmatpush1.msra.mxu0 0.0
    %4384 = vmatprep.subr.mxu0 0.0
    %4385 = vmatpush1.msra.mxu0 0.0
    %4386 = vmatprep.subr.mxu0 0.0
    %4387 = vmatpush1.msra.mxu0 0.0
    %4388 = vmatprep.subr.mxu0 0.0
    %4389 = vmatpush1.msra.mxu0 0.0
    %4390 = vmatprep.subr.mxu0 0.0
    %4391 = vmatpush1.msra.mxu0 0.0
    %4392 = vmatprep.subr.mxu0 0.0
    %4393 = vmatpush1.msra.mxu0 0.0
    %4394 = vmatprep.subr.mxu0 0.0
    %4395 = vmatpush1.msra.mxu0 %v2841
    %4396 = vmatprep.subr.mxu0 0.0
    %4397 = vmatpush1.msra.mxu0 %v2840
    %4398 = vmatprep.subr.mxu0 0.0
    %4399 = vmatpush1.msra.mxu0 %v2839
    %4400 = vmatprep.subr.mxu0 0.0
    %4401 = vmatpush1.msra.mxu0 %v2838
    %4402 = vmatprep.subr.mxu0 0.0
    %4403 = vmatpush2.msra.mxu0 0.0
    %4404 = vmatprep.subr.mxu0 0.0
    %4405 = vmatpush2.msra.mxu0 0.0
    %4406 = vmatprep.subr.mxu0 0.0
    %4407 = vmatpush2.msra.mxu0 0.0
    %4408 = vmatprep.subr.mxu0 0.0
    %4409 = vmatpush2.msra.mxu0 0.0
    %4410 = vmatprep.subr.mxu0 0.0
    %4411 = vmatpush2.msra.mxu0 0.0
    %4412 = vmatprep.subr.mxu0 0.0
    %4413 = vmatpush2.msra.mxu0 0.0
    %4414 = vmatprep.subr.mxu0 0.0
    %4415 = vmatpush2.msra.mxu0 0.0
    %4416 = vmatprep.subr.mxu0 0.0
    %4417 = vmatpush2.msra.mxu0 0.0
    %4418 = vmatprep.subr.mxu0 0.0
    %4419 = vmatpush2.msra.mxu0 0.0
    %4420 = vmatprep.subr.mxu0 0.0
    %4421 = vmatpush2.msra.mxu0 0.0
    %4422 = vmatprep.subr.mxu0 0.0
    %4423 = vmatpush2.msra.mxu0 0.0
    %4424 = vmatprep.subr.mxu0 0.0
    %4425 = vmatpush2.msra.mxu0 0.0
    %4426 = vmatprep.subr.mxu0 0.0
    %4427 = vmatpush2.msra.mxu0 0.0
    %4428 = vmatprep.subr.mxu0 0.0
    %4429 = vmatpush2.msra.mxu0 0.0
    %4430 = vmatprep.subr.mxu0 0.0
    %4431 = vmatpush2.msra.mxu0 0.0
    %4432 = vmatprep.subr.mxu0 0.0
    %4433 = vmatpush2.msra.mxu0 0.0
    %4434 = vmatprep.mubr.f32.mxu0 0.0
    %4435 = vmatmul.mubr.f32.gmra.mxu0 %v4298
    %v4436 = vpop.f32.mrf.mxu0
    %v4437 = vadd.f32 0.0, %v4436
    %v4438 = vpop.f32.mrf.mxu0
    %4439 = vdwg.mxu0
    %4440 = vmatprep.subr.mxu0 0.0
    %4441 = vmatpush1.msra.mxu0 0.0
    %4442 = vmatprep.subr.mxu0 0.0
    %4443 = vmatpush1.msra.mxu0 0.0
    %4444 = vmatprep.subr.mxu0 0.0
    %4445 = vmatpush1.msra.mxu0 0.0
    %4446 = vmatprep.subr.mxu0 0.0
    %4447 = vmatpush1.msra.mxu0 0.0
    %4448 = vmatprep.subr.mxu0 0.0
    %4449 = vmatpush1.msra.mxu0 0.0
    %4450 = vmatprep.subr.mxu0 0.0
    %4451 = vmatpush1.msra.mxu0 0.0
    %4452 = vmatprep.subr.mxu0 0.0
    %4453 = vmatpush1.msra.mxu0 0.0
    %4454 = vmatprep.subr.mxu0 0.0
    %4455 = vmatpush1.msra.mxu0 0.0
    %4456 = vmatprep.subr.mxu0 0.0
    %4457 = vmatpush1.msra.mxu0 0.0
    %4458 = vmatprep.subr.mxu0 0.0
    %4459 = vmatpush1.msra.mxu0 0.0
    %4460 = vmatprep.subr.mxu0 0.0
    %4461 = vmatpush1.msra.mxu0 0.0
    %4462 = vmatprep.subr.mxu0 0.0
    %4463 = vmatpush1.msra.mxu0 0.0
    %4464 = vmatprep.subr.mxu0 0.0
    %4465 = vmatpush1.msra.mxu0 %v2845
    %4466 = vmatprep.subr.mxu0 0.0
    %4467 = vmatpush1.msra.mxu0 %v2844
    %4468 = vmatprep.subr.mxu0 0.0
    %4469 = vmatpush1.msra.mxu0 %v2843
    %4470 = vmatprep.subr.mxu0 0.0
    %4471 = vmatpush1.msra.mxu0 %v2842
    %4472 = vmatprep.subr.mxu0 0.0
    %4473 = vmatpush2.msra.mxu0 0.0
    %4474 = vmatprep.subr.mxu0 0.0
    %4475 = vmatpush2.msra.mxu0 0.0
    %4476 = vmatprep.subr.mxu0 0.0
    %4477 = vmatpush2.msra.mxu0 0.0
    %4478 = vmatprep.subr.mxu0 0.0
    %4479 = vmatpush2.msra.mxu0 0.0
    %4480 = vmatprep.subr.mxu0 0.0
    %4481 = vmatpush2.msra.mxu0 0.0
    %4482 = vmatprep.subr.mxu0 0.0
    %4483 = vmatpush2.msra.mxu0 0.0
    %4484 = vmatprep.subr.mxu0 0.0
    %4485 = vmatpush2.msra.mxu0 0.0
    %4486 = vmatprep.subr.mxu0 0.0
    %4487 = vmatpush2.msra.mxu0 0.0
    %4488 = vmatprep.subr.mxu0 0.0
    %4489 = vmatpush2.msra.mxu0 0.0
    %4490 = vmatprep.subr.mxu0 0.0
    %4491 = vmatpush2.msra.mxu0 0.0
    %4492 = vmatprep.subr.mxu0 0.0
    %4493 = vmatpush2.msra.mxu0 0.0
    %4494 = vmatprep.subr.mxu0 0.0
    %4495 = vmatpush2.msra.mxu0 0.0
    %4496 = vmatprep.subr.mxu0 0.0
    %4497 = vmatpush2.msra.mxu0 0.0
    %4498 = vmatprep.subr.mxu0 0.0
    %4499 = vmatpush2.msra.mxu0 0.0
    %4500 = vmatprep.subr.mxu0 0.0
    %4501 = vmatpush2.msra.mxu0 0.0
    %4502 = vmatprep.subr.mxu0 0.0
    %4503 = vmatpush2.msra.mxu0 0.0
    %4504 = vmatprep.mubr.f32.mxu0 0.0
    %4505 = vmatmul.mubr.f32.gmra.mxu0 %v4298
    %v4506 = vpop.f32.mrf.mxu0
    %v4507 = vadd.f32 %v2996, %v4506
    %v4508 = vpop.f32.mrf.mxu0
    %4509 = vdwg.mxu0
    %v4510 = vadd.f32 %v2639, %v4367
    %v4511 = vxor.u32 %v4510, 2147483648
    %v4512 = vmul.f32 %v4511, 1.442695
    %v4513 = vpow.pop %v4512
    %v4514 = vadd.f32 %v4513, 1.0
    %v4515 = vrcp.pop %v4514
    %v4516 = vmul.f32 1.0, %v4515
    %v4517 = vadd.f32 %v2735, %v4437
    %v4518 = vxor.u32 %v4517, 2147483648
    %v4519 = vmul.f32 %v4518, 1.442695
    %v4520 = vpow.pop %v4519
    %v4521 = vadd.f32 %v4520, 1.0
    %v4522 = vrcp.pop %v4521
    %v4523 = vmul.f32 1.0, %v4522
    %v4524 = vmul.f32 %v4516, %v4507
    %v4525 = vadd.f32 %v2831, %v4524
    %v4526 = vtanh.pop %v4525
    %v4527 = vsub.f32 1.0, %v4523
    %v4528 = vmul.f32 %v4527, %v4526
    %v4530 = vmul.f32 %v4523, %v4297
    %v4531 = vadd.f32 %v4528, %v4530
    %v4533 = vsel %vm599, %v4531, 0
    %4535 = vmatprep.subr.mxu0 0.0
    %4536 = vmatpush1.msra.mxu0 0.0
    %4537 = vmatprep.subr.mxu0 0.0
    %4538 = vmatpush1.msra.mxu0 0.0
    %4539 = vmatprep.subr.mxu0 0.0
    %4540 = vmatpush1.msra.mxu0 0.0
    %4541 = vmatprep.subr.mxu0 0.0
    %4542 = vmatpush1.msra.mxu0 0.0
    %4543 = vmatprep.subr.mxu0 0.0
    %4544 = vmatpush1.msra.mxu0 0.0
    %4545 = vmatprep.subr.mxu0 0.0
    %4546 = vmatpush1.msra.mxu0 0.0
    %4547 = vmatprep.subr.mxu0 0.0
    %4548 = vmatpush1.msra.mxu0 0.0
    %4549 = vmatprep.subr.mxu0 0.0
    %4550 = vmatpush1.msra.mxu0 0.0
    %4551 = vmatprep.subr.mxu0 0.0
    %4552 = vmatpush1.msra.mxu0 0.0
    %4553 = vmatprep.subr.mxu0 0.0
    %4554 = vmatpush1.msra.mxu0 0.0
    %4555 = vmatprep.subr.mxu0 0.0
    %4556 = vmatpush1.msra.mxu0 0.0
    %4557 = vmatprep.subr.mxu0 0.0
    %4558 = vmatpush1.msra.mxu0 0.0
    %4559 = vmatprep.subr.mxu0 0.0
    %4560 = vmatpush1.msra.mxu0 %v2837
    %4561 = vmatprep.subr.mxu0 0.0
    %4562 = vmatpush1.msra.mxu0 %v2836
    %4563 = vmatprep.subr.mxu0 0.0
    %4564 = vmatpush1.msra.mxu0 %v2835
    %4565 = vmatprep.subr.mxu0 0.0
    %4566 = vmatpush1.msra.mxu0 %v2834
    %4567 = vmatprep.subr.mxu0 0.0
    %4568 = vmatpush2.msra.mxu0 0.0
    %4569 = vmatprep.subr.mxu0 0.0
    %4570 = vmatpush2.msra.mxu0 0.0
    %4571 = vmatprep.subr.mxu0 0.0
    %4572 = vmatpush2.msra.mxu0 0.0
    %4573 = vmatprep.subr.mxu0 0.0
    %4574 = vmatpush2.msra.mxu0 0.0
    %4575 = vmatprep.subr.mxu0 0.0
    %4576 = vmatpush2.msra.mxu0 0.0
    %4577 = vmatprep.subr.mxu0 0.0
    %4578 = vmatpush2.msra.mxu0 0.0
    %4579 = vmatprep.subr.mxu0 0.0
    %4580 = vmatpush2.msra.mxu0 0.0
    %4581 = vmatprep.subr.mxu0 0.0
    %4582 = vmatpush2.msra.mxu0 0.0
    %4583 = vmatprep.subr.mxu0 0.0
    %4584 = vmatpush2.msra.mxu0 0.0
    %4585 = vmatprep.subr.mxu0 0.0
    %4586 = vmatpush2.msra.mxu0 0.0
    %4587 = vmatprep.subr.mxu0 0.0
    %4588 = vmatpush2.msra.mxu0 0.0
    %4589 = vmatprep.subr.mxu0 0.0
    %4590 = vmatpush2.msra.mxu0 0.0
    %4591 = vmatprep.subr.mxu0 0.0
    %4592 = vmatpush2.msra.mxu0 0.0
    %4593 = vmatprep.subr.mxu0 0.0
    %4594 = vmatpush2.msra.mxu0 0.0
    %4595 = vmatprep.subr.mxu0 0.0
    %4596 = vmatpush2.msra.mxu0 0.0
    %4597 = vmatprep.subr.mxu0 0.0
    %4598 = vmatpush2.msra.mxu0 0.0
    %4599 = vmatprep.mubr.f32.mxu0 0.0
    %4600 = vmatmul.mubr.f32.gmra.mxu0 %v4533
    %v4601 = vpop.f32.mrf.mxu0
    %v4602 = vadd.f32 0.0, %v4601
    %v4603 = vpop.f32.mrf.mxu0
    %4604 = vdwg.mxu0
    %4605 = vmatprep.subr.mxu0 0.0
    %4606 = vmatpush1.msra.mxu0 0.0
    %4607 = vmatprep.subr.mxu0 0.0
    %4608 = vmatpush1.msra.mxu0 0.0
    %4609 = vmatprep.subr.mxu0 0.0
    %4610 = vmatpush1.msra.mxu0 0.0
    %4611 = vmatprep.subr.mxu0 0.0
    %4612 = vmatpush1.msra.mxu0 0.0
    %4613 = vmatprep.subr.mxu0 0.0
    %4614 = vmatpush1.msra.mxu0 0.0
    %4615 = vmatprep.subr.mxu0 0.0
    %4616 = vmatpush1.msra.mxu0 0.0
    %4617 = vmatprep.subr.mxu0 0.0
    %4618 = vmatpush1.msra.mxu0 0.0
    %4619 = vmatprep.subr.mxu0 0.0
    %4620 = vmatpush1.msra.mxu0 0.0
    %4621 = vmatprep.subr.mxu0 0.0
    %4622 = vmatpush1.msra.mxu0 0.0
    %4623 = vmatprep.subr.mxu0 0.0
    %4624 = vmatpush1.msra.mxu0 0.0
    %4625 = vmatprep.subr.mxu0 0.0
    %4626 = vmatpush1.msra.mxu0 0.0
    %4627 = vmatprep.subr.mxu0 0.0
    %4628 = vmatpush1.msra.mxu0 0.0
    %4629 = vmatprep.subr.mxu0 0.0
    %4630 = vmatpush1.msra.mxu0 %v2841
    %4631 = vmatprep.subr.mxu0 0.0
    %4632 = vmatpush1.msra.mxu0 %v2840
    %4633 = vmatprep.subr.mxu0 0.0
    %4634 = vmatpush1.msra.mxu0 %v2839
    %4635 = vmatprep.subr.mxu0 0.0
    %4636 = vmatpush1.msra.mxu0 %v2838
    %4637 = vmatprep.subr.mxu0 0.0
    %4638 = vmatpush2.msra.mxu0 0.0
    %4639 = vmatprep.subr.mxu0 0.0
    %4640 = vmatpush2.msra.mxu0 0.0
    %4641 = vmatprep.subr.mxu0 0.0
    %4642 = vmatpush2.msra.mxu0 0.0
    %4643 = vmatprep.subr.mxu0 0.0
    %4644 = vmatpush2.msra.mxu0 0.0
    %4645 = vmatprep.subr.mxu0 0.0
    %4646 = vmatpush2.msra.mxu0 0.0
    %4647 = vmatprep.subr.mxu0 0.0
    %4648 = vmatpush2.msra.mxu0 0.0
    %4649 = vmatprep.subr.mxu0 0.0
    %4650 = vmatpush2.msra.mxu0 0.0
    %4651 = vmatprep.subr.mxu0 0.0
    %4652 = vmatpush2.msra.mxu0 0.0
    %4653 = vmatprep.subr.mxu0 0.0
    %4654 = vmatpush2.msra.mxu0 0.0
    %4655 = vmatprep.subr.mxu0 0.0
    %4656 = vmatpush2.msra.mxu0 0.0
    %4657 = vmatprep.subr.mxu0 0.0
    %4658 = vmatpush2.msra.mxu0 0.0
    %4659 = vmatprep.subr.mxu0 0.0
    %4660 = vmatpush2.msra.mxu0 0.0
    %4661 = vmatprep.subr.mxu0 0.0
    %4662 = vmatpush2.msra.mxu0 0.0
    %4663 = vmatprep.subr.mxu0 0.0
    %4664 = vmatpush2.msra.mxu0 0.0
    %4665 = vmatprep.subr.mxu0 0.0
    %4666 = vmatpush2.msra.mxu0 0.0
    %4667 = vmatprep.subr.mxu0 0.0
    %4668 = vmatpush2.msra.mxu0 0.0
    %4669 = vmatprep.mubr.f32.mxu0 0.0
    %4670 = vmatmul.mubr.f32.gmra.mxu0 %v4533
    %v4671 = vpop.f32.mrf.mxu0
    %v4672 = vadd.f32 0.0, %v4671
    %v4673 = vpop.f32.mrf.mxu0
    %4674 = vdwg.mxu0
    %4675 = vmatprep.subr.mxu0 0.0
    %4676 = vmatpush1.msra.mxu0 0.0
    %4677 = vmatprep.subr.mxu0 0.0
    %4678 = vmatpush1.msra.mxu0 0.0
    %4679 = vmatprep.subr.mxu0 0.0
    %4680 = vmatpush1.msra.mxu0 0.0
    %4681 = vmatprep.subr.mxu0 0.0
    %4682 = vmatpush1.msra.mxu0 0.0
    %4683 = vmatprep.subr.mxu0 0.0
    %4684 = vmatpush1.msra.mxu0 0.0
    %4685 = vmatprep.subr.mxu0 0.0
    %4686 = vmatpush1.msra.mxu0 0.0
    %4687 = vmatprep.subr.mxu0 0.0
    %4688 = vmatpush1.msra.mxu0 0.0
    %4689 = vmatprep.subr.mxu0 0.0
    %4690 = vmatpush1.msra.mxu0 0.0
    %4691 = vmatprep.subr.mxu0 0.0
    %4692 = vmatpush1.msra.mxu0 0.0
    %4693 = vmatprep.subr.mxu0 0.0
    %4694 = vmatpush1.msra.mxu0 0.0
    %4695 = vmatprep.subr.mxu0 0.0
    %4696 = vmatpush1.msra.mxu0 0.0
    %4697 = vmatprep.subr.mxu0 0.0
    %4698 = vmatpush1.msra.mxu0 0.0
    %4699 = vmatprep.subr.mxu0 0.0
    %4700 = vmatpush1.msra.mxu0 %v2845
    %4701 = vmatprep.subr.mxu0 0.0
    %4702 = vmatpush1.msra.mxu0 %v2844
    %4703 = vmatprep.subr.mxu0 0.0
    %4704 = vmatpush1.msra.mxu0 %v2843
    %4705 = vmatprep.subr.mxu0 0.0
    %4706 = vmatpush1.msra.mxu0 %v2842
    %4707 = vmatprep.subr.mxu0 0.0
    %4708 = vmatpush2.msra.mxu0 0.0
    %4709 = vmatprep.subr.mxu0 0.0
    %4710 = vmatpush2.msra.mxu0 0.0
    %4711 = vmatprep.subr.mxu0 0.0
    %4712 = vmatpush2.msra.mxu0 0.0
    %4713 = vmatprep.subr.mxu0 0.0
    %4714 = vmatpush2.msra.mxu0 0.0
    %4715 = vmatprep.subr.mxu0 0.0
    %4716 = vmatpush2.msra.mxu0 0.0
    %4717 = vmatprep.subr.mxu0 0.0
    %4718 = vmatpush2.msra.mxu0 0.0
    %4719 = vmatprep.subr.mxu0 0.0
    %4720 = vmatpush2.msra.mxu0 0.0
    %4721 = vmatprep.subr.mxu0 0.0
    %4722 = vmatpush2.msra.mxu0 0.0
    %4723 = vmatprep.subr.mxu0 0.0
    %4724 = vmatpush2.msra.mxu0 0.0
    %4725 = vmatprep.subr.mxu0 0.0
    %4726 = vmatpush2.msra.mxu0 0.0
    %4727 = vmatprep.subr.mxu0 0.0
    %4728 = vmatpush2.msra.mxu0 0.0
    %4729 = vmatprep.subr.mxu0 0.0
    %4730 = vmatpush2.msra.mxu0 0.0
    %4731 = vmatprep.subr.mxu0 0.0
    %4732 = vmatpush2.msra.mxu0 0.0
    %4733 = vmatprep.subr.mxu0 0.0
    %4734 = vmatpush2.msra.mxu0 0.0
    %4735 = vmatprep.subr.mxu0 0.0
    %4736 = vmatpush2.msra.mxu0 0.0
    %4737 = vmatprep.subr.mxu0 0.0
    %4738 = vmatpush2.msra.mxu0 0.0
    %4739 = vmatprep.mubr.f32.mxu0 0.0
    %4740 = vmatmul.mubr.f32.gmra.mxu0 %v4533
    %v4741 = vpop.f32.mrf.mxu0
    %v4742 = vadd.f32 %v2996, %v4741
    %v4743 = vpop.f32.mrf.mxu0
    %4744 = vdwg.mxu0
    %v4746 = vrot.slane %v4602, 4
    %v4748 = vadd.f32 %v2639, %v4746
    %v4749 = vxor.u32 %v4748, 2147483648
    %v4750 = vmul.f32 %v4749, 1.442695
    %v4751 = vpow.pop %v4750
    %v4752 = vadd.f32 %v4751, 1.0
    %v4753 = vrcp.pop %v4752
    %v4754 = vmul.f32 1.0, %v4753
    %v4756 = vrot.slane %v4672, 4
    %v4758 = vadd.f32 %v2735, %v4756
    %v4759 = vxor.u32 %v4758, 2147483648
    %v4760 = vmul.f32 %v4759, 1.442695
    %v4761 = vpow.pop %v4760
    %v4762 = vadd.f32 %v4761, 1.0
    %v4763 = vrcp.pop %v4762
    %v4764 = vmul.f32 1.0, %v4763
    %v4766 = vrot.slane %v4742, 4
    %v4768 = vmul.f32 %v4754, %v4766
    %v4769 = vadd.f32 %v2831, %v4768
    %v4770 = vtanh.pop %v4769
    %v4771 = vsub.f32 1.0, %v4764
    %v4772 = vmul.f32 %v4771, %v4770
    %v4773 = vrot.slane %v4531, 4
    %v4775 = vmul.f32 %v4764, %v4773
    %v4776 = vadd.f32 %v4772, %v4775
    %s4777 = scalar_lea.vmem [#allocation25], 4
    %4778 = vst.msk [vmem:[%s4777 - $0x4] sm:$0xf0] %vm2528, %v4776
    %v4779 = vsel %vm298, %v3088, %v3333
    %v4780 = vsel %vm298, %v3569, %v3814
    %v4781 = vsel %vm298, %v4050, %v4295
    %v4782 = vsel %vm298, %v4531, %v4776
    %v4783 = vld [vmem:[%s22] sm:$0xff]
    %v4784 = vld [vmem:[%s22 + $0x8] sm:$0xff]
    %v4785 = vld [vmem:[%s22 + $0x10] sm:$0xff]
    %v4786 = vld [vmem:[%s22 + $0x18] sm:$0xff]
    %v4787 = vld [vmem:[%s23] sm:$0x1]
    %v4789 = vlaneseq
    %v4790 = vshrl.u32 %v4789, 7
    %v4791 = vsub.s32 0, %v4790
    %v4792 = vrot.slane %v4787, %v4791
    %v4795 = vsel %vm599, %v4779, 0
    %v4798 = vsel %vm599, %v4780, 0
    %v4801 = vsel %vm599, %v4781, 0
    %v4804 = vsel %vm599, %v4782, 0
    %4806 = vmatprep.subr.mxu0 0.0
    %4807 = vmatpush1.msra.mxu0 0.0
    %4808 = vmatprep.subr.mxu0 0.0
    %4809 = vmatpush1.msra.mxu0 0.0
    %4810 = vmatprep.subr.mxu0 0.0
    %4811 = vmatpush1.msra.mxu0 0.0
    %4812 = vmatprep.subr.mxu0 0.0
    %4813 = vmatpush1.msra.mxu0 0.0
    %4814 = vmatprep.subr.mxu0 0.0
    %4815 = vmatpush1.msra.mxu0 0.0
    %4816 = vmatprep.subr.mxu0 0.0
    %4817 = vmatpush1.msra.mxu0 0.0
    %4818 = vmatprep.subr.mxu0 0.0
    %4819 = vmatpush1.msra.mxu0 0.0
    %4820 = vmatprep.subr.mxu0 0.0
    %4821 = vmatpush1.msra.mxu0 0.0
    %4822 = vmatprep.subr.mxu0 0.0
    %4823 = vmatpush1.msra.mxu0 0.0
    %4824 = vmatprep.subr.mxu0 0.0
    %4825 = vmatpush1.msra.mxu0 0.0
    %4826 = vmatprep.subr.mxu0 0.0
    %4827 = vmatpush1.msra.mxu0 0.0
    %4828 = vmatprep.subr.mxu0 0.0
    %4829 = vmatpush1.msra.mxu0 0.0
    %4830 = vmatprep.subr.mxu0 0.0
    %4831 = vmatpush1.msra.mxu0 %v4786
    %4832 = vmatprep.subr.mxu0 0.0
    %4833 = vmatpush1.msra.mxu0 %v4785
    %4834 = vmatprep.subr.mxu0 0.0
    %4835 = vmatpush1.msra.mxu0 %v4784
    %4836 = vmatprep.subr.mxu0 0.0
    %4837 = vmatpush1.msra.mxu0 %v4783
    %4838 = vmatprep.subr.mxu0 0.0
    %4839 = vmatpush2.msra.mxu0 0.0
    %4840 = vmatprep.subr.mxu0 0.0
    %4841 = vmatpush2.msra.mxu0 0.0
    %4842 = vmatprep.subr.mxu0 0.0
    %4843 = vmatpush2.msra.mxu0 0.0
    %4844 = vmatprep.subr.mxu0 0.0
    %4845 = vmatpush2.msra.mxu0 0.0
    %4846 = vmatprep.subr.mxu0 0.0
    %4847 = vmatpush2.msra.mxu0 0.0
    %4848 = vmatprep.subr.mxu0 0.0
    %4849 = vmatpush2.msra.mxu0 0.0
    %4850 = vmatprep.subr.mxu0 0.0
    %4851 = vmatpush2.msra.mxu0 0.0
    %4852 = vmatprep.subr.mxu0 0.0
    %4853 = vmatpush2.msra.mxu0 0.0
    %4854 = vmatprep.subr.mxu0 0.0
    %4855 = vmatpush2.msra.mxu0 0.0
    %4856 = vmatprep.subr.mxu0 0.0
    %4857 = vmatpush2.msra.mxu0 0.0
    %4858 = vmatprep.subr.mxu0 0.0
    %4859 = vmatpush2.msra.mxu0 0.0
    %4860 = vmatprep.subr.mxu0 0.0
    %4861 = vmatpush2.msra.mxu0 0.0
    %4862 = vmatprep.subr.mxu0 0.0
    %4863 = vmatpush2.msra.mxu0 0.0
    %4864 = vmatprep.subr.mxu0 0.0
    %4865 = vmatpush2.msra.mxu0 0.0
    %4866 = vmatprep.subr.mxu0 0.0
    %4867 = vmatpush2.msra.mxu0 0.0
    %4868 = vmatprep.subr.mxu0 0.0
    %4869 = vmatpush2.msra.mxu0 0.0
    %4870 = vmatprep.mubr.f32.mxu0 0.0
    %4871 = vmatmul.mubr.f32.gmra.mxu0 %v4795
    %v4872 = vpop.f32.mrf.mxu0
    %v4873 = vadd.f32 %v4792, %v4872
    %v4874 = vpop.f32.mrf.mxu0
    %4875 = vmatprep.mubr.f32.mxu0 0.0
    %4876 = vmatmul.mubr.f32.gmra.mxu0 %v4798
    %v4877 = vpop.f32.mrf.mxu0
    %v4878 = vadd.f32 %v4792, %v4877
    %v4879 = vpop.f32.mrf.mxu0
    %4880 = vmatprep.mubr.f32.mxu0 0.0
    %4881 = vmatmul.mubr.f32.gmra.mxu0 %v4801
    %v4882 = vpop.f32.mrf.mxu0
    %v4883 = vadd.f32 %v4792, %v4882
    %v4884 = vpop.f32.mrf.mxu0
    %4885 = vmatprep.mubr.f32.mxu0 0.0
    %4886 = vmatmul.mubr.f32.gmra.mxu0 %v4804
    %v4887 = vpop.f32.mrf.mxu0
    %v4888 = vadd.f32 %v4792, %v4887
    %v4889 = vpop.f32.mrf.mxu0
    %4890 = vdwg.mxu0
    %vm4891 = vcmask 162816
    %4892 = vst.msk [vmem:[%s24] sm:$0xff] %vm4891, %v4873
    %4893 = vst.msk [vmem:[%s24 + $0x8] sm:$0xff] %vm4891, %v4878
    %4894 = vst.msk [vmem:[%s24 + $0x10] sm:$0xff] %vm4891, %v4883
    %4895 = vst.msk [vmem:[%s24 + $0x18] sm:$0xff] %vm4891, %v4888
    // Predicated region
    $region154: #{fwd.1} parent=1 // pred_check
      _
    $region155: #{fwd.1} parent=1 // pred_check_branch
      %4897 = sbr.rel (0) target = $region157
    $region156: #{fwd.1} parent=1 // pred_region
      _
    $region157: #{fwd.1} parent=1 // pred_fallthru
      _
    // Predicated region
    $region158: #{fwd.1} parent=1 // pred_check
      _
    $region159: #{fwd.1} parent=1 // pred_check_branch
      %4899 = sbr.rel (0) target = $region161
    $region160: #{fwd.1} parent=1 // pred_region
      %s4901 = ssub.s32 128, 128
      %4902 = vsyncadd [#allocation4], %s4901
      %s4903 = sshll.u32 [#allocation25], 4
      %s4904 = int_to_ptr.vmem [resolvable:$true] %s4903
      %4909 = dma.vmem_to_hbm [thread:$0]  %s4904, 128, %s25, [#allocation4], 64, 64, 4
    $region161: #{fwd.1} parent=1 // pred_fallthru
      _
    // Predicated region
    $region162: #{fwd.1} parent=1 // pred_check
      _
    $region163: #{fwd.1} parent=1 // pred_check_branch
      %4911 = sbr.rel (0) target = $region165
    $region164: #{fwd.1} parent=1 // pred_region
      _
    $region165: #{fwd.1} parent=1 // pred_fallthru
      _
    // Predicated region
    $region166: #{fwd.1} parent=1 // pred_check
      _
    $region167: #{fwd.1} parent=1 // pred_check_branch
      %4913 = sbr.rel (0) target = $region169
    $region168: #{fwd.1} parent=1 // pred_region
      %4914 = dma.done [#allocation4], 128
    $region169: #{fwd.1} parent=1 // pred_fallthru
      _
    %4915 = vsyncpa [#allocation3], 1
    %4916 = vsyncpa [#allocation6], 1
    %4917 = vsyncpa [#allocation9], 1
    %4918 = vsyncpa [#allocation12], 1
    %4919 = vsyncpa [#allocation15], 1
    %4920 = vsyncpa [#allocation18], 1
    %4921 = vsyncpa [#allocation21], 1
    %4922 = vsyncpa [#allocation24], 1
    %4923 = vsyncpa [#allocation4], 1

</llo_original>
